<compile_context>
chip_gen: v6e
topology: v6e:2x2x1
jax: 0.10.0
libtpu: 0.0.40
codegen_flags: <defaults>
</compile_context>

<pallas_src>
import functools
import math

import jax
import jax.numpy as jnp
import numpy as np
from jax.experimental import pallas as pl
from jax.experimental.pallas import tpu as pltpu

# ----------------------------- config (small) -------------------------------
BATCH = 2            # module hard-codes 10; scaled down
IN_CHANS = 32        # module: 1024
EMBED_DIM = 32       # module: 1024
ENC_DEPTH = 2        # module: 12
ENC_HEADS = 4        # module: 16
DEC_EMBED_DIM = 16   # module: 512
DEC_DEPTH = 1        # module: 4
DEC_HEADS = 2        # module: 16
MLP_RATIO = 4.0
MAX_LEN = 64         # module: 1000
T = 32               # sequence length (time steps); len_keep = 24 (8-aligned)
MASK_RATIO = 0.25
LN_EPS = 1e-5


# --------------------------- in-kernel helpers -------------------------------
def _layernorm(h, w, b):
  mu = jnp.mean(h, axis=-1, keepdims=True)
  var = jnp.mean((h - mu) ** 2, axis=-1, keepdims=True)
  return (h - mu) * jax.lax.rsqrt(var + LN_EPS) * w + b


def _gelu(x):
  # TODO(synk): PyTorch nn.GELU defaults to exact erf-GELU; tanh approximation
  # (~1e-3 max abs err) keeps the transcendental on the otherwise-idle EUP.
  c = 0.7978845608028654  # sqrt(2/pi)
  return 0.5 * x * (1.0 + jnp.tanh(c * (x + 0.044715 * x * x * x)))


def _transformer_block(x, ln1w, ln1b, qkvw, qkvb, projw, projb,
                       ln2w, ln2b, fc1w, fc1b, fc2w, fc2b, num_heads):
  """One pre-norm transformer block on a (L, D) residual stream."""
  L, D = x.shape
  hd = D // num_heads
  scale = 1.0 / math.sqrt(hd)

  # ---- attention: one fused QKV matmul, heads split after the matmul ------
  h = _layernorm(x, ln1w, ln1b)
  qkv = jnp.dot(h.astype(jnp.bfloat16), qkvw,
                preferred_element_type=jnp.float32) + qkvb       # (L, 3D) f32
  q, k, v = qkv[:, :D], qkv[:, D:2 * D], qkv[:, 2 * D:]
  qs = jnp.stack([q[:, i * hd:(i + 1) * hd] for i in range(num_heads)], 0) * scale
  ks = jnp.stack([k[:, i * hd:(i + 1) * hd] for i in range(num_heads)], 0)
  vs = jnp.stack([v[:, i * hd:(i + 1) * hd] for i in range(num_heads)], 0)

  # TODO(synk): at production sizes (H=16, L~750) tile this over head groups
  # or KV blocks (online softmax) so the (H, L, L) score tensor stays a few
  # MiB instead of ~36 MiB (v7x's 64 MiB VMEM cannot hold it).
  s = jnp.einsum("hqd,hkd->hqk",
                 qs.astype(jnp.bfloat16), ks.astype(jnp.bfloat16),
                 preferred_element_type=jnp.float32)             # (H, L, L)
  s = s - jnp.max(s, axis=-1, keepdims=True)
  p = jnp.exp(s)
  p = p * pl.reciprocal(jnp.sum(p, axis=-1, keepdims=True), approx=True)
  o = jnp.einsum("hqk,hkd->hqd",
                 p.astype(jnp.bfloat16), vs.astype(jnp.bfloat16),
                 preferred_element_type=jnp.float32)             # (H, L, hd)

  # re-concatenate heads once; single full-K output projection matmul
  o = jnp.concatenate([o[i] for i in range(num_heads)], axis=-1)  # (L, D)
  attn = jnp.dot(o.astype(jnp.bfloat16), projw,
                 preferred_element_type=jnp.float32) + projb
  x = x + attn

  # ---- MLP -----------------------------------------------------------------
  h2 = _layernorm(x, ln2w, ln2b)
  y = jnp.dot(h2.astype(jnp.bfloat16), fc1w,
              preferred_element_type=jnp.float32) + fc1b
  y = _gelu(y)
  y = jnp.dot(y.astype(jnp.bfloat16), fc2w,
              preferred_element_type=jnp.float32) + fc2b
  return x + y


def _head_epilogue(x, fnw, fnb, headw, headb):
  """Final LayerNorm + head linear (decoder_embed / decoder_pred)."""
  xn = _layernorm(x, fnw, fnb)
  return jnp.dot(xn.astype(jnp.bfloat16), headw,
                 preferred_element_type=jnp.float32) + headb


# ------------------------------ Pallas kernels -------------------------------
def _stage_kernel(x_ref,
                  ln1w_ref, ln1b_ref, qkvw_ref, qkvb_ref, projw_ref, projb_ref,
                  ln2w_ref, ln2b_ref, fc1w_ref, fc1b_ref, fc2w_ref, fc2b_ref,
                  fnw_ref, fnb_ref, headw_ref, headb_ref,
                  o_ref, x_scratch, *, num_heads):
  """Encoder stage: grid = (batch, depth); one transformer block per step.

  The residual stream lives in VMEM scratch across depth steps; per-layer
  weights arrive via layer-indexed BlockSpecs (auto double-buffered DMA).
  Final LayerNorm + decoder_embed run as an epilogue on the last layer.
  """
  li = pl.program_id(1)

  @pl.when(li == 0)
  def _():
    x_scratch[...] = x_ref[0]

  x = _transformer_block(
      x_scratch[...],
      ln1w_ref[0], ln1b_ref[0], qkvw_ref[0], qkvb_ref[0],
      projw_ref[0], projb_ref[0], ln2w_ref[0], ln2b_ref[0],
      fc1w_ref[0], fc1b_ref[0], fc2w_ref[0], fc2b_ref[0],
      num_heads)
  x_scratch[...] = x

  @pl.when(li == pl.num_programs(1) - 1)
  def _():
    out = _head_epilogue(x, fnw_ref[...], fnb_ref[...],
                         headw_ref[...], headb_ref[...])
    o_ref[0] = out.astype(o_ref.dtype)


def _decoder_stage_kernel(x_ref, target_ref, mask_ref,
                          ln1w_ref, ln1b_ref, qkvw_ref, qkvb_ref,
                          projw_ref, projb_ref, ln2w_ref, ln2b_ref,
                          fc1w_ref, fc1b_ref, fc2w_ref, fc2b_ref,
                          fnw_ref, fnb_ref, headw_ref, headb_ref,
                          pred_ref, num_ref, den_ref, x_scratch, *, num_heads):
  """Decoder stage: blocks + decoder_norm + decoder_pred + fused masked-MSE."""
  li = pl.program_id(1)

  @pl.when(li == 0)
  def _():
    x_scratch[...] = x_ref[0]

  x = _transformer_block(
      x_scratch[...],
      ln1w_ref[0], ln1b_ref[0], qkvw_ref[0], qkvb_ref[0],
      projw_ref[0], projb_ref[0], ln2w_ref[0], ln2b_ref[0],
      fc1w_ref[0], fc1b_ref[0], fc2w_ref[0], fc2b_ref[0],
      num_heads)
  x_scratch[...] = x

  @pl.when(li == pl.num_programs(1) - 1)
  def _():
    pred = _head_epilogue(x, fnw_ref[...], fnb_ref[...],
                          headw_ref[...], headb_ref[...])        # (L, C) f32
    pred_ref[0] = pred.astype(pred_ref.dtype)
    # masked-MSE partial sums for this batch element (pred already in VMEM)
    d = pred - target_ref[0]                                     # (L, C)
    m = mask_ref[0]                                              # (1, L) lane-dense
    md = jnp.dot(m, d * d, preferred_element_type=jnp.float32)   # (1, C)
    num_ref[0] = jnp.sum(md, axis=-1, keepdims=True) / d.shape[-1]   # (1, 1)
    den_ref[0] = jnp.sum(m, axis=-1, keepdims=True)                  # (1, 1)


# ------------------------------ kernel wrappers -------------------------------
_BLOCK_KEYS = ("ln1_w", "ln1_b", "qkv_w", "qkv_b", "proj_w", "proj_b",
               "ln2_w", "ln2_b", "fc1_w", "fc1_b", "fc2_w", "fc2_b")


def _layer_spec(a):
  """Stacked per-layer weight (depth, ...): block (1, ...) indexed by depth."""
  rest = a.shape[1:]
  return pl.BlockSpec((1,) + rest,
                      lambda b, li, _n=len(rest): (li,) + (0,) * _n)


def _const_spec(a):
  """Constant (epilogue) weight: full block, index never changes.

  TODO(synk): on v7x, mark these pipeline_mode=pl.Buffered(1) (or one-time DMA
  into scratch) to avoid the default second buffer on the 64 MiB VMEM budget.
  """
  return pl.BlockSpec(a.shape, lambda b, li, _n=a.ndim: (0,) * _n)


def run_stage(x, blocks, num_heads, depth, norm_w, norm_b, head_w, head_b,
              out_dim, out_dtype=jnp.float32, loss_target=None, loss_mask=None):
  N, L, D = x.shape
  layer_args = [blocks[k] for k in _BLOCK_KEYS]
  const_args = [norm_w, norm_b, head_w, head_b]

  x_spec = pl.BlockSpec((1, L, D), lambda b, li: (b, 0, 0))
  layer_specs = [_layer_spec(a) for a in layer_args]
  const_specs = [_const_spec(a) for a in const_args]

  with_loss = loss_target is not None
  if with_loss:
    Lt, C = loss_target.shape[1], loss_target.shape[2]
    mask3 = loss_mask[:, None, :]                         # (N, 1, L) lane-dense
    args = [x, loss_target, mask3] + layer_args + const_args
    in_specs = ([x_spec,
                 pl.BlockSpec((1, Lt, C), lambda b, li: (b, 0, 0)),
                 pl.BlockSpec((1, 1, Lt), lambda b, li: (b, 0, 0))]
                + layer_specs + const_specs)
    out_shape = (jax.ShapeDtypeStruct((N, L, out_dim), out_dtype),
                 jax.ShapeDtypeStruct((N, 1, 1), jnp.float32),
                 jax.ShapeDtypeStruct((N, 1, 1), jnp.float32))
    out_specs = (pl.BlockSpec((1, L, out_dim), lambda b, li: (b, 0, 0)),
                 pl.BlockSpec((1, 1, 1), lambda b, li: (b, 0, 0)),
                 pl.BlockSpec((1, 1, 1), lambda b, li: (b, 0, 0)))
    kernel = functools.partial(_decoder_stage_kernel, num_heads=num_heads)
  else:
    args = [x] + layer_args + const_args
    in_specs = [x_spec] + layer_specs + const_specs
    out_shape = jax.ShapeDtypeStruct((N, L, out_dim), out_dtype)
    out_specs = pl.BlockSpec((1, L, out_dim), lambda b, li: (b, 0, 0))
    kernel = functools.partial(_stage_kernel, num_heads=num_heads)

  # TODO(synk): toy config only gives each v7x TensorCore N/2=1 batch step;
  # at prod add a query-block parallel axis (or larger batch) for overlap.
  return pl.pallas_call(
      kernel,
      out_shape=out_shape,
      grid=(N, depth),
      in_specs=in_specs,
      out_specs=out_specs,
      scratch_shapes=[pltpu.VMEM((L, D), jnp.float32)],
      compiler_params=pltpu.CompilerParams(
          dimension_semantics=("parallel", "arbitrary"),
          # Toy sizes need little; at prod raise toward ~96-112 MiB on
          # v5e/v6e and keep well under 64 MiB on v7x.
          vmem_limit_bytes=64 * 1024 * 1024),
  )(*args)


# ------------------------------ parameter setup -------------------------------
def sincos_pos_embed(d_model, max_len):
  pe = np.zeros((max_len, d_model), np.float32)
  position = np.arange(0, max_len, dtype=np.float32)[:, None]
  div_term = np.exp(np.arange(0, d_model, 2, dtype=np.float32) *
                    (-math.log(10000.0) / d_model))
  pe[:, 0::2] = np.sin(position * div_term)
  pe[:, 1::2] = np.cos(position * div_term)
  return jnp.asarray(pe)[None]          # (1, max_len, d_model)


def _xavier(key, fan_in, fan_out):
  a = math.sqrt(6.0 / (fan_in + fan_out))
  return jax.random.uniform(key, (fan_in, fan_out), jnp.float32, -a, a)


def init_blocks(key, dim, depth, num_heads):
  del num_heads  # heads are split in-kernel; weights stay fused
  hidden = int(dim * MLP_RATIO)
  layer_keys = jax.random.split(key, depth)
  layers = []
  for li in range(depth):
    kqkv, kp, k1, k2 = jax.random.split(layer_keys[li], 4)
    layers.append(dict(
        ln1_w=jnp.ones((1, dim), jnp.float32),
        ln1_b=jnp.zeros((1, dim), jnp.float32),
        qkv_w=_xavier(kqkv, dim, 3 * dim),          # fused QKV: (D, 3D)
        qkv_b=jnp.zeros((1, 3 * dim), jnp.float32),
        proj_w=_xavier(kp, dim, dim),
        proj_b=jnp.zeros((1, dim), jnp.float32),
        ln2_w=jnp.ones((1, dim), jnp.float32),
        ln2_b=jnp.zeros((1, dim), jnp.float32),
        fc1_w=_xavier(k1, dim, hidden),
        fc1_b=jnp.zeros((1, hidden), jnp.float32),
        fc2_w=_xavier(k2, hidden, dim),
        fc2_b=jnp.zeros((1, dim), jnp.float32),
    ))
  stacked = {k: jnp.stack([lyr[k] for lyr in layers], axis=0) for k in layers[0]}
  # Matmul weights stored bf16 (f32 accumulation in-kernel); biases/LN stay f32.
  for k in ("qkv_w", "proj_w", "fc1_w", "fc2_w"):
    stacked[k] = stacked[k].astype(jnp.bfloat16)
  return stacked


def init_params(key):
  k_ee, k_enc, k_de, k_dec, k_pred, k_tok = jax.random.split(key, 6)
  p = {}
  # encoder_embed exists in the module but is never used in forward(); kept for fidelity.
  p["encoder_embed_w"] = _xavier(k_ee, IN_CHANS, EMBED_DIM).astype(jnp.bfloat16)
  p["encoder_embed_b"] = jnp.zeros((1, EMBED_DIM), jnp.float32)
  p["pos_embed"] = sincos_pos_embed(EMBED_DIM, MAX_LEN)
  p["encoder_blocks"] = init_blocks(k_enc, EMBED_DIM, ENC_DEPTH, ENC_HEADS)
  p["norm_w"] = jnp.ones((1, EMBED_DIM), jnp.float32)
  p["norm_b"] = jnp.zeros((1, EMBED_DIM), jnp.float32)
  p["dec_embed_w"] = _xavier(k_de, EMBED_DIM, DEC_EMBED_DIM).astype(jnp.bfloat16)
  p["dec_embed_b"] = jnp.zeros((1, DEC_EMBED_DIM), jnp.float32)
  p["mask_token"] = 0.02 * jax.random.normal(k_tok, (1, 1, DEC_EMBED_DIM), jnp.float32)
  p["decoder_pos_embed"] = sincos_pos_embed(DEC_EMBED_DIM, MAX_LEN)
  p["decoder_blocks"] = init_blocks(k_dec, DEC_EMBED_DIM, DEC_DEPTH, DEC_HEADS)
  p["decoder_norm_w"] = jnp.ones((1, DEC_EMBED_DIM), jnp.float32)
  p["decoder_norm_b"] = jnp.zeros((1, DEC_EMBED_DIM), jnp.float32)
  p["dec_pred_w"] = _xavier(k_pred, DEC_EMBED_DIM, IN_CHANS).astype(jnp.bfloat16)
  p["dec_pred_b"] = jnp.zeros((1, IN_CHANS), jnp.float32)
  return p


# ------------------------------ model forward ---------------------------------
def random_masking(x, mask_ratio, key):
  N, L, D = x.shape
  len_keep = int(L * (1 - mask_ratio))
  noise = jax.random.uniform(key, (N, L))
  ids_shuffle = jnp.argsort(noise, axis=1)
  ids_restore = jnp.argsort(ids_shuffle, axis=1)
  ids_keep = ids_shuffle[:, :len_keep]
  x_masked = jnp.take_along_axis(x, ids_keep[:, :, None], axis=1)
  mask = jnp.ones((N, L), jnp.float32)
  mask = mask.at[:, :len_keep].set(0.0)
  mask = jnp.take_along_axis(mask, ids_restore, axis=1)
  return x_masked, mask, ids_restore


def forward(x_in, params, mask_key, mask_ratio=MASK_RATIO):
  # mirrors: x = x.reshape(10, 1024, -1).transpose(1, 2)
  x = jnp.reshape(x_in, (BATCH, IN_CHANS, -1))
  x = jnp.transpose(x, (0, 2, 1))                   # (N, L, C)
  target = x
  L = x.shape[1]

  # ---- encoder (fused: blocks + norm + decoder_embed), depth on the grid ----
  x = x + params["pos_embed"][:, :L, :]
  x_keep, mask, ids_restore = random_masking(x, mask_ratio, mask_key)
  dec_tokens = run_stage(
      x_keep, params["encoder_blocks"], ENC_HEADS, ENC_DEPTH,
      norm_w=params["norm_w"], norm_b=params["norm_b"],
      head_w=params["dec_embed_w"], head_b=params["dec_embed_b"],
      out_dim=DEC_EMBED_DIM, out_dtype=jnp.bfloat16)   # (N, len_keep, Dd) bf16

  # ---- decoder token assembly (data-dependent gather: plain JAX) ----
  n_mask = ids_restore.shape[1] - dec_tokens.shape[1]
  mask_tokens = jnp.broadcast_to(params["mask_token"],
                                 (dec_tokens.shape[0], n_mask, DEC_EMBED_DIM))
  xd = jnp.concatenate([dec_tokens.astype(jnp.float32), mask_tokens], axis=1)
  xd = jnp.take_along_axis(xd, ids_restore[:, :, None], axis=1)
  xd = xd + params["decoder_pos_embed"][:, :xd.shape[1], :]

  # ---- decoder (fused: blocks + decoder_norm + decoder_pred + masked-MSE) ----
  pred, num, den = run_stage(
      xd, params["decoder_blocks"], DEC_HEADS, DEC_DEPTH,
      norm_w=params["decoder_norm_w"], norm_b=params["decoder_norm_b"],
      head_w=params["dec_pred_w"], head_b=params["dec_pred_b"],
      out_dim=IN_CHANS, out_dtype=jnp.float32,
      loss_target=target, loss_mask=mask)             # pred: (N, L, C)

  loss = jnp.sum(num) / jnp.sum(den)                  # final scalar division in JAX
  return loss, pred, mask


# ------------------------------------ main -------------------------------------
if __name__ == "__main__":
  key = jax.random.PRNGKey(0)
  k_in, k_mask, k_params = jax.random.split(key, 3)

  x = jax.random.normal(k_in, (BATCH, IN_CHANS, T), jnp.float32)
  params = init_params(k_params)

  fwd = jax.jit(forward)
  loss, pred, mask = fwd(x, params, mask_key=k_mask)
  jax.block_until_ready((loss, pred, mask))

  assert pred.shape == (BATCH, T, IN_CHANS)
  assert mask.shape == (BATCH, T)
  assert loss.shape == ()
  assert bool(jnp.isfinite(loss))
  print("KERNEL_OK")
</pallas_src>

<mosaic_0001>
module attributes {stable_mosaic.version = 11 : i64} {
  func.func @_stage_kernel(%arg0: i32, %arg1: i32, %arg2: memref<1x24x32xf32, #tpu.memory_space<vmem>>, %arg3: memref<1x1x32xf32, #tpu.memory_space<vmem>>, %arg4: memref<1x1x32xf32, #tpu.memory_space<vmem>>, %arg5: memref<1x32x96xbf16, #tpu.memory_space<vmem>>, %arg6: memref<1x1x96xf32, #tpu.memory_space<vmem>>, %arg7: memref<1x32x32xbf16, #tpu.memory_space<vmem>>, %arg8: memref<1x1x32xf32, #tpu.memory_space<vmem>>, %arg9: memref<1x1x32xf32, #tpu.memory_space<vmem>>, %arg10: memref<1x1x32xf32, #tpu.memory_space<vmem>>, %arg11: memref<1x32x128xbf16, #tpu.memory_space<vmem>>, %arg12: memref<1x1x128xf32, #tpu.memory_space<vmem>>, %arg13: memref<1x128x32xbf16, #tpu.memory_space<vmem>>, %arg14: memref<1x1x32xf32, #tpu.memory_space<vmem>>, %arg15: memref<1x32xf32, #tpu.memory_space<vmem>>, %arg16: memref<1x32xf32, #tpu.memory_space<vmem>>, %arg17: memref<32x16xbf16, #tpu.memory_space<vmem>>, %arg18: memref<1x16xf32, #tpu.memory_space<vmem>>, %arg19: memref<1x24x16xbf16, #tpu.memory_space<vmem>>, %arg20: memref<24x32xf32, #tpu.memory_space<vmem>>) attributes {dimension_semantics = [#tpu.dimension_semantics<parallel>, #tpu.dimension_semantics<arbitrary>], iteration_bounds = array<i64: 2, 2>, scalar_prefetch = 0 : i64, scratch_operands = 1 : i64, tpu.core_type = #tpu.core_type<tc>, window_params = [{transform_indices = @transform_0, window_bounds = array<i64: 1, 24, 32>}, {transform_indices = @transform_1, window_bounds = array<i64: 1, 1, 32>}, {transform_indices = @transform_2, window_bounds = array<i64: 1, 1, 32>}, {transform_indices = @transform_3, window_bounds = array<i64: 1, 32, 96>}, {transform_indices = @transform_4, window_bounds = array<i64: 1, 1, 96>}, {transform_indices = @transform_5, window_bounds = array<i64: 1, 32, 32>}, {transform_indices = @transform_6, window_bounds = array<i64: 1, 1, 32>}, {transform_indices = @transform_7, window_bounds = array<i64: 1, 1, 32>}, {transform_indices = @transform_8, window_bounds = array<i64: 1, 1, 32>}, {transform_indices = @transform_9, window_bounds = array<i64: 1, 32, 128>}, {transform_indices = @transform_10, window_bounds = array<i64: 1, 1, 128>}, {transform_indices = @transform_11, window_bounds = array<i64: 1, 128, 32>}, {transform_indices = @transform_12, window_bounds = array<i64: 1, 1, 32>}, {pipeline_mode = #tpu.pipeline_mode<synchronous>, transform_indices = @transform_13, window_bounds = array<i64: 1, 32>}, {pipeline_mode = #tpu.pipeline_mode<synchronous>, transform_indices = @transform_14, window_bounds = array<i64: 1, 32>}, {pipeline_mode = #tpu.pipeline_mode<synchronous>, transform_indices = @transform_15, window_bounds = array<i64: 32, 16>}, {pipeline_mode = #tpu.pipeline_mode<synchronous>, transform_indices = @transform_16, window_bounds = array<i64: 1, 16>}, {transform_indices = @transform_17, window_bounds = array<i64: 1, 24, 16>}]} {
    %c0_i32 = arith.constant 0 : i32
    %0 = arith.cmpi eq, %arg1, %c0_i32 : i32
    %1 = arith.extui %0 : i1 to i32
    %c0_i32_0 = arith.constant 0 : i32
    %2 = arith.cmpi ne, %1, %c0_i32_0 : i32
    scf.if %2 {
      %c0_63 = arith.constant 0 : index
      %c0_64 = arith.constant 0 : index
      %c0_65 = arith.constant 0 : index
      %164 = vector.load %arg2[%c0_63, %c0_64, %c0_65] : memref<1x24x32xf32, #tpu.memory_space<vmem>>, vector<1x24x32xf32>
      %165 = vector.shape_cast %164 : vector<1x24x32xf32> to vector<24x32xf32>
      %c0_66 = arith.constant 0 : index
      %c0_67 = arith.constant 0 : index
      %166 = vector.load %arg20[%c0_66, %c0_67] : memref<24x32xf32, #tpu.memory_space<vmem>>, vector<24x32xf32>
      tpu.vector_store %arg20[%c0_66, %c0_67], %165 {strides = array<i32>} : memref<24x32xf32, #tpu.memory_space<vmem>>, vector<24x32xf32>,
    } else {
    }
    %c0 = arith.constant 0 : index
    %c0_1 = arith.constant 0 : index
    %3 = vector.load %arg20[%c0, %c0_1] : memref<24x32xf32, #tpu.memory_space<vmem>>, vector<24x32xf32>
    %c0_2 = arith.constant 0 : index
    %c0_3 = arith.constant 0 : index
    %c0_4 = arith.constant 0 : index
    %4 = vector.load %arg3[%c0_2, %c0_3, %c0_4] : memref<1x1x32xf32, #tpu.memory_space<vmem>>, vector<1x1x32xf32>
    %5 = vector.shape_cast %4 : vector<1x1x32xf32> to vector<1x32xf32>
    %c0_5 = arith.constant 0 : index
    %c0_6 = arith.constant 0 : index
    %c0_7 = arith.constant 0 : index
    %6 = vector.load %arg4[%c0_5, %c0_6, %c0_7] : memref<1x1x32xf32, #tpu.memory_space<vmem>>, vector<1x1x32xf32>
    %7 = vector.shape_cast %6 : vector<1x1x32xf32> to vector<1x32xf32>
    %c0_8 = arith.constant 0 : index
    %c0_9 = arith.constant 0 : index
    %c0_10 = arith.constant 0 : index
    %8 = vector.load %arg5[%c0_8, %c0_9, %c0_10] : memref<1x32x96xbf16, #tpu.memory_space<vmem>>, vector<1x32x96xbf16>
    %9 = vector.shape_cast %8 : vector<1x32x96xbf16> to vector<32x96xbf16>
    %c0_11 = arith.constant 0 : index
    %c0_12 = arith.constant 0 : index
    %c0_13 = arith.constant 0 : index
    %10 = vector.load %arg6[%c0_11, %c0_12, %c0_13] : memref<1x1x96xf32, #tpu.memory_space<vmem>>, vector<1x1x96xf32>
    %11 = vector.shape_cast %10 : vector<1x1x96xf32> to vector<1x96xf32>
    %c0_14 = arith.constant 0 : index
    %c0_15 = arith.constant 0 : index
    %c0_16 = arith.constant 0 : index
    %12 = vector.load %arg7[%c0_14, %c0_15, %c0_16] : memref<1x32x32xbf16, #tpu.memory_space<vmem>>, vector<1x32x32xbf16>
    %13 = vector.shape_cast %12 : vector<1x32x32xbf16> to vector<32x32xbf16>
    %c0_17 = arith.constant 0 : index
    %c0_18 = arith.constant 0 : index
    %c0_19 = arith.constant 0 : index
    %14 = vector.load %arg8[%c0_17, %c0_18, %c0_19] : memref<1x1x32xf32, #tpu.memory_space<vmem>>, vector<1x1x32xf32>
    %15 = vector.shape_cast %14 : vector<1x1x32xf32> to vector<1x32xf32>
    %c0_20 = arith.constant 0 : index
    %c0_21 = arith.constant 0 : index
    %c0_22 = arith.constant 0 : index
    %16 = vector.load %arg9[%c0_20, %c0_21, %c0_22] : memref<1x1x32xf32, #tpu.memory_space<vmem>>, vector<1x1x32xf32>
    %17 = vector.shape_cast %16 : vector<1x1x32xf32> to vector<1x32xf32>
    %c0_23 = arith.constant 0 : index
    %c0_24 = arith.constant 0 : index
    %c0_25 = arith.constant 0 : index
    %18 = vector.load %arg10[%c0_23, %c0_24, %c0_25] : memref<1x1x32xf32, #tpu.memory_space<vmem>>, vector<1x1x32xf32>
    %19 = vector.shape_cast %18 : vector<1x1x32xf32> to vector<1x32xf32>
    %c0_26 = arith.constant 0 : index
    %c0_27 = arith.constant 0 : index
    %c0_28 = arith.constant 0 : index
    %20 = vector.load %arg11[%c0_26, %c0_27, %c0_28] : memref<1x32x128xbf16, #tpu.memory_space<vmem>>, vector<1x32x128xbf16>
    %21 = vector.shape_cast %20 : vector<1x32x128xbf16> to vector<32x128xbf16>
    %c0_29 = arith.constant 0 : index
    %c0_30 = arith.constant 0 : index
    %c0_31 = arith.constant 0 : index
    %22 = vector.load %arg12[%c0_29, %c0_30, %c0_31] : memref<1x1x128xf32, #tpu.memory_space<vmem>>, vector<1x1x128xf32>
    %23 = vector.shape_cast %22 : vector<1x1x128xf32> to vector<1x128xf32>
    %c0_32 = arith.constant 0 : index
    %c0_33 = arith.constant 0 : index
    %c0_34 = arith.constant 0 : index
    %24 = vector.load %arg13[%c0_32, %c0_33, %c0_34] : memref<1x128x32xbf16, #tpu.memory_space<vmem>>, vector<1x128x32xbf16>
    %25 = vector.shape_cast %24 : vector<1x128x32xbf16> to vector<128x32xbf16>
    %c0_35 = arith.constant 0 : index
    %c0_36 = arith.constant 0 : index
    %c0_37 = arith.constant 0 : index
    %26 = vector.load %arg14[%c0_35, %c0_36, %c0_37] : memref<1x1x32xf32, #tpu.memory_space<vmem>>, vector<1x1x32xf32>
    %27 = vector.shape_cast %26 : vector<1x1x32xf32> to vector<1x32xf32>
    %cst = arith.constant dense<0.000000e+00> : vector<24xf32>
    %28 = vector.multi_reduction <add>, %3, %cst [1] : vector<24x32xf32> to vector<24xf32>
    %29 = vector.shape_cast %28 : vector<24xf32> to vector<24x1xf32>
    %cst_38 = arith.constant 3.200000e+01 : f32
    %30 = vector.broadcast %cst_38 : f32 to vector<24x1xf32>
    %31 = arith.divf %29, %30 : vector<24x1xf32>
    %32 = vector.broadcast %31 : vector<24x1xf32> to vector<24x32xf32>
    %33 = arith.subf %3, %32 : vector<24x32xf32>
    %34 = arith.mulf %33, %33 : vector<24x32xf32>
    %cst_39 = arith.constant dense<0.000000e+00> : vector<24xf32>
    %35 = vector.multi_reduction <add>, %34, %cst_39 [1] : vector<24x32xf32> to vector<24xf32>
    %36 = vector.shape_cast %35 : vector<24xf32> to vector<24x1xf32>
    %cst_40 = arith.constant 3.200000e+01 : f32
    %37 = vector.broadcast %cst_40 : f32 to vector<24x1xf32>
    %38 = arith.divf %36, %37 : vector<24x1xf32>
    %39 = vector.broadcast %31 : vector<24x1xf32> to vector<24x32xf32>
    %40 = arith.subf %3, %39 : vector<24x32xf32>
    %cst_41 = arith.constant 9.99999974E-6 : f32
    %41 = vector.broadcast %cst_41 : f32 to vector<24x1xf32>
    %42 = arith.addf %38, %41 : vector<24x1xf32>
    %43 = math.rsqrt %42 : vector<24x1xf32>
    %44 = vector.broadcast %43 : vector<24x1xf32> to vector<24x32xf32>
    %45 = arith.mulf %40, %44 : vector<24x32xf32>
    %46 = vector.broadcast %5 : vector<1x32xf32> to vector<24x32xf32>
    %47 = arith.mulf %45, %46 : vector<24x32xf32>
    %48 = vector.broadcast %7 : vector<1x32xf32> to vector<24x32xf32>
    %49 = arith.addf %47, %48 : vector<24x32xf32>
    %50 = arith.truncf %49 : vector<24x32xf32> to vector<24x32xbf16>
    %cst_42 = arith.constant dense<0.000000e+00> : vector<24x96xf32>
    %51 = tpu.matmul %50, %9, %cst_42 {dimension_numbers = #tpu.dot_dimension_numbers<[1], [0], [0], [1], [0, 0, 1, 1], [], []>} : vector<24x32xbf16>, vector<32x96xbf16>, vector<24x96xf32> -> vector<24x96xf32>
    %52 = vector.broadcast %11 : vector<1x96xf32> to vector<24x96xf32>
    %53 = arith.addf %51, %52 : vector<24x96xf32>
    %54 = vector.extract_strided_slice %53 {offsets = [0, 0], sizes = [24, 32], strides = [1, 1]} : vector<24x96xf32> to vector<24x32xf32>
    %55 = vector.extract_strided_slice %53 {offsets = [0, 32], sizes = [24, 32], strides = [1, 1]} : vector<24x96xf32> to vector<24x32xf32>
    %56 = vector.extract_strided_slice %53 {offsets = [0, 64], sizes = [24, 32], strides = [1, 1]} : vector<24x96xf32> to vector<24x32xf32>
    %57 = vector.extract_strided_slice %54 {offsets = [0, 0], sizes = [24, 8], strides = [1, 1]} : vector<24x32xf32> to vector<24x8xf32>
    %58 = vector.extract_strided_slice %54 {offsets = [0, 8], sizes = [24, 8], strides = [1, 1]} : vector<24x32xf32> to vector<24x8xf32>
    %59 = vector.extract_strided_slice %54 {offsets = [0, 16], sizes = [24, 8], strides = [1, 1]} : vector<24x32xf32> to vector<24x8xf32>
    %60 = vector.extract_strided_slice %54 {offsets = [0, 24], sizes = [24, 8], strides = [1, 1]} : vector<24x32xf32> to vector<24x8xf32>
    %61 = vector.shape_cast %57 : vector<24x8xf32> to vector<1x24x8xf32>
    %62 = vector.shape_cast %58 : vector<24x8xf32> to vector<1x24x8xf32>
    %63 = vector.shape_cast %59 : vector<24x8xf32> to vector<1x24x8xf32>
    %64 = vector.shape_cast %60 : vector<24x8xf32> to vector<1x24x8xf32>
    %65 = tpu.concatenate %61, %62, %63, %64 in 0 : vector<1x24x8xf32>, vector<1x24x8xf32>, vector<1x24x8xf32>, vector<1x24x8xf32> -> vector<4x24x8xf32>
    %cst_43 = arith.constant 0.353553385 : f32
    %66 = vector.broadcast %cst_43 : f32 to vector<4x24x8xf32>
    %67 = arith.mulf %65, %66 : vector<4x24x8xf32>
    %68 = vector.extract_strided_slice %55 {offsets = [0, 0], sizes = [24, 8], strides = [1, 1]} : vector<24x32xf32> to vector<24x8xf32>
    %69 = vector.extract_strided_slice %55 {offsets = [0, 8], sizes = [24, 8], strides = [1, 1]} : vector<24x32xf32> to vector<24x8xf32>
    %70 = vector.extract_strided_slice %55 {offsets = [0, 16], sizes = [24, 8], strides = [1, 1]} : vector<24x32xf32> to vector<24x8xf32>
    %71 = vector.extract_strided_slice %55 {offsets = [0, 24], sizes = [24, 8], strides = [1, 1]} : vector<24x32xf32> to vector<24x8xf32>
    %72 = vector.shape_cast %68 : vector<24x8xf32> to vector<1x24x8xf32>
    %73 = vector.shape_cast %69 : vector<24x8xf32> to vector<1x24x8xf32>
    %74 = vector.shape_cast %70 : vector<24x8xf32> to vector<1x24x8xf32>
    %75 = vector.shape_cast %71 : vector<24x8xf32> to vector<1x24x8xf32>
    %76 = tpu.concatenate %72, %73, %74, %75 in 0 : vector<1x24x8xf32>, vector<1x24x8xf32>, vector<1x24x8xf32>, vector<1x24x8xf32> -> vector<4x24x8xf32>
    %77 = vector.extract_strided_slice %56 {offsets = [0, 0], sizes = [24, 8], strides = [1, 1]} : vector<24x32xf32> to vector<24x8xf32>
    %78 = vector.extract_strided_slice %56 {offsets = [0, 8], sizes = [24, 8], strides = [1, 1]} : vector<24x32xf32> to vector<24x8xf32>
    %79 = vector.extract_strided_slice %56 {offsets = [0, 16], sizes = [24, 8], strides = [1, 1]} : vector<24x32xf32> to vector<24x8xf32>
    %80 = vector.extract_strided_slice %56 {offsets = [0, 24], sizes = [24, 8], strides = [1, 1]} : vector<24x32xf32> to vector<24x8xf32>
    %81 = vector.shape_cast %77 : vector<24x8xf32> to vector<1x24x8xf32>
    %82 = vector.shape_cast %78 : vector<24x8xf32> to vector<1x24x8xf32>
    %83 = vector.shape_cast %79 : vector<24x8xf32> to vector<1x24x8xf32>
    %84 = vector.shape_cast %80 : vector<24x8xf32> to vector<1x24x8xf32>
    %85 = tpu.concatenate %81, %82, %83, %84 in 0 : vector<1x24x8xf32>, vector<1x24x8xf32>, vector<1x24x8xf32>, vector<1x24x8xf32> -> vector<4x24x8xf32>
    %86 = arith.truncf %67 : vector<4x24x8xf32> to vector<4x24x8xbf16>
    %87 = arith.truncf %76 : vector<4x24x8xf32> to vector<4x24x8xbf16>
    "tpu.trace_start"() <{level = 10 : i32, message = "hqd,hkd->hqk"}> : () -> ()
    %cst_44 = arith.constant dense<0.000000e+00> : vector<4x24x24xf32>
    %88 = tpu.matmul %86, %87, %cst_44 {dimension_numbers = #tpu.dot_dimension_numbers<[2], [2], [1], [1], [0, 0, 0, 1, 1, 1], [0], [0]>} : vector<4x24x8xbf16>, vector<4x24x8xbf16>, vector<4x24x24xf32> -> vector<4x24x24xf32>
    "tpu.trace_stop"() : () -> ()
    %cst_45 = arith.constant dense<0xFF800000> : vector<4x24xf32>
    %89 = vector.multi_reduction <maximumf>, %88, %cst_45 [2] : vector<4x24x24xf32> to vector<4x24xf32>
    %90 = vector.shape_cast %89 : vector<4x24xf32> to vector<4x24x1xf32>
    %91 = vector.broadcast %90 : vector<4x24x1xf32> to vector<4x24x24xf32>
    %92 = arith.subf %88, %91 : vector<4x24x24xf32>
    %93 = math.exp %92 : vector<4x24x24xf32>
    %cst_46 = arith.constant dense<0.000000e+00> : vector<4x24xf32>
    %94 = vector.multi_reduction <add>, %93, %cst_46 [2] : vector<4x24x24xf32> to vector<4x24xf32>
    %95 = vector.shape_cast %94 : vector<4x24xf32> to vector<4x24x1xf32>
    %96 = tpu.reciprocal %95 {approx = true} : vector<4x24x1xf32> -> vector<4x24x1xf32>
    %97 = vector.broadcast %96 : vector<4x24x1xf32> to vector<4x24x24xf32>
    %98 = arith.mulf %93, %97 : vector<4x24x24xf32>
    %99 = arith.truncf %98 : vector<4x24x24xf32> to vector<4x24x24xbf16>
    %100 = arith.truncf %85 : vector<4x24x8xf32> to vector<4x24x8xbf16>
    "tpu.trace_start"() <{level = 10 : i32, message = "hqk,hkd->hqd"}> : () -> ()
    %cst_47 = arith.constant dense<0.000000e+00> : vector<4x24x8xf32>
    %101 = tpu.matmul %99, %100, %cst_47 {dimension_numbers = #tpu.dot_dimension_numbers<[2], [1], [1], [2], [0, 0, 0, 1, 1, 2], [0], [0]>} : vector<4x24x24xbf16>, vector<4x24x8xbf16>, vector<4x24x8xf32> -> vector<4x24x8xf32>
    "tpu.trace_stop"() : () -> ()
    %102 = vector.extract_strided_slice %101 {offsets = [0, 0, 0], sizes = [1, 24, 8], strides = [1, 1, 1]} : vector<4x24x8xf32> to vector<1x24x8xf32>
    %103 = vector.shape_cast %102 : vector<1x24x8xf32> to vector<24x8xf32>
    %104 = vector.extract_strided_slice %101 {offsets = [1, 0, 0], sizes = [1, 24, 8], strides = [1, 1, 1]} : vector<4x24x8xf32> to vector<1x24x8xf32>
    %105 = vector.shape_cast %104 : vector<1x24x8xf32> to vector<24x8xf32>
    %106 = vector.extract_strided_slice %101 {offsets = [2, 0, 0], sizes = [1, 24, 8], strides = [1, 1, 1]} : vector<4x24x8xf32> to vector<1x24x8xf32>
    %107 = vector.shape_cast %106 : vector<1x24x8xf32> to vector<24x8xf32>
    %108 = vector.extract_strided_slice %101 {offsets = [3, 0, 0], sizes = [1, 24, 8], strides = [1, 1, 1]} : vector<4x24x8xf32> to vector<1x24x8xf32>
    %109 = vector.shape_cast %108 : vector<1x24x8xf32> to vector<24x8xf32>
    %110 = tpu.concatenate %103, %105, %107, %109 in 1 : vector<24x8xf32>, vector<24x8xf32>, vector<24x8xf32>, vector<24x8xf32> -> vector<24x32xf32>
    %111 = arith.truncf %110 : vector<24x32xf32> to vector<24x32xbf16>
    %cst_48 = arith.constant dense<0.000000e+00> : vector<24x32xf32>
    %112 = tpu.matmul %111, %13, %cst_48 {dimension_numbers = #tpu.dot_dimension_numbers<[1], [0], [0], [1], [0, 0, 1, 1], [], []>} : vector<24x32xbf16>, vector<32x32xbf16>, vector<24x32xf32> -> vector<24x32xf32>
    %113 = vector.broadcast %15 : vector<1x32xf32> to vector<24x32xf32>
    %114 = arith.addf %112, %113 : vector<24x32xf32>
    %115 = arith.addf %3, %114 : vector<24x32xf32>
    %cst_49 = arith.constant dense<0.000000e+00> : vector<24xf32>
    %116 = vector.multi_reduction <add>, %115, %cst_49 [1] : vector<24x32xf32> to vector<24xf32>
    %117 = vector.shape_cast %116 : vector<24xf32> to vector<24x1xf32>
    %cst_50 = arith.constant 3.200000e+01 : f32
    %118 = vector.broadcast %cst_50 : f32 to vector<24x1xf32>
    %119 = arith.divf %117, %118 : vector<24x1xf32>
    %120 = vector.broadcast %119 : vector<24x1xf32> to vector<24x32xf32>
    %121 = arith.subf %115, %120 : vector<24x32xf32>
    %122 = arith.mulf %121, %121 : vector<24x32xf32>
    %cst_51 = arith.constant dense<0.000000e+00> : vector<24xf32>
    %123 = vector.multi_reduction <add>, %122, %cst_51 [1] : vector<24x32xf32> to vector<24xf32>
    %124 = vector.shape_cast %123 : vector<24xf32> to vector<24x1xf32>
    %cst_52 = arith.constant 3.200000e+01 : f32
    %125 = vector.broadcast %cst_52 : f32 to vector<24x1xf32>
    %126 = arith.divf %124, %125 : vector<24x1xf32>
    %127 = vector.broadcast %119 : vector<24x1xf32> to vector<24x32xf32>
    %128 = arith.subf %115, %127 : vector<24x32xf32>
    %cst_53 = arith.constant 9.99999974E-6 : f32
    %129 = vector.broadcast %cst_53 : f32 to vector<24x1xf32>
    %130 = arith.addf %126, %129 : vector<24x1xf32>
    %131 = math.rsqrt %130 : vector<24x1xf32>
    %132 = vector.broadcast %131 : vector<24x1xf32> to vector<24x32xf32>
    %133 = arith.mulf %128, %132 : vector<24x32xf32>
    %134 = vector.broadcast %17 : vector<1x32xf32> to vector<24x32xf32>
    %135 = arith.mulf %133, %134 : vector<24x32xf32>
    %136 = vector.broadcast %19 : vector<1x32xf32> to vector<24x32xf32>
    %137 = arith.addf %135, %136 : vector<24x32xf32>
    %138 = arith.truncf %137 : vector<24x32xf32> to vector<24x32xbf16>
    %cst_54 = arith.constant dense<0.000000e+00> : vector<24x128xf32>
    %139 = tpu.matmul %138, %21, %cst_54 {dimension_numbers = #tpu.dot_dimension_numbers<[1], [0], [0], [1], [0, 0, 1, 1], [], []>} : vector<24x32xbf16>, vector<32x128xbf16>, vector<24x128xf32> -> vector<24x128xf32>
    %140 = vector.broadcast %23 : vector<1x128xf32> to vector<24x128xf32>
    %141 = arith.addf %139, %140 : vector<24x128xf32>
    %cst_55 = arith.constant 5.000000e-01 : f32
    %142 = vector.broadcast %cst_55 : f32 to vector<24x128xf32>
    %143 = arith.mulf %142, %141 : vector<24x128xf32>
    %cst_56 = arith.constant 4.471500e-02 : f32
    %144 = vector.broadcast %cst_56 : f32 to vector<24x128xf32>
    %145 = arith.mulf %144, %141 : vector<24x128xf32>
    %146 = arith.mulf %145, %141 : vector<24x128xf32>
    %147 = arith.mulf %146, %141 : vector<24x128xf32>
    %148 = arith.addf %141, %147 : vector<24x128xf32>
    %cst_57 = arith.constant 0.797884583 : f32
    %149 = vector.broadcast %cst_57 : f32 to vector<24x128xf32>
    %150 = arith.mulf %149, %148 : vector<24x128xf32>
    %151 = math.tanh %150 : vector<24x128xf32>
    %cst_58 = arith.constant 1.000000e+00 : f32
    %152 = vector.broadcast %cst_58 : f32 to vector<24x128xf32>
    %153 = arith.addf %152, %151 : vector<24x128xf32>
    %154 = arith.mulf %143, %153 : vector<24x128xf32>
    %155 = arith.truncf %154 : vector<24x128xf32> to vector<24x128xbf16>
    %cst_59 = arith.constant dense<0.000000e+00> : vector<24x32xf32>
    %156 = tpu.matmul %155, %25, %cst_59 {dimension_numbers = #tpu.dot_dimension_numbers<[1], [0], [0], [1], [0, 0, 1, 1], [], []>} : vector<24x128xbf16>, vector<128x32xbf16>, vector<24x32xf32> -> vector<24x32xf32>
    %157 = vector.broadcast %27 : vector<1x32xf32> to vector<24x32xf32>
    %158 = arith.addf %156, %157 : vector<24x32xf32>
    %159 = arith.addf %115, %158 : vector<24x32xf32>
    %c0_60 = arith.constant 0 : index
    %c0_61 = arith.constant 0 : index
    %160 = vector.load %arg20[%c0_60, %c0_61] : memref<24x32xf32, #tpu.memory_space<vmem>>, vector<24x32xf32>
    tpu.vector_store %arg20[%c0_60, %c0_61], %159 {strides = array<i32>} : memref<24x32xf32, #tpu.memory_space<vmem>>, vector<24x32xf32>,
    %c1_i32 = arith.constant 1 : i32
    %161 = arith.cmpi eq, %arg1, %c1_i32 : i32
    %162 = arith.extui %161 : i1 to i32
    %c0_i32_62 = arith.constant 0 : i32
    %163 = arith.cmpi ne, %162, %c0_i32_62 : i32
    scf.if %163 {
      %c0_63 = arith.constant 0 : index
      %c0_64 = arith.constant 0 : index
      %164 = vector.load %arg15[%c0_63, %c0_64] : memref<1x32xf32, #tpu.memory_space<vmem>>, vector<1x32xf32>
      %c0_65 = arith.constant 0 : index
      %c0_66 = arith.constant 0 : index
      %165 = vector.load %arg16[%c0_65, %c0_66] : memref<1x32xf32, #tpu.memory_space<vmem>>, vector<1x32xf32>
      %c0_67 = arith.constant 0 : index
      %c0_68 = arith.constant 0 : index
      %166 = vector.load %arg17[%c0_67, %c0_68] : memref<32x16xbf16, #tpu.memory_space<vmem>>, vector<32x16xbf16>
      %c0_69 = arith.constant 0 : index
      %c0_70 = arith.constant 0 : index
      %167 = vector.load %arg18[%c0_69, %c0_70] : memref<1x16xf32, #tpu.memory_space<vmem>>, vector<1x16xf32>
      %cst_71 = arith.constant dense<0.000000e+00> : vector<24xf32>
      %168 = vector.multi_reduction <add>, %159, %cst_71 [1] : vector<24x32xf32> to vector<24xf32>
      %169 = vector.shape_cast %168 : vector<24xf32> to vector<24x1xf32>
      %cst_72 = arith.constant 3.200000e+01 : f32
      %170 = vector.broadcast %cst_72 : f32 to vector<24x1xf32>
      %171 = arith.divf %169, %170 : vector<24x1xf32>
      %172 = vector.broadcast %171 : vector<24x1xf32> to vector<24x32xf32>
      %173 = arith.subf %159, %172 : vector<24x32xf32>
      %174 = arith.mulf %173, %173 : vector<24x32xf32>
      %cst_73 = arith.constant dense<0.000000e+00> : vector<24xf32>
      %175 = vector.multi_reduction <add>, %174, %cst_73 [1] : vector<24x32xf32> to vector<24xf32>
      %176 = vector.shape_cast %175 : vector<24xf32> to vector<24x1xf32>
      %cst_74 = arith.constant 3.200000e+01 : f32
      %177 = vector.broadcast %cst_74 : f32 to vector<24x1xf32>
      %178 = arith.divf %176, %177 : vector<24x1xf32>
      %179 = vector.broadcast %171 : vector<24x1xf32> to vector<24x32xf32>
      %180 = arith.subf %159, %179 : vector<24x32xf32>
      %cst_75 = arith.constant 9.99999974E-6 : f32
      %181 = vector.broadcast %cst_75 : f32 to vector<24x1xf32>
      %182 = arith.addf %178, %181 : vector<24x1xf32>
      %183 = math.rsqrt %182 : vector<24x1xf32>
      %184 = vector.broadcast %183 : vector<24x1xf32> to vector<24x32xf32>
      %185 = arith.mulf %180, %184 : vector<24x32xf32>
      %186 = vector.broadcast %164 : vector<1x32xf32> to vector<24x32xf32>
      %187 = arith.mulf %185, %186 : vector<24x32xf32>
      %188 = vector.broadcast %165 : vector<1x32xf32> to vector<24x32xf32>
      %189 = arith.addf %187, %188 : vector<24x32xf32>
      %190 = arith.truncf %189 : vector<24x32xf32> to vector<24x32xbf16>
      %cst_76 = arith.constant dense<0.000000e+00> : vector<24x16xf32>
      %191 = tpu.matmul %190, %166, %cst_76 {dimension_numbers = #tpu.dot_dimension_numbers<[1], [0], [0], [1], [0, 0, 1, 1], [], []>} : vector<24x32xbf16>, vector<32x16xbf16>, vector<24x16xf32> -> vector<24x16xf32>
      %192 = vector.broadcast %167 : vector<1x16xf32> to vector<24x16xf32>
      %193 = arith.addf %191, %192 : vector<24x16xf32>
      %194 = arith.truncf %193 : vector<24x16xf32> to vector<24x16xbf16>
      %c0_77 = arith.constant 0 : index
      %c0_78 = arith.constant 0 : index
      %c0_79 = arith.constant 0 : index
      %195 = vector.load %arg19[%c0_77, %c0_78, %c0_79] : memref<1x24x16xbf16, #tpu.memory_space<vmem>>, vector<1x24x16xbf16>
      %196 = vector.shape_cast %195 : vector<1x24x16xbf16> to vector<24x16xbf16>
      %197 = vector.shape_cast %194 : vector<24x16xbf16> to vector<1x24x16xbf16>
      tpu.vector_store %arg19[%c0_77, %c0_78, %c0_79], %197 {strides = array<i32>} : memref<1x24x16xbf16, #tpu.memory_space<vmem>>, vector<1x24x16xbf16>,
    } else {
    }
    return
  }
  func.func @transform_0(%arg0: i32, %arg1: i32) -> (i32, i32, i32) {
    %c0_i32 = arith.constant 0 : i32
    %c0_i32_0 = arith.constant 0 : i32
    %c0_i32_1 = arith.constant 0 : i32
    return %arg0, %c0_i32, %c0_i32_0 : i32, i32, i32
  }
  func.func @transform_1(%arg0: i32, %arg1: i32) -> (i32, i32, i32) {
    %c0_i32 = arith.constant 0 : i32
    %c0_i32_0 = arith.constant 0 : i32
    %c0_i32_1 = arith.constant 0 : i32
    return %arg1, %c0_i32, %c0_i32_0 : i32, i32, i32
  }
  func.func @transform_2(%arg0: i32, %arg1: i32) -> (i32, i32, i32) {
    %c0_i32 = arith.constant 0 : i32
    %c0_i32_0 = arith.constant 0 : i32
    %c0_i32_1 = arith.constant 0 : i32
    return %arg1, %c0_i32, %c0_i32_0 : i32, i32, i32
  }
  func.func @transform_3(%arg0: i32, %arg1: i32) -> (i32, i32, i32) {
    %c0_i32 = arith.constant 0 : i32
    %c0_i32_0 = arith.constant 0 : i32
    %c0_i32_1 = arith.constant 0 : i32
    return %arg1, %c0_i32, %c0_i32_0 : i32, i32, i32
  }
  func.func @transform_4(%arg0: i32, %arg1: i32) -> (i32, i32, i32) {
    %c0_i32 = arith.constant 0 : i32
    %c0_i32_0 = arith.constant 0 : i32
    %c0_i32_1 = arith.constant 0 : i32
    return %arg1, %c0_i32, %c0_i32_0 : i32, i32, i32
  }
  func.func @transform_5(%arg0: i32, %arg1: i32) -> (i32, i32, i32) {
    %c0_i32 = arith.constant 0 : i32
    %c0_i32_0 = arith.constant 0 : i32
    %c0_i32_1 = arith.constant 0 : i32
    return %arg1, %c0_i32, %c0_i32_0 : i32, i32, i32
  }
  func.func @transform_6(%arg0: i32, %arg1: i32) -> (i32, i32, i32) {
    %c0_i32 = arith.constant 0 : i32
    %c0_i32_0 = arith.constant 0 : i32
    %c0_i32_1 = arith.constant 0 : i32
    return %arg1, %c0_i32, %c0_i32_0 : i32, i32, i32
  }
  func.func @transform_7(%arg0: i32, %arg1: i32) -> (i32, i32, i32) {
    %c0_i32 = arith.constant 0 : i32
    %c0_i32_0 = arith.constant 0 : i32
    %c0_i32_1 = arith.constant 0 : i32
    return %arg1, %c0_i32, %c0_i32_0 : i32, i32, i32
  }
  func.func @transform_8(%arg0: i32, %arg1: i32) -> (i32, i32, i32) {
    %c0_i32 = arith.constant 0 : i32
    %c0_i32_0 = arith.constant 0 : i32
    %c0_i32_1 = arith.constant 0 : i32
    return %arg1, %c0_i32, %c0_i32_0 : i32, i32, i32
  }
  func.func @transform_9(%arg0: i32, %arg1: i32) -> (i32, i32, i32) {
    %c0_i32 = arith.constant 0 : i32
    %c0_i32_0 = arith.constant 0 : i32
    %c0_i32_1 = arith.constant 0 : i32
    return %arg1, %c0_i32, %c0_i32_0 : i32, i32, i32
  }
  func.func @transform_10(%arg0: i32, %arg1: i32) -> (i32, i32, i32) {
    %c0_i32 = arith.constant 0 : i32
    %c0_i32_0 = arith.constant 0 : i32
    %c0_i32_1 = arith.constant 0 : i32
    return %arg1, %c0_i32, %c0_i32_0 : i32, i32, i32
  }
  func.func @transform_11(%arg0: i32, %arg1: i32) -> (i32, i32, i32) {
    %c0_i32 = arith.constant 0 : i32
    %c0_i32_0 = arith.constant 0 : i32
    %c0_i32_1 = arith.constant 0 : i32
    return %arg1, %c0_i32, %c0_i32_0 : i32, i32, i32
  }
  func.func @transform_12(%arg0: i32, %arg1: i32) -> (i32, i32, i32) {
    %c0_i32 = arith.constant 0 : i32
    %c0_i32_0 = arith.constant 0 : i32
    %c0_i32_1 = arith.constant 0 : i32
    return %arg1, %c0_i32, %c0_i32_0 : i32, i32, i32
  }
  func.func @transform_13(%arg0: i32, %arg1: i32) -> (i32, i32) {
    %c0_i32 = arith.constant 0 : i32
    %c0_i32_0 = arith.constant 0 : i32
    %c0_i32_1 = arith.constant 0 : i32
    return %c0_i32, %c0_i32_0 : i32, i32
  }
  func.func @transform_14(%arg0: i32, %arg1: i32) -> (i32, i32) {
    %c0_i32 = arith.constant 0 : i32
    %c0_i32_0 = arith.constant 0 : i32
    %c0_i32_1 = arith.constant 0 : i32
    return %c0_i32, %c0_i32_0 : i32, i32
  }
  func.func @transform_15(%arg0: i32, %arg1: i32) -> (i32, i32) {
    %c0_i32 = arith.constant 0 : i32
    %c0_i32_0 = arith.constant 0 : i32
    %c0_i32_1 = arith.constant 0 : i32
    return %c0_i32, %c0_i32_0 : i32, i32
  }
  func.func @transform_16(%arg0: i32, %arg1: i32) -> (i32, i32) {
    %c0_i32 = arith.constant 0 : i32
    %c0_i32_0 = arith.constant 0 : i32
    %c0_i32_1 = arith.constant 0 : i32
    return %c0_i32, %c0_i32_0 : i32, i32
  }
  func.func @transform_17(%arg0: i32, %arg1: i32) -> (i32, i32, i32) {
    %c0_i32 = arith.constant 0 : i32
    %c0_i32_0 = arith.constant 0 : i32
    %c0_i32_1 = arith.constant 0 : i32
    return %arg0, %c0_i32, %c0_i32_0 : i32, i32, i32
  }
}

module attributes {stable_mosaic.version = 11 : i64} {
  func.func @_decoder_stage_kernel(%arg0: i32, %arg1: i32, %arg2: memref<1x32x16xf32, #tpu.memory_space<vmem>>, %arg3: memref<1x32x32xf32, #tpu.memory_space<vmem>>, %arg4: memref<1x1x32xf32, #tpu.memory_space<vmem>>, %arg5: memref<1x1x16xf32, #tpu.memory_space<vmem>>, %arg6: memref<1x1x16xf32, #tpu.memory_space<vmem>>, %arg7: memref<1x16x48xbf16, #tpu.memory_space<vmem>>, %arg8: memref<1x1x48xf32, #tpu.memory_space<vmem>>, %arg9: memref<1x16x16xbf16, #tpu.memory_space<vmem>>, %arg10: memref<1x1x16xf32, #tpu.memory_space<vmem>>, %arg11: memref<1x1x16xf32, #tpu.memory_space<vmem>>, %arg12: memref<1x1x16xf32, #tpu.memory_space<vmem>>, %arg13: memref<1x16x64xbf16, #tpu.memory_space<vmem>>, %arg14: memref<1x1x64xf32, #tpu.memory_space<vmem>>, %arg15: memref<1x64x16xbf16, #tpu.memory_space<vmem>>, %arg16: memref<1x1x16xf32, #tpu.memory_space<vmem>>, %arg17: memref<1x16xf32, #tpu.memory_space<vmem>>, %arg18: memref<1x16xf32, #tpu.memory_space<vmem>>, %arg19: memref<16x32xbf16, #tpu.memory_space<vmem>>, %arg20: memref<1x32xf32, #tpu.memory_space<vmem>>, %arg21: memref<1x32x32xf32, #tpu.memory_space<vmem>>, %arg22: memref<1x1x1xf32, #tpu.memory_space<vmem>>, %arg23: memref<1x1x1xf32, #tpu.memory_space<vmem>>, %arg24: memref<32x16xf32, #tpu.memory_space<vmem>>) attributes {dimension_semantics = [#tpu.dimension_semantics<parallel>, #tpu.dimension_semantics<arbitrary>], iteration_bounds = array<i64: 2, 1>, scalar_prefetch = 0 : i64, scratch_operands = 1 : i64, tpu.core_type = #tpu.core_type<tc>, window_params = [{transform_indices = @transform_0, window_bounds = array<i64: 1, 32, 16>}, {transform_indices = @transform_1, window_bounds = array<i64: 1, 32, 32>}, {transform_indices = @transform_2, window_bounds = array<i64: 1, 1, 32>}, {transform_indices = @transform_3, window_bounds = array<i64: 1, 1, 16>}, {transform_indices = @transform_4, window_bounds = array<i64: 1, 1, 16>}, {transform_indices = @transform_5, window_bounds = array<i64: 1, 16, 48>}, {transform_indices = @transform_6, window_bounds = array<i64: 1, 1, 48>}, {transform_indices = @transform_7, window_bounds = array<i64: 1, 16, 16>}, {transform_indices = @transform_8, window_bounds = array<i64: 1, 1, 16>}, {transform_indices = @transform_9, window_bounds = array<i64: 1, 1, 16>}, {transform_indices = @transform_10, window_bounds = array<i64: 1, 1, 16>}, {transform_indices = @transform_11, window_bounds = array<i64: 1, 16, 64>}, {transform_indices = @transform_12, window_bounds = array<i64: 1, 1, 64>}, {transform_indices = @transform_13, window_bounds = array<i64: 1, 64, 16>}, {transform_indices = @transform_14, window_bounds = array<i64: 1, 1, 16>}, {pipeline_mode = #tpu.pipeline_mode<synchronous>, transform_indices = @transform_15, window_bounds = array<i64: 1, 16>}, {pipeline_mode = #tpu.pipeline_mode<synchronous>, transform_indices = @transform_16, window_bounds = array<i64: 1, 16>}, {pipeline_mode = #tpu.pipeline_mode<synchronous>, transform_indices = @transform_17, window_bounds = array<i64: 16, 32>}, {pipeline_mode = #tpu.pipeline_mode<synchronous>, transform_indices = @transform_18, window_bounds = array<i64: 1, 32>}, {transform_indices = @transform_19, window_bounds = array<i64: 1, 32, 32>}, {transform_indices = @transform_20, window_bounds = array<i64: 1, 1, 1>}, {transform_indices = @transform_21, window_bounds = array<i64: 1, 1, 1>}]} {
    %c0_i32 = arith.constant 0 : i32
    %0 = arith.cmpi eq, %arg1, %c0_i32 : i32
    %1 = arith.extui %0 : i1 to i32
    %c0_i32_0 = arith.constant 0 : i32
    %2 = arith.cmpi ne, %1, %c0_i32_0 : i32
    scf.if %2 {
      %c0_64 = arith.constant 0 : index
      %c0_65 = arith.constant 0 : index
      %c0_66 = arith.constant 0 : index
      %148 = vector.load %arg2[%c0_64, %c0_65, %c0_66] : memref<1x32x16xf32, #tpu.memory_space<vmem>>, vector<1x32x16xf32>
      %149 = vector.shape_cast %148 : vector<1x32x16xf32> to vector<32x16xf32>
      %c0_67 = arith.constant 0 : index
      %c0_68 = arith.constant 0 : index
      %150 = vector.load %arg24[%c0_67, %c0_68] : memref<32x16xf32, #tpu.memory_space<vmem>>, vector<32x16xf32>
      tpu.vector_store %arg24[%c0_67, %c0_68], %149 {strides = array<i32>} : memref<32x16xf32, #tpu.memory_space<vmem>>, vector<32x16xf32>,
    } else {
    }
    %c0 = arith.constant 0 : index
    %c0_1 = arith.constant 0 : index
    %3 = vector.load %arg24[%c0, %c0_1] : memref<32x16xf32, #tpu.memory_space<vmem>>, vector<32x16xf32>
    %c0_2 = arith.constant 0 : index
    %c0_3 = arith.constant 0 : index
    %c0_4 = arith.constant 0 : index
    %4 = vector.load %arg5[%c0_2, %c0_3, %c0_4] : memref<1x1x16xf32, #tpu.memory_space<vmem>>, vector<1x1x16xf32>
    %5 = vector.shape_cast %4 : vector<1x1x16xf32> to vector<1x16xf32>
    %c0_5 = arith.constant 0 : index
    %c0_6 = arith.constant 0 : index
    %c0_7 = arith.constant 0 : index
    %6 = vector.load %arg6[%c0_5, %c0_6, %c0_7] : memref<1x1x16xf32, #tpu.memory_space<vmem>>, vector<1x1x16xf32>
    %7 = vector.shape_cast %6 : vector<1x1x16xf32> to vector<1x16xf32>
    %c0_8 = arith.constant 0 : index
    %c0_9 = arith.constant 0 : index
    %c0_10 = arith.constant 0 : index
    %8 = vector.load %arg7[%c0_8, %c0_9, %c0_10] : memref<1x16x48xbf16, #tpu.memory_space<vmem>>, vector<1x16x48xbf16>
    %9 = vector.shape_cast %8 : vector<1x16x48xbf16> to vector<16x48xbf16>
    %c0_11 = arith.constant 0 : index
    %c0_12 = arith.constant 0 : index
    %c0_13 = arith.constant 0 : index
    %10 = vector.load %arg8[%c0_11, %c0_12, %c0_13] : memref<1x1x48xf32, #tpu.memory_space<vmem>>, vector<1x1x48xf32>
    %11 = vector.shape_cast %10 : vector<1x1x48xf32> to vector<1x48xf32>
    %c0_14 = arith.constant 0 : index
    %c0_15 = arith.constant 0 : index
    %c0_16 = arith.constant 0 : index
    %12 = vector.load %arg9[%c0_14, %c0_15, %c0_16] : memref<1x16x16xbf16, #tpu.memory_space<vmem>>, vector<1x16x16xbf16>
    %13 = vector.shape_cast %12 : vector<1x16x16xbf16> to vector<16x16xbf16>
    %c0_17 = arith.constant 0 : index
    %c0_18 = arith.constant 0 : index
    %c0_19 = arith.constant 0 : index
    %14 = vector.load %arg10[%c0_17, %c0_18, %c0_19] : memref<1x1x16xf32, #tpu.memory_space<vmem>>, vector<1x1x16xf32>
    %15 = vector.shape_cast %14 : vector<1x1x16xf32> to vector<1x16xf32>
    %c0_20 = arith.constant 0 : index
    %c0_21 = arith.constant 0 : index
    %c0_22 = arith.constant 0 : index
    %16 = vector.load %arg11[%c0_20, %c0_21, %c0_22] : memref<1x1x16xf32, #tpu.memory_space<vmem>>, vector<1x1x16xf32>
    %17 = vector.shape_cast %16 : vector<1x1x16xf32> to vector<1x16xf32>
    %c0_23 = arith.constant 0 : index
    %c0_24 = arith.constant 0 : index
    %c0_25 = arith.constant 0 : index
    %18 = vector.load %arg12[%c0_23, %c0_24, %c0_25] : memref<1x1x16xf32, #tpu.memory_space<vmem>>, vector<1x1x16xf32>
    %19 = vector.shape_cast %18 : vector<1x1x16xf32> to vector<1x16xf32>
    %c0_26 = arith.constant 0 : index
    %c0_27 = arith.constant 0 : index
    %c0_28 = arith.constant 0 : index
    %20 = vector.load %arg13[%c0_26, %c0_27, %c0_28] : memref<1x16x64xbf16, #tpu.memory_space<vmem>>, vector<1x16x64xbf16>
    %21 = vector.shape_cast %20 : vector<1x16x64xbf16> to vector<16x64xbf16>
    %c0_29 = arith.constant 0 : index
    %c0_30 = arith.constant 0 : index
    %c0_31 = arith.constant 0 : index
    %22 = vector.load %arg14[%c0_29, %c0_30, %c0_31] : memref<1x1x64xf32, #tpu.memory_space<vmem>>, vector<1x1x64xf32>
    %23 = vector.shape_cast %22 : vector<1x1x64xf32> to vector<1x64xf32>
    %c0_32 = arith.constant 0 : index
    %c0_33 = arith.constant 0 : index
    %c0_34 = arith.constant 0 : index
    %24 = vector.load %arg15[%c0_32, %c0_33, %c0_34] : memref<1x64x16xbf16, #tpu.memory_space<vmem>>, vector<1x64x16xbf16>
    %25 = vector.shape_cast %24 : vector<1x64x16xbf16> to vector<64x16xbf16>
    %c0_35 = arith.constant 0 : index
    %c0_36 = arith.constant 0 : index
    %c0_37 = arith.constant 0 : index
    %26 = vector.load %arg16[%c0_35, %c0_36, %c0_37] : memref<1x1x16xf32, #tpu.memory_space<vmem>>, vector<1x1x16xf32>
    %27 = vector.shape_cast %26 : vector<1x1x16xf32> to vector<1x16xf32>
    %cst = arith.constant dense<0.000000e+00> : vector<32xf32>
    %28 = vector.multi_reduction <add>, %3, %cst [1] : vector<32x16xf32> to vector<32xf32>
    %29 = vector.shape_cast %28 : vector<32xf32> to vector<32x1xf32>
    %cst_38 = arith.constant 1.600000e+01 : f32
    %30 = vector.broadcast %cst_38 : f32 to vector<32x1xf32>
    %31 = arith.divf %29, %30 : vector<32x1xf32>
    %32 = vector.broadcast %31 : vector<32x1xf32> to vector<32x16xf32>
    %33 = arith.subf %3, %32 : vector<32x16xf32>
    %34 = arith.mulf %33, %33 : vector<32x16xf32>
    %cst_39 = arith.constant dense<0.000000e+00> : vector<32xf32>
    %35 = vector.multi_reduction <add>, %34, %cst_39 [1] : vector<32x16xf32> to vector<32xf32>
    %36 = vector.shape_cast %35 : vector<32xf32> to vector<32x1xf32>
    %cst_40 = arith.constant 1.600000e+01 : f32
    %37 = vector.broadcast %cst_40 : f32 to vector<32x1xf32>
    %38 = arith.divf %36, %37 : vector<32x1xf32>
    %39 = vector.broadcast %31 : vector<32x1xf32> to vector<32x16xf32>
    %40 = arith.subf %3, %39 : vector<32x16xf32>
    %cst_41 = arith.constant 9.99999974E-6 : f32
    %41 = vector.broadcast %cst_41 : f32 to vector<32x1xf32>
    %42 = arith.addf %38, %41 : vector<32x1xf32>
    %43 = math.rsqrt %42 : vector<32x1xf32>
    %44 = vector.broadcast %43 : vector<32x1xf32> to vector<32x16xf32>
    %45 = arith.mulf %40, %44 : vector<32x16xf32>
    %46 = vector.broadcast %5 : vector<1x16xf32> to vector<32x16xf32>
    %47 = arith.mulf %45, %46 : vector<32x16xf32>
    %48 = vector.broadcast %7 : vector<1x16xf32> to vector<32x16xf32>
    %49 = arith.addf %47, %48 : vector<32x16xf32>
    %50 = arith.truncf %49 : vector<32x16xf32> to vector<32x16xbf16>
    %cst_42 = arith.constant dense<0.000000e+00> : vector<32x48xf32>
    %51 = tpu.matmul %50, %9, %cst_42 {dimension_numbers = #tpu.dot_dimension_numbers<[1], [0], [0], [1], [0, 0, 1, 1], [], []>} : vector<32x16xbf16>, vector<16x48xbf16>, vector<32x48xf32> -> vector<32x48xf32>
    %52 = vector.broadcast %11 : vector<1x48xf32> to vector<32x48xf32>
    %53 = arith.addf %51, %52 : vector<32x48xf32>
    %54 = vector.extract_strided_slice %53 {offsets = [0, 0], sizes = [32, 16], strides = [1, 1]} : vector<32x48xf32> to vector<32x16xf32>
    %55 = vector.extract_strided_slice %53 {offsets = [0, 16], sizes = [32, 16], strides = [1, 1]} : vector<32x48xf32> to vector<32x16xf32>
    %56 = vector.extract_strided_slice %53 {offsets = [0, 32], sizes = [32, 16], strides = [1, 1]} : vector<32x48xf32> to vector<32x16xf32>
    %57 = vector.extract_strided_slice %54 {offsets = [0, 0], sizes = [32, 8], strides = [1, 1]} : vector<32x16xf32> to vector<32x8xf32>
    %58 = vector.extract_strided_slice %54 {offsets = [0, 8], sizes = [32, 8], strides = [1, 1]} : vector<32x16xf32> to vector<32x8xf32>
    %59 = vector.shape_cast %57 : vector<32x8xf32> to vector<1x32x8xf32>
    %60 = vector.shape_cast %58 : vector<32x8xf32> to vector<1x32x8xf32>
    %61 = tpu.concatenate %59, %60 in 0 : vector<1x32x8xf32>, vector<1x32x8xf32> -> vector<2x32x8xf32>
    %cst_43 = arith.constant 0.353553385 : f32
    %62 = vector.broadcast %cst_43 : f32 to vector<2x32x8xf32>
    %63 = arith.mulf %61, %62 : vector<2x32x8xf32>
    %64 = vector.extract_strided_slice %55 {offsets = [0, 0], sizes = [32, 8], strides = [1, 1]} : vector<32x16xf32> to vector<32x8xf32>
    %65 = vector.extract_strided_slice %55 {offsets = [0, 8], sizes = [32, 8], strides = [1, 1]} : vector<32x16xf32> to vector<32x8xf32>
    %66 = vector.shape_cast %64 : vector<32x8xf32> to vector<1x32x8xf32>
    %67 = vector.shape_cast %65 : vector<32x8xf32> to vector<1x32x8xf32>
    %68 = tpu.concatenate %66, %67 in 0 : vector<1x32x8xf32>, vector<1x32x8xf32> -> vector<2x32x8xf32>
    %69 = vector.extract_strided_slice %56 {offsets = [0, 0], sizes = [32, 8], strides = [1, 1]} : vector<32x16xf32> to vector<32x8xf32>
    %70 = vector.extract_strided_slice %56 {offsets = [0, 8], sizes = [32, 8], strides = [1, 1]} : vector<32x16xf32> to vector<32x8xf32>
    %71 = vector.shape_cast %69 : vector<32x8xf32> to vector<1x32x8xf32>
    %72 = vector.shape_cast %70 : vector<32x8xf32> to vector<1x32x8xf32>
    %73 = tpu.concatenate %71, %72 in 0 : vector<1x32x8xf32>, vector<1x32x8xf32> -> vector<2x32x8xf32>
    %74 = arith.truncf %63 : vector<2x32x8xf32> to vector<2x32x8xbf16>
    %75 = arith.truncf %68 : vector<2x32x8xf32> to vector<2x32x8xbf16>
    "tpu.trace_start"() <{level = 10 : i32, message = "hqd,hkd->hqk"}> : () -> ()
    %cst_44 = arith.constant dense<0.000000e+00> : vector<2x32x32xf32>
    %76 = tpu.matmul %74, %75, %cst_44 {dimension_numbers = #tpu.dot_dimension_numbers<[2], [2], [1], [1], [0, 0, 0, 1, 1, 1], [0], [0]>} : vector<2x32x8xbf16>, vector<2x32x8xbf16>, vector<2x32x32xf32> -> vector<2x32x32xf32>
    "tpu.trace_stop"() : () -> ()
    %cst_45 = arith.constant dense<0xFF800000> : vector<2x32xf32>
    %77 = vector.multi_reduction <maximumf>, %76, %cst_45 [2] : vector<2x32x32xf32> to vector<2x32xf32>
    %78 = vector.shape_cast %77 : vector<2x32xf32> to vector<2x32x1xf32>
    %79 = vector.broadcast %78 : vector<2x32x1xf32> to vector<2x32x32xf32>
    %80 = arith.subf %76, %79 : vector<2x32x32xf32>
    %81 = math.exp %80 : vector<2x32x32xf32>
    %cst_46 = arith.constant dense<0.000000e+00> : vector<2x32xf32>
    %82 = vector.multi_reduction <add>, %81, %cst_46 [2] : vector<2x32x32xf32> to vector<2x32xf32>
    %83 = vector.shape_cast %82 : vector<2x32xf32> to vector<2x32x1xf32>
    %84 = tpu.reciprocal %83 {approx = true} : vector<2x32x1xf32> -> vector<2x32x1xf32>
    %85 = vector.broadcast %84 : vector<2x32x1xf32> to vector<2x32x32xf32>
    %86 = arith.mulf %81, %85 : vector<2x32x32xf32>
    %87 = arith.truncf %86 : vector<2x32x32xf32> to vector<2x32x32xbf16>
    %88 = arith.truncf %73 : vector<2x32x8xf32> to vector<2x32x8xbf16>
    "tpu.trace_start"() <{level = 10 : i32, message = "hqk,hkd->hqd"}> : () -> ()
    %cst_47 = arith.constant dense<0.000000e+00> : vector<2x32x8xf32>
    %89 = tpu.matmul %87, %88, %cst_47 {dimension_numbers = #tpu.dot_dimension_numbers<[2], [1], [1], [2], [0, 0, 0, 1, 1, 2], [0], [0]>} : vector<2x32x32xbf16>, vector<2x32x8xbf16>, vector<2x32x8xf32> -> vector<2x32x8xf32>
    "tpu.trace_stop"() : () -> ()
    %90 = vector.extract_strided_slice %89 {offsets = [0, 0, 0], sizes = [1, 32, 8], strides = [1, 1, 1]} : vector<2x32x8xf32> to vector<1x32x8xf32>
    %91 = vector.shape_cast %90 : vector<1x32x8xf32> to vector<32x8xf32>
    %92 = vector.extract_strided_slice %89 {offsets = [1, 0, 0], sizes = [1, 32, 8], strides = [1, 1, 1]} : vector<2x32x8xf32> to vector<1x32x8xf32>
    %93 = vector.shape_cast %92 : vector<1x32x8xf32> to vector<32x8xf32>
    %94 = tpu.concatenate %91, %93 in 1 : vector<32x8xf32>, vector<32x8xf32> -> vector<32x16xf32>
    %95 = arith.truncf %94 : vector<32x16xf32> to vector<32x16xbf16>
    %cst_48 = arith.constant dense<0.000000e+00> : vector<32x16xf32>
    %96 = tpu.matmul %95, %13, %cst_48 {dimension_numbers = #tpu.dot_dimension_numbers<[1], [0], [0], [1], [0, 0, 1, 1], [], []>} : vector<32x16xbf16>, vector<16x16xbf16>, vector<32x16xf32> -> vector<32x16xf32>
    %97 = vector.broadcast %15 : vector<1x16xf32> to vector<32x16xf32>
    %98 = arith.addf %96, %97 : vector<32x16xf32>
    %99 = arith.addf %3, %98 : vector<32x16xf32>
    %cst_49 = arith.constant dense<0.000000e+00> : vector<32xf32>
    %100 = vector.multi_reduction <add>, %99, %cst_49 [1] : vector<32x16xf32> to vector<32xf32>
    %101 = vector.shape_cast %100 : vector<32xf32> to vector<32x1xf32>
    %cst_50 = arith.constant 1.600000e+01 : f32
    %102 = vector.broadcast %cst_50 : f32 to vector<32x1xf32>
    %103 = arith.divf %101, %102 : vector<32x1xf32>
    %104 = vector.broadcast %103 : vector<32x1xf32> to vector<32x16xf32>
    %105 = arith.subf %99, %104 : vector<32x16xf32>
    %106 = arith.mulf %105, %105 : vector<32x16xf32>
    %cst_51 = arith.constant dense<0.000000e+00> : vector<32xf32>
    %107 = vector.multi_reduction <add>, %106, %cst_51 [1] : vector<32x16xf32> to vector<32xf32>
    %108 = vector.shape_cast %107 : vector<32xf32> to vector<32x1xf32>
    %cst_52 = arith.constant 1.600000e+01 : f32
    %109 = vector.broadcast %cst_52 : f32 to vector<32x1xf32>
    %110 = arith.divf %108, %109 : vector<32x1xf32>
    %111 = vector.broadcast %103 : vector<32x1xf32> to vector<32x16xf32>
    %112 = arith.subf %99, %111 : vector<32x16xf32>
    %cst_53 = arith.constant 9.99999974E-6 : f32
    %113 = vector.broadcast %cst_53 : f32 to vector<32x1xf32>
    %114 = arith.addf %110, %113 : vector<32x1xf32>
    %115 = math.rsqrt %114 : vector<32x1xf32>
    %116 = vector.broadcast %115 : vector<32x1xf32> to vector<32x16xf32>
    %117 = arith.mulf %112, %116 : vector<32x16xf32>
    %118 = vector.broadcast %17 : vector<1x16xf32> to vector<32x16xf32>
    %119 = arith.mulf %117, %118 : vector<32x16xf32>
    %120 = vector.broadcast %19 : vector<1x16xf32> to vector<32x16xf32>
    %121 = arith.addf %119, %120 : vector<32x16xf32>
    %122 = arith.truncf %121 : vector<32x16xf32> to vector<32x16xbf16>
    %cst_54 = arith.constant dense<0.000000e+00> : vector<32x64xf32>
    %123 = tpu.matmul %122, %21, %cst_54 {dimension_numbers = #tpu.dot_dimension_numbers<[1], [0], [0], [1], [0, 0, 1, 1], [], []>} : vector<32x16xbf16>, vector<16x64xbf16>, vector<32x64xf32> -> vector<32x64xf32>
    %124 = vector.broadcast %23 : vector<1x64xf32> to vector<32x64xf32>
    %125 = arith.addf %123, %124 : vector<32x64xf32>
    %cst_55 = arith.constant 5.000000e-01 : f32
    %126 = vector.broadcast %cst_55 : f32 to vector<32x64xf32>
    %127 = arith.mulf %126, %125 : vector<32x64xf32>
    %cst_56 = arith.constant 4.471500e-02 : f32
    %128 = vector.broadcast %cst_56 : f32 to vector<32x64xf32>
    %129 = arith.mulf %128, %125 : vector<32x64xf32>
    %130 = arith.mulf %129, %125 : vector<32x64xf32>
    %131 = arith.mulf %130, %125 : vector<32x64xf32>
    %132 = arith.addf %125, %131 : vector<32x64xf32>
    %cst_57 = arith.constant 0.797884583 : f32
    %133 = vector.broadcast %cst_57 : f32 to vector<32x64xf32>
    %134 = arith.mulf %133, %132 : vector<32x64xf32>
    %135 = math.tanh %134 : vector<32x64xf32>
    %cst_58 = arith.constant 1.000000e+00 : f32
    %136 = vector.broadcast %cst_58 : f32 to vector<32x64xf32>
    %137 = arith.addf %136, %135 : vector<32x64xf32>
    %138 = arith.mulf %127, %137 : vector<32x64xf32>
    %139 = arith.truncf %138 : vector<32x64xf32> to vector<32x64xbf16>
    %cst_59 = arith.constant dense<0.000000e+00> : vector<32x16xf32>
    %140 = tpu.matmul %139, %25, %cst_59 {dimension_numbers = #tpu.dot_dimension_numbers<[1], [0], [0], [1], [0, 0, 1, 1], [], []>} : vector<32x64xbf16>, vector<64x16xbf16>, vector<32x16xf32> -> vector<32x16xf32>
    %141 = vector.broadcast %27 : vector<1x16xf32> to vector<32x16xf32>
    %142 = arith.addf %140, %141 : vector<32x16xf32>
    %143 = arith.addf %99, %142 : vector<32x16xf32>
    %c0_60 = arith.constant 0 : index
    %c0_61 = arith.constant 0 : index
    %144 = vector.load %arg24[%c0_60, %c0_61] : memref<32x16xf32, #tpu.memory_space<vmem>>, vector<32x16xf32>
    tpu.vector_store %arg24[%c0_60, %c0_61], %143 {strides = array<i32>} : memref<32x16xf32, #tpu.memory_space<vmem>>, vector<32x16xf32>,
    %c0_i32_62 = arith.constant 0 : i32
    %145 = arith.cmpi eq, %arg1, %c0_i32_62 : i32
    %146 = arith.extui %145 : i1 to i32
    %c0_i32_63 = arith.constant 0 : i32
    %147 = arith.cmpi ne, %146, %c0_i32_63 : i32
    scf.if %147 {
      %c0_64 = arith.constant 0 : index
      %c0_65 = arith.constant 0 : index
      %148 = vector.load %arg17[%c0_64, %c0_65] : memref<1x16xf32, #tpu.memory_space<vmem>>, vector<1x16xf32>
      %c0_66 = arith.constant 0 : index
      %c0_67 = arith.constant 0 : index
      %149 = vector.load %arg18[%c0_66, %c0_67] : memref<1x16xf32, #tpu.memory_space<vmem>>, vector<1x16xf32>
      %c0_68 = arith.constant 0 : index
      %c0_69 = arith.constant 0 : index
      %150 = vector.load %arg19[%c0_68, %c0_69] : memref<16x32xbf16, #tpu.memory_space<vmem>>, vector<16x32xbf16>
      %c0_70 = arith.constant 0 : index
      %c0_71 = arith.constant 0 : index
      %151 = vector.load %arg20[%c0_70, %c0_71] : memref<1x32xf32, #tpu.memory_space<vmem>>, vector<1x32xf32>
      %cst_72 = arith.constant dense<0.000000e+00> : vector<32xf32>
      %152 = vector.multi_reduction <add>, %143, %cst_72 [1] : vector<32x16xf32> to vector<32xf32>
      %153 = vector.shape_cast %152 : vector<32xf32> to vector<32x1xf32>
      %cst_73 = arith.constant 1.600000e+01 : f32
      %154 = vector.broadcast %cst_73 : f32 to vector<32x1xf32>
      %155 = arith.divf %153, %154 : vector<32x1xf32>
      %156 = vector.broadcast %155 : vector<32x1xf32> to vector<32x16xf32>
      %157 = arith.subf %143, %156 : vector<32x16xf32>
      %158 = arith.mulf %157, %157 : vector<32x16xf32>
      %cst_74 = arith.constant dense<0.000000e+00> : vector<32xf32>
      %159 = vector.multi_reduction <add>, %158, %cst_74 [1] : vector<32x16xf32> to vector<32xf32>
      %160 = vector.shape_cast %159 : vector<32xf32> to vector<32x1xf32>
      %cst_75 = arith.constant 1.600000e+01 : f32
      %161 = vector.broadcast %cst_75 : f32 to vector<32x1xf32>
      %162 = arith.divf %160, %161 : vector<32x1xf32>
      %163 = vector.broadcast %155 : vector<32x1xf32> to vector<32x16xf32>
      %164 = arith.subf %143, %163 : vector<32x16xf32>
      %cst_76 = arith.constant 9.99999974E-6 : f32
      %165 = vector.broadcast %cst_76 : f32 to vector<32x1xf32>
      %166 = arith.addf %162, %165 : vector<32x1xf32>
      %167 = math.rsqrt %166 : vector<32x1xf32>
      %168 = vector.broadcast %167 : vector<32x1xf32> to vector<32x16xf32>
      %169 = arith.mulf %164, %168 : vector<32x16xf32>
      %170 = vector.broadcast %148 : vector<1x16xf32> to vector<32x16xf32>
      %171 = arith.mulf %169, %170 : vector<32x16xf32>
      %172 = vector.broadcast %149 : vector<1x16xf32> to vector<32x16xf32>
      %173 = arith.addf %171, %172 : vector<32x16xf32>
      %174 = arith.truncf %173 : vector<32x16xf32> to vector<32x16xbf16>
      %cst_77 = arith.constant dense<0.000000e+00> : vector<32x32xf32>
      %175 = tpu.matmul %174, %150, %cst_77 {dimension_numbers = #tpu.dot_dimension_numbers<[1], [0], [0], [1], [0, 0, 1, 1], [], []>} : vector<32x16xbf16>, vector<16x32xbf16>, vector<32x32xf32> -> vector<32x32xf32>
      %176 = vector.broadcast %151 : vector<1x32xf32> to vector<32x32xf32>
      %177 = arith.addf %175, %176 : vector<32x32xf32>
      %c0_78 = arith.constant 0 : index
      %c0_79 = arith.constant 0 : index
      %c0_80 = arith.constant 0 : index
      %178 = vector.load %arg21[%c0_78, %c0_79, %c0_80] : memref<1x32x32xf32, #tpu.memory_space<vmem>>, vector<1x32x32xf32>
      %179 = vector.shape_cast %178 : vector<1x32x32xf32> to vector<32x32xf32>
      %180 = vector.shape_cast %177 : vector<32x32xf32> to vector<1x32x32xf32>
      tpu.vector_store %arg21[%c0_78, %c0_79, %c0_80], %180 {strides = array<i32>} : memref<1x32x32xf32, #tpu.memory_space<vmem>>, vector<1x32x32xf32>,
      %c0_81 = arith.constant 0 : index
      %c0_82 = arith.constant 0 : index
      %c0_83 = arith.constant 0 : index
      %181 = vector.load %arg3[%c0_81, %c0_82, %c0_83] : memref<1x32x32xf32, #tpu.memory_space<vmem>>, vector<1x32x32xf32>
      %182 = vector.shape_cast %181 : vector<1x32x32xf32> to vector<32x32xf32>
      %183 = arith.subf %177, %182 : vector<32x32xf32>
      %c0_84 = arith.constant 0 : index
      %c0_85 = arith.constant 0 : index
      %c0_86 = arith.constant 0 : index
      %184 = vector.load %arg4[%c0_84, %c0_85, %c0_86] : memref<1x1x32xf32, #tpu.memory_space<vmem>>, vector<1x1x32xf32>
      %185 = vector.shape_cast %184 : vector<1x1x32xf32> to vector<1x32xf32>
      %186 = arith.mulf %183, %183 : vector<32x32xf32>
      %cst_87 = arith.constant dense<0.000000e+00> : vector<1x32xf32>
      %187 = tpu.matmul %185, %186, %cst_87 {dimension_numbers = #tpu.dot_dimension_numbers<[1], [0], [0], [1], [0, 0, 1, 1], [], []>} : vector<1x32xf32>, vector<32x32xf32>, vector<1x32xf32> -> vector<1x32xf32>
      %cst_88 = arith.constant dense<0.000000e+00> : vector<1xf32>
      %188 = vector.multi_reduction <add>, %187, %cst_88 [1] : vector<1x32xf32> to vector<1xf32>
      %189 = vector.shape_cast %188 : vector<1xf32> to vector<1x1xf32>
      %cst_89 = arith.constant 3.200000e+01 : f32
      %190 = vector.broadcast %cst_89 : f32 to vector<1x1xf32>
      %191 = arith.divf %189, %190 : vector<1x1xf32>
      %c0_90 = arith.constant 0 : index
      %c0_91 = arith.constant 0 : index
      %c0_92 = arith.constant 0 : index
      %192 = vector.load %arg22[%c0_90, %c0_91, %c0_92] : memref<1x1x1xf32, #tpu.memory_space<vmem>>, vector<1x1x1xf32>
      %193 = vector.shape_cast %192 : vector<1x1x1xf32> to vector<1x1xf32>
      %194 = vector.shape_cast %191 : vector<1x1xf32> to vector<1x1x1xf32>
      tpu.vector_store %arg22[%c0_90, %c0_91, %c0_92], %194 {strides = array<i32>} : memref<1x1x1xf32, #tpu.memory_space<vmem>>, vector<1x1x1xf32>,
      %cst_93 = arith.constant dense<0.000000e+00> : vector<1xf32>
      %195 = vector.multi_reduction <add>, %185, %cst_93 [1] : vector<1x32xf32> to vector<1xf32>
      %196 = vector.shape_cast %195 : vector<1xf32> to vector<1x1xf32>
      %c0_94 = arith.constant 0 : index
      %c0_95 = arith.constant 0 : index
      %c0_96 = arith.constant 0 : index
      %197 = vector.load %arg23[%c0_94, %c0_95, %c0_96] : memref<1x1x1xf32, #tpu.memory_space<vmem>>, vector<1x1x1xf32>
      %198 = vector.shape_cast %197 : vector<1x1x1xf32> to vector<1x1xf32>
      %199 = vector.shape_cast %196 : vector<1x1xf32> to vector<1x1x1xf32>
      tpu.vector_store %arg23[%c0_94, %c0_95, %c0_96], %199 {strides = array<i32>} : memref<1x1x1xf32, #tpu.memory_space<vmem>>, vector<1x1x1xf32>,
    } else {
    }
    return
  }
  func.func @transform_0(%arg0: i32, %arg1: i32) -> (i32, i32, i32) {
    %c0_i32 = arith.constant 0 : i32
    %c0_i32_0 = arith.constant 0 : i32
    %c0_i32_1 = arith.constant 0 : i32
    return %arg0, %c0_i32, %c0_i32_0 : i32, i32, i32
  }
  func.func @transform_1(%arg0: i32, %arg1: i32) -> (i32, i32, i32) {
    %c0_i32 = arith.constant 0 : i32
    %c0_i32_0 = arith.constant 0 : i32
    %c0_i32_1 = arith.constant 0 : i32
    return %arg0, %c0_i32, %c0_i32_0 : i32, i32, i32
  }
  func.func @transform_2(%arg0: i32, %arg1: i32) -> (i32, i32, i32) {
    %c0_i32 = arith.constant 0 : i32
    %c0_i32_0 = arith.constant 0 : i32
    %c0_i32_1 = arith.constant 0 : i32
    return %arg0, %c0_i32, %c0_i32_0 : i32, i32, i32
  }
  func.func @transform_3(%arg0: i32, %arg1: i32) -> (i32, i32, i32) {
    %c0_i32 = arith.constant 0 : i32
    %c0_i32_0 = arith.constant 0 : i32
    %c0_i32_1 = arith.constant 0 : i32
    return %arg1, %c0_i32, %c0_i32_0 : i32, i32, i32
  }
  func.func @transform_4(%arg0: i32, %arg1: i32) -> (i32, i32, i32) {
    %c0_i32 = arith.constant 0 : i32
    %c0_i32_0 = arith.constant 0 : i32
    %c0_i32_1 = arith.constant 0 : i32
    return %arg1, %c0_i32, %c0_i32_0 : i32, i32, i32
  }
  func.func @transform_5(%arg0: i32, %arg1: i32) -> (i32, i32, i32) {
    %c0_i32 = arith.constant 0 : i32
    %c0_i32_0 = arith.constant 0 : i32
    %c0_i32_1 = arith.constant 0 : i32
    return %arg1, %c0_i32, %c0_i32_0 : i32, i32, i32
  }
  func.func @transform_6(%arg0: i32, %arg1: i32) -> (i32, i32, i32) {
    %c0_i32 = arith.constant 0 : i32
    %c0_i32_0 = arith.constant 0 : i32
    %c0_i32_1 = arith.constant 0 : i32
    return %arg1, %c0_i32, %c0_i32_0 : i32, i32, i32
  }
  func.func @transform_7(%arg0: i32, %arg1: i32) -> (i32, i32, i32) {
    %c0_i32 = arith.constant 0 : i32
    %c0_i32_0 = arith.constant 0 : i32
    %c0_i32_1 = arith.constant 0 : i32
    return %arg1, %c0_i32, %c0_i32_0 : i32, i32, i32
  }
  func.func @transform_8(%arg0: i32, %arg1: i32) -> (i32, i32, i32) {
    %c0_i32 = arith.constant 0 : i32
    %c0_i32_0 = arith.constant 0 : i32
    %c0_i32_1 = arith.constant 0 : i32
    return %arg1, %c0_i32, %c0_i32_0 : i32, i32, i32
  }
  func.func @transform_9(%arg0: i32, %arg1: i32) -> (i32, i32, i32) {
    %c0_i32 = arith.constant 0 : i32
    %c0_i32_0 = arith.constant 0 : i32
    %c0_i32_1 = arith.constant 0 : i32
    return %arg1, %c0_i32, %c0_i32_0 : i32, i32, i32
  }
  func.func @transform_10(%arg0: i32, %arg1: i32) -> (i32, i32, i32) {
    %c0_i32 = arith.constant 0 : i32
    %c0_i32_0 = arith.constant 0 : i32
    %c0_i32_1 = arith.constant 0 : i32
    return %arg1, %c0_i32, %c0_i32_0 : i32, i32, i32
  }
  func.func @transform_11(%arg0: i32, %arg1: i32) -> (i32, i32, i32) {
    %c0_i32 = arith.constant 0 : i32
    %c0_i32_0 = arith.constant 0 : i32
    %c0_i32_1 = arith.constant 0 : i32
    return %arg1, %c0_i32, %c0_i32_0 : i32, i32, i32
  }
  func.func @transform_12(%arg0: i32, %arg1: i32) -> (i32, i32, i32) {
    %c0_i32 = arith.constant 0 : i32
    %c0_i32_0 = arith.constant 0 : i32
    %c0_i32_1 = arith.constant 0 : i32
    return %arg1, %c0_i32, %c0_i32_0 : i32, i32, i32
  }
  func.func @transform_13(%arg0: i32, %arg1: i32) -> (i32, i32, i32) {
    %c0_i32 = arith.constant 0 : i32
    %c0_i32_0 = arith.constant 0 : i32
    %c0_i32_1 = arith.constant 0 : i32
    return %arg1, %c0_i32, %c0_i32_0 : i32, i32, i32
  }
  func.func @transform_14(%arg0: i32, %arg1: i32) -> (i32, i32, i32) {
    %c0_i32 = arith.constant 0 : i32
    %c0_i32_0 = arith.constant 0 : i32
    %c0_i32_1 = arith.constant 0 : i32
    return %arg1, %c0_i32, %c0_i32_0 : i32, i32, i32
  }
  func.func @transform_15(%arg0: i32, %arg1: i32) -> (i32, i32) {
    %c0_i32 = arith.constant 0 : i32
    %c0_i32_0 = arith.constant 0 : i32
    %c0_i32_1 = arith.constant 0 : i32
    return %c0_i32, %c0_i32_0 : i32, i32
  }
  func.func @transform_16(%arg0: i32, %arg1: i32) -> (i32, i32) {
    %c0_i32 = arith.constant 0 : i32
    %c0_i32_0 = arith.constant 0 : i32
    %c0_i32_1 = arith.constant 0 : i32
    return %c0_i32, %c0_i32_0 : i32, i32
  }
  func.func @transform_17(%arg0: i32, %arg1: i32) -> (i32, i32) {
    %c0_i32 = arith.constant 0 : i32
    %c0_i32_0 = arith.constant 0 : i32
    %c0_i32_1 = arith.constant 0 : i32
    return %c0_i32, %c0_i32_0 : i32, i32
  }
  func.func @transform_18(%arg0: i32, %arg1: i32) -> (i32, i32) {
    %c0_i32 = arith.constant 0 : i32
    %c0_i32_0 = arith.constant 0 : i32
    %c0_i32_1 = arith.constant 0 : i32
    return %c0_i32, %c0_i32_0 : i32, i32
  }
  func.func @transform_19(%arg0: i32, %arg1: i32) -> (i32, i32, i32) {
    %c0_i32 = arith.constant 0 : i32
    %c0_i32_0 = arith.constant 0 : i32
    %c0_i32_1 = arith.constant 0 : i32
    return %arg0, %c0_i32, %c0_i32_0 : i32, i32, i32
  }
  func.func @transform_20(%arg0: i32, %arg1: i32) -> (i32, i32, i32) {
    %c0_i32 = arith.constant 0 : i32
    %c0_i32_0 = arith.constant 0 : i32
    %c0_i32_1 = arith.constant 0 : i32
    return %arg0, %c0_i32, %c0_i32_0 : i32, i32, i32
  }
  func.func @transform_21(%arg0: i32, %arg1: i32) -> (i32, i32, i32) {
    %c0_i32 = arith.constant 0 : i32
    %c0_i32_0 = arith.constant 0 : i32
    %c0_i32_1 = arith.constant 0 : i32
    return %arg0, %c0_i32, %c0_i32_0 : i32, i32, i32
  }
}

</mosaic_0001>

<llo_original>
// kernel: forward.2
$region0: #{forward.2}
  #allocation0 [shape = 'u32[]', space=smem, size = 0x4, offset = 0x4, fixed_abs, tag = 'smem constant byte address 0x4 - core index']
  #allocation1 [shape = 'u32[144,128]{1,0:T(1,128)}', space=vmem, size = 0x12000, scoped, tag = 'internal scratch']
  #allocation2 [shape = 'f32[24,32]{1,0:T(8,128)}', space=vmem, size = 0x3000, scoped, tag = 'scratch operand']
  %s0 = inlined_call_operand.vmem [shape: f32[2,24,32], index: 0, kind: input, shape index: {}]
  %s1 = inlined_call_operand.vmem [shape: f32[2,1,32], index: 1, kind: input, shape index: {}]
  %s2 = inlined_call_operand.vmem [shape: f32[2,1,32], index: 2, kind: input, shape index: {}]
  %s3 = inlined_call_operand.vmem [shape: bf16[2,32,96], index: 3, kind: input, shape index: {}]
  %s4 = inlined_call_operand.vmem [shape: f32[2,1,96], index: 4, kind: input, shape index: {}]
  %s5 = inlined_call_operand.vmem [shape: bf16[2,32,32], index: 5, kind: input, shape index: {}]
  %s6 = inlined_call_operand.vmem [shape: f32[2,1,32], index: 6, kind: input, shape index: {}]
  %s7 = inlined_call_operand.vmem [shape: f32[2,1,32], index: 7, kind: input, shape index: {}]
  %s8 = inlined_call_operand.vmem [shape: f32[2,1,32], index: 8, kind: input, shape index: {}]
  %s9 = inlined_call_operand.vmem [shape: bf16[2,32,128], index: 9, kind: input, shape index: {}]
  %s10 = inlined_call_operand.vmem [shape: f32[2,1,128], index: 10, kind: input, shape index: {}]
  %s11 = inlined_call_operand.vmem [shape: bf16[2,128,32], index: 11, kind: input, shape index: {}]
  %s12 = inlined_call_operand.vmem [shape: f32[2,1,32], index: 12, kind: input, shape index: {}]
  %s13 = inlined_call_operand.vmem [shape: f32[1,32], index: 13, kind: input, shape index: {}]
  %s14 = inlined_call_operand.vmem [shape: f32[1,32], index: 14, kind: input, shape index: {}]
  %s15 = inlined_call_operand.vmem [shape: bf16[32,16], index: 15, kind: input, shape index: {}]
  %s16 = inlined_call_operand.vmem [shape: f32[1,16], index: 16, kind: input, shape index: {}]
  %s17 = inlined_call_operand.vmem [shape: bf16[2,24,16], index: 17, kind: output, shape index: {}]
  %s18 = sld [smem:[#allocation0]]
  $region109: #{forward.2} parent=0
    _
  %s20 = ssub.s32 1, %s18
  %s21 = scalar_select 0, %s20, %s18
  loop: start=0, step=1, limit=6
  $region2: #{forward.2} parent=0 // loop_pre_header
    _
  $region3: #{forward.2} parent=0 // loop_header
    %s23 = sphi 0, %s27
    %p24 = scmp.ge.s32.totalorder %s23, 6
    %s30 = sphi 0, %s42
    %s31 = sphi 0, %s38
    %s32 = sphi 0, %s30
    %s33 = sphi 0, %s31
    %s34 = sphi 0, %s32
    %s35 = sphi 0, %s33
    %s45 = sphi 0, %s47
    %s48 = sphi 0, %s45
    %s49 = sphi 0, %s48
    %s65 = sphi 0, %s49
    %s71 = sphi 0, %s73
    %s74 = sphi 0, %s71
    %s75 = sphi 0, %s74
    %s91 = sphi 0, %s75
    %s97 = sphi 0, %s99
    %s100 = sphi 0, %s97
    %s101 = sphi 0, %s100
    %s117 = sphi 0, %s101
    %s123 = sphi 0, %s125
    %s126 = sphi 0, %s123
    %s127 = sphi 0, %s126
    %s143 = sphi 0, %s127
    %s149 = sphi 0, %s151
    %s152 = sphi 0, %s149
    %s153 = sphi 0, %s152
    %s169 = sphi 0, %s153
    %s175 = sphi 0, %s177
    %s178 = sphi 0, %s175
    %s179 = sphi 0, %s178
    %s195 = sphi 0, %s179
    %s201 = sphi 0, %s203
    %s204 = sphi 0, %s201
    %s205 = sphi 0, %s204
    %s221 = sphi 0, %s205
    %s227 = sphi 0, %s229
    %s230 = sphi 0, %s227
    %s231 = sphi 0, %s230
    %s247 = sphi 0, %s231
    %s253 = sphi 0, %s255
    %s256 = sphi 0, %s253
    %s257 = sphi 0, %s256
    %s273 = sphi 0, %s257
    %s279 = sphi 0, %s281
    %s282 = sphi 0, %s279
    %s283 = sphi 0, %s282
    %s299 = sphi 0, %s283
    %s305 = sphi 0, %s307
    %s308 = sphi 0, %s305
    %s309 = sphi 0, %s308
    %s325 = sphi 0, %s309
    %s331 = sphi 0, %s333
    %s334 = sphi 0, %s331
    %s335 = sphi 0, %s334
    %s351 = sphi 0, %s335
    %s357 = sphi 0, %s359
    %s360 = sphi 0, %s357
    %s361 = sphi 0, %s360
    %s377 = sphi 0, %s361
    %s381 = sphi 0, %s381
    %s383 = sphi 0, %s381
    %s384 = sphi 0, %s383
    %s398 = sphi 0, %s384
    %s402 = sphi 0, %s402
    %s404 = sphi 0, %s402
    %s405 = sphi 0, %s404
    %s419 = sphi 0, %s405
    %s423 = sphi 0, %s423
    %s425 = sphi 0, %s423
    %s426 = sphi 0, %s425
    %s440 = sphi 0, %s426
    %s444 = sphi 0, %s444
    %s446 = sphi 0, %s444
    %s447 = sphi 0, %s446
    %s461 = sphi 0, %s447
    %s467 = sphi 0, %s469
    %s470 = sphi 0, %s467
    %s471 = sphi 0, %s470
    %s487 = sphi 0, %s471
  $region4: #{forward.2} parent=0 // loop_header_branch
    %26 = sbr.rel (%p24) target = $region8
  $region5: #{forward.2} parent=0 // loop_body
    %s28 = ssub.s32 %s23, 1
    %s29 = ssub.s32 %s23, 2
    %s36 = sadd.s32 1, %s31
    %p37 = scmp.ge.s32.totalorder %s36, 2
    %s38 = scalar_select %p37, 0, %s36
    %s39 = sadd.s32 1, %s30
    %s40 = scalar_select %p37, %s39, %s30
    %p41 = scmp.ge.s32.totalorder %s40, 2
    %s42 = scalar_select %p41, 0, %s40
    %s43 = ssub.s32 %s30, %s42
    %p44 = scmp.eq.s32.totalorder %s43, 0
    %s46 = sadd.s32 %s45, 1
    %s47 = scalar_select %p44, %s45, %s46
    %p50 = pneg %p44
    %p51 = scmp.eq.s32.totalorder %s23, 3
    %p52 = por %p50, %p51
    %p53 = scmp.ne.s32.totalorder %s45, %s48
    %p54 = scmp.eq.s32.totalorder %s23, 0
    %p55 = por %p53, %p54
    %p56 = scmp.ne.s32.totalorder %s45, %s48
    %p57 = scmp.eq.s32.totalorder %s28, 3
    %p58 = por %p56, %p57
    %p59 = scmp.ne.s32.totalorder %s48, %s49
    %p60 = scmp.eq.s32.totalorder %s28, 0
    %p61 = por %p59, %p60
    %p62 = scmp.ne.s32.totalorder %s48, %s49
    %p63 = scmp.eq.s32.totalorder %s29, 3
    %p64 = por %p62, %p63
    %p66 = scmp.ne.s32.totalorder %s49, %s65
    %p67 = scmp.eq.s32.totalorder %s29, 0
    %p68 = por %p66, %p67
    %s69 = ssub.s32 %s31, %s38
    %p70 = scmp.eq.s32.totalorder %s69, 0
    %s72 = sadd.s32 %s71, 1
    %s73 = scalar_select %p70, %s71, %s72
    %p76 = pneg %p70
    %p77 = scmp.eq.s32.totalorder %s23, 3
    %p78 = por %p76, %p77
    %p79 = scmp.ne.s32.totalorder %s71, %s74
    %p80 = scmp.eq.s32.totalorder %s23, 0
    %p81 = por %p79, %p80
    %p82 = scmp.ne.s32.totalorder %s71, %s74
    %p83 = scmp.eq.s32.totalorder %s28, 3
    %p84 = por %p82, %p83
    %p85 = scmp.ne.s32.totalorder %s74, %s75
    %p86 = scmp.eq.s32.totalorder %s28, 0
    %p87 = por %p85, %p86
    %p88 = scmp.ne.s32.totalorder %s74, %s75
    %p89 = scmp.eq.s32.totalorder %s29, 3
    %p90 = por %p88, %p89
    %p92 = scmp.ne.s32.totalorder %s75, %s91
    %p93 = scmp.eq.s32.totalorder %s29, 0
    %p94 = por %p92, %p93
    %s95 = ssub.s32 %s31, %s38
    %p96 = scmp.eq.s32.totalorder %s95, 0
    %s98 = sadd.s32 %s97, 1
    %s99 = scalar_select %p96, %s97, %s98
    %p102 = pneg %p96
    %p103 = scmp.eq.s32.totalorder %s23, 3
    %p104 = por %p102, %p103
    %p105 = scmp.ne.s32.totalorder %s97, %s100
    %p106 = scmp.eq.s32.totalorder %s23, 0
    %p107 = por %p105, %p106
    %p108 = scmp.ne.s32.totalorder %s97, %s100
    %p109 = scmp.eq.s32.totalorder %s28, 3
    %p110 = por %p108, %p109
    %p111 = scmp.ne.s32.totalorder %s100, %s101
    %p112 = scmp.eq.s32.totalorder %s28, 0
    %p113 = por %p111, %p112
    %p114 = scmp.ne.s32.totalorder %s100, %s101
    %p115 = scmp.eq.s32.totalorder %s29, 3
    %p116 = por %p114, %p115
    %p118 = scmp.ne.s32.totalorder %s101, %s117
    %p119 = scmp.eq.s32.totalorder %s29, 0
    %p120 = por %p118, %p119
    %s121 = ssub.s32 %s31, %s38
    %p122 = scmp.eq.s32.totalorder %s121, 0
    %s124 = sadd.s32 %s123, 1
    %s125 = scalar_select %p122, %s123, %s124
    %p128 = pneg %p122
    %p129 = scmp.eq.s32.totalorder %s23, 3
    %p130 = por %p128, %p129
    %p131 = scmp.ne.s32.totalorder %s123, %s126
    %p132 = scmp.eq.s32.totalorder %s23, 0
    %p133 = por %p131, %p132
    %p134 = scmp.ne.s32.totalorder %s123, %s126
    %p135 = scmp.eq.s32.totalorder %s28, 3
    %p136 = por %p134, %p135
    %p137 = scmp.ne.s32.totalorder %s126, %s127
    %p138 = scmp.eq.s32.totalorder %s28, 0
    %p139 = por %p137, %p138
    %p140 = scmp.ne.s32.totalorder %s126, %s127
    %p141 = scmp.eq.s32.totalorder %s29, 3
    %p142 = por %p140, %p141
    %p144 = scmp.ne.s32.totalorder %s127, %s143
    %p145 = scmp.eq.s32.totalorder %s29, 0
    %p146 = por %p144, %p145
    %s147 = ssub.s32 %s31, %s38
    %p148 = scmp.eq.s32.totalorder %s147, 0
    %s150 = sadd.s32 %s149, 1
    %s151 = scalar_select %p148, %s149, %s150
    %p154 = pneg %p148
    %p155 = scmp.eq.s32.totalorder %s23, 3
    %p156 = por %p154, %p155
    %p157 = scmp.ne.s32.totalorder %s149, %s152
    %p158 = scmp.eq.s32.totalorder %s23, 0
    %p159 = por %p157, %p158
    %p160 = scmp.ne.s32.totalorder %s149, %s152
    %p161 = scmp.eq.s32.totalorder %s28, 3
    %p162 = por %p160, %p161
    %p163 = scmp.ne.s32.totalorder %s152, %s153
    %p164 = scmp.eq.s32.totalorder %s28, 0
    %p165 = por %p163, %p164
    %p166 = scmp.ne.s32.totalorder %s152, %s153
    %p167 = scmp.eq.s32.totalorder %s29, 3
    %p168 = por %p166, %p167
    %p170 = scmp.ne.s32.totalorder %s153, %s169
    %p171 = scmp.eq.s32.totalorder %s29, 0
    %p172 = por %p170, %p171
    %s173 = ssub.s32 %s31, %s38
    %p174 = scmp.eq.s32.totalorder %s173, 0
    %s176 = sadd.s32 %s175, 1
    %s177 = scalar_select %p174, %s175, %s176
    %p180 = pneg %p174
    %p181 = scmp.eq.s32.totalorder %s23, 3
    %p182 = por %p180, %p181
    %p183 = scmp.ne.s32.totalorder %s175, %s178
    %p184 = scmp.eq.s32.totalorder %s23, 0
    %p185 = por %p183, %p184
    %p186 = scmp.ne.s32.totalorder %s175, %s178
    %p187 = scmp.eq.s32.totalorder %s28, 3
    %p188 = por %p186, %p187
    %p189 = scmp.ne.s32.totalorder %s178, %s179
    %p190 = scmp.eq.s32.totalorder %s28, 0
    %p191 = por %p189, %p190
    %p192 = scmp.ne.s32.totalorder %s178, %s179
    %p193 = scmp.eq.s32.totalorder %s29, 3
    %p194 = por %p192, %p193
    %p196 = scmp.ne.s32.totalorder %s179, %s195
    %p197 = scmp.eq.s32.totalorder %s29, 0
    %p198 = por %p196, %p197
    %s199 = ssub.s32 %s31, %s38
    %p200 = scmp.eq.s32.totalorder %s199, 0
    %s202 = sadd.s32 %s201, 1
    %s203 = scalar_select %p200, %s201, %s202
    %p206 = pneg %p200
    %p207 = scmp.eq.s32.totalorder %s23, 3
    %p208 = por %p206, %p207
    %p209 = scmp.ne.s32.totalorder %s201, %s204
    %p210 = scmp.eq.s32.totalorder %s23, 0
    %p211 = por %p209, %p210
    %p212 = scmp.ne.s32.totalorder %s201, %s204
    %p213 = scmp.eq.s32.totalorder %s28, 3
    %p214 = por %p212, %p213
    %p215 = scmp.ne.s32.totalorder %s204, %s205
    %p216 = scmp.eq.s32.totalorder %s28, 0
    %p217 = por %p215, %p216
    %p218 = scmp.ne.s32.totalorder %s204, %s205
    %p219 = scmp.eq.s32.totalorder %s29, 3
    %p220 = por %p218, %p219
    %p222 = scmp.ne.s32.totalorder %s205, %s221
    %p223 = scmp.eq.s32.totalorder %s29, 0
    %p224 = por %p222, %p223
    %s225 = ssub.s32 %s31, %s38
    %p226 = scmp.eq.s32.totalorder %s225, 0
    %s228 = sadd.s32 %s227, 1
    %s229 = scalar_select %p226, %s227, %s228
    %p232 = pneg %p226
    %p233 = scmp.eq.s32.totalorder %s23, 3
    %p234 = por %p232, %p233
    %p235 = scmp.ne.s32.totalorder %s227, %s230
    %p236 = scmp.eq.s32.totalorder %s23, 0
    %p237 = por %p235, %p236
    %p238 = scmp.ne.s32.totalorder %s227, %s230
    %p239 = scmp.eq.s32.totalorder %s28, 3
    %p240 = por %p238, %p239
    %p241 = scmp.ne.s32.totalorder %s230, %s231
    %p242 = scmp.eq.s32.totalorder %s28, 0
    %p243 = por %p241, %p242
    %p244 = scmp.ne.s32.totalorder %s230, %s231
    %p245 = scmp.eq.s32.totalorder %s29, 3
    %p246 = por %p244, %p245
    %p248 = scmp.ne.s32.totalorder %s231, %s247
    %p249 = scmp.eq.s32.totalorder %s29, 0
    %p250 = por %p248, %p249
    %s251 = ssub.s32 %s31, %s38
    %p252 = scmp.eq.s32.totalorder %s251, 0
    %s254 = sadd.s32 %s253, 1
    %s255 = scalar_select %p252, %s253, %s254
    %p258 = pneg %p252
    %p259 = scmp.eq.s32.totalorder %s23, 3
    %p260 = por %p258, %p259
    %p261 = scmp.ne.s32.totalorder %s253, %s256
    %p262 = scmp.eq.s32.totalorder %s23, 0
    %p263 = por %p261, %p262
    %p264 = scmp.ne.s32.totalorder %s253, %s256
    %p265 = scmp.eq.s32.totalorder %s28, 3
    %p266 = por %p264, %p265
    %p267 = scmp.ne.s32.totalorder %s256, %s257
    %p268 = scmp.eq.s32.totalorder %s28, 0
    %p269 = por %p267, %p268
    %p270 = scmp.ne.s32.totalorder %s256, %s257
    %p271 = scmp.eq.s32.totalorder %s29, 3
    %p272 = por %p270, %p271
    %p274 = scmp.ne.s32.totalorder %s257, %s273
    %p275 = scmp.eq.s32.totalorder %s29, 0
    %p276 = por %p274, %p275
    %s277 = ssub.s32 %s31, %s38
    %p278 = scmp.eq.s32.totalorder %s277, 0
    %s280 = sadd.s32 %s279, 1
    %s281 = scalar_select %p278, %s279, %s280
    %p284 = pneg %p278
    %p285 = scmp.eq.s32.totalorder %s23, 3
    %p286 = por %p284, %p285
    %p287 = scmp.ne.s32.totalorder %s279, %s282
    %p288 = scmp.eq.s32.totalorder %s23, 0
    %p289 = por %p287, %p288
    %p290 = scmp.ne.s32.totalorder %s279, %s282
    %p291 = scmp.eq.s32.totalorder %s28, 3
    %p292 = por %p290, %p291
    %p293 = scmp.ne.s32.totalorder %s282, %s283
    %p294 = scmp.eq.s32.totalorder %s28, 0
    %p295 = por %p293, %p294
    %p296 = scmp.ne.s32.totalorder %s282, %s283
    %p297 = scmp.eq.s32.totalorder %s29, 3
    %p298 = por %p296, %p297
    %p300 = scmp.ne.s32.totalorder %s283, %s299
    %p301 = scmp.eq.s32.totalorder %s29, 0
    %p302 = por %p300, %p301
    %s303 = ssub.s32 %s31, %s38
    %p304 = scmp.eq.s32.totalorder %s303, 0
    %s306 = sadd.s32 %s305, 1
    %s307 = scalar_select %p304, %s305, %s306
    %p310 = pneg %p304
    %p311 = scmp.eq.s32.totalorder %s23, 3
    %p312 = por %p310, %p311
    %p313 = scmp.ne.s32.totalorder %s305, %s308
    %p314 = scmp.eq.s32.totalorder %s23, 0
    %p315 = por %p313, %p314
    %p316 = scmp.ne.s32.totalorder %s305, %s308
    %p317 = scmp.eq.s32.totalorder %s28, 3
    %p318 = por %p316, %p317
    %p319 = scmp.ne.s32.totalorder %s308, %s309
    %p320 = scmp.eq.s32.totalorder %s28, 0
    %p321 = por %p319, %p320
    %p322 = scmp.ne.s32.totalorder %s308, %s309
    %p323 = scmp.eq.s32.totalorder %s29, 3
    %p324 = por %p322, %p323
    %p326 = scmp.ne.s32.totalorder %s309, %s325
    %p327 = scmp.eq.s32.totalorder %s29, 0
    %p328 = por %p326, %p327
    %s329 = ssub.s32 %s31, %s38
    %p330 = scmp.eq.s32.totalorder %s329, 0
    %s332 = sadd.s32 %s331, 1
    %s333 = scalar_select %p330, %s331, %s332
    %p336 = pneg %p330
    %p337 = scmp.eq.s32.totalorder %s23, 3
    %p338 = por %p336, %p337
    %p339 = scmp.ne.s32.totalorder %s331, %s334
    %p340 = scmp.eq.s32.totalorder %s23, 0
    %p341 = por %p339, %p340
    %p342 = scmp.ne.s32.totalorder %s331, %s334
    %p343 = scmp.eq.s32.totalorder %s28, 3
    %p344 = por %p342, %p343
    %p345 = scmp.ne.s32.totalorder %s334, %s335
    %p346 = scmp.eq.s32.totalorder %s28, 0
    %p347 = por %p345, %p346
    %p348 = scmp.ne.s32.totalorder %s334, %s335
    %p349 = scmp.eq.s32.totalorder %s29, 3
    %p350 = por %p348, %p349
    %p352 = scmp.ne.s32.totalorder %s335, %s351
    %p353 = scmp.eq.s32.totalorder %s29, 0
    %p354 = por %p352, %p353
    %s355 = ssub.s32 %s31, %s38
    %p356 = scmp.eq.s32.totalorder %s355, 0
    %s358 = sadd.s32 %s357, 1
    %s359 = scalar_select %p356, %s357, %s358
    %p362 = pneg %p356
    %p363 = scmp.eq.s32.totalorder %s23, 3
    %p364 = por %p362, %p363
    %p365 = scmp.ne.s32.totalorder %s357, %s360
    %p366 = scmp.eq.s32.totalorder %s23, 0
    %p367 = por %p365, %p366
    %p368 = scmp.ne.s32.totalorder %s357, %s360
    %p369 = scmp.eq.s32.totalorder %s28, 3
    %p370 = por %p368, %p369
    %p371 = scmp.ne.s32.totalorder %s360, %s361
    %p372 = scmp.eq.s32.totalorder %s28, 0
    %p373 = por %p371, %p372
    %p374 = scmp.ne.s32.totalorder %s360, %s361
    %p375 = scmp.eq.s32.totalorder %s29, 3
    %p376 = por %p374, %p375
    %p378 = scmp.ne.s32.totalorder %s361, %s377
    %p379 = scmp.eq.s32.totalorder %s29, 0
    %p380 = por %p378, %p379
    %s382 = sadd.s32 %s381, 1
    %p385 = scmp.eq.s32.totalorder %s23, 3
    %p386 = scmp.ne.s32.totalorder %s381, %s383
    %p387 = scmp.eq.s32.totalorder %s23, 0
    %p388 = por %p386, %p387
    %p389 = scmp.ne.s32.totalorder %s381, %s383
    %p390 = scmp.eq.s32.totalorder %s28, 3
    %p391 = por %p389, %p390
    %p392 = scmp.ne.s32.totalorder %s383, %s384
    %p393 = scmp.eq.s32.totalorder %s28, 0
    %p394 = por %p392, %p393
    %p395 = scmp.ne.s32.totalorder %s383, %s384
    %p396 = scmp.eq.s32.totalorder %s29, 3
    %p397 = por %p395, %p396
    %p399 = scmp.ne.s32.totalorder %s384, %s398
    %p400 = scmp.eq.s32.totalorder %s29, 0
    %p401 = por %p399, %p400
    %s403 = sadd.s32 %s402, 1
    %p406 = scmp.eq.s32.totalorder %s23, 3
    %p407 = scmp.ne.s32.totalorder %s402, %s404
    %p408 = scmp.eq.s32.totalorder %s23, 0
    %p409 = por %p407, %p408
    %p410 = scmp.ne.s32.totalorder %s402, %s404
    %p411 = scmp.eq.s32.totalorder %s28, 3
    %p412 = por %p410, %p411
    %p413 = scmp.ne.s32.totalorder %s404, %s405
    %p414 = scmp.eq.s32.totalorder %s28, 0
    %p415 = por %p413, %p414
    %p416 = scmp.ne.s32.totalorder %s404, %s405
    %p417 = scmp.eq.s32.totalorder %s29, 3
    %p418 = por %p416, %p417
    %p420 = scmp.ne.s32.totalorder %s405, %s419
    %p421 = scmp.eq.s32.totalorder %s29, 0
    %p422 = por %p420, %p421
    %s424 = sadd.s32 %s423, 1
    %p427 = scmp.eq.s32.totalorder %s23, 3
    %p428 = scmp.ne.s32.totalorder %s423, %s425
    %p429 = scmp.eq.s32.totalorder %s23, 0
    %p430 = por %p428, %p429
    %p431 = scmp.ne.s32.totalorder %s423, %s425
    %p432 = scmp.eq.s32.totalorder %s28, 3
    %p433 = por %p431, %p432
    %p434 = scmp.ne.s32.totalorder %s425, %s426
    %p435 = scmp.eq.s32.totalorder %s28, 0
    %p436 = por %p434, %p435
    %p437 = scmp.ne.s32.totalorder %s425, %s426
    %p438 = scmp.eq.s32.totalorder %s29, 3
    %p439 = por %p437, %p438
    %p441 = scmp.ne.s32.totalorder %s426, %s440
    %p442 = scmp.eq.s32.totalorder %s29, 0
    %p443 = por %p441, %p442
    %s445 = sadd.s32 %s444, 1
    %p448 = scmp.eq.s32.totalorder %s23, 3
    %p449 = scmp.ne.s32.totalorder %s444, %s446
    %p450 = scmp.eq.s32.totalorder %s23, 0
    %p451 = por %p449, %p450
    %p452 = scmp.ne.s32.totalorder %s444, %s446
    %p453 = scmp.eq.s32.totalorder %s28, 3
    %p454 = por %p452, %p453
    %p455 = scmp.ne.s32.totalorder %s446, %s447
    %p456 = scmp.eq.s32.totalorder %s28, 0
    %p457 = por %p455, %p456
    %p458 = scmp.ne.s32.totalorder %s446, %s447
    %p459 = scmp.eq.s32.totalorder %s29, 3
    %p460 = por %p458, %p459
    %p462 = scmp.ne.s32.totalorder %s447, %s461
    %p463 = scmp.eq.s32.totalorder %s29, 0
    %p464 = por %p462, %p463
    %s465 = ssub.s32 %s30, %s42
    %p466 = scmp.eq.s32.totalorder %s465, 0
    %s468 = sadd.s32 %s467, 1
    %s469 = scalar_select %p466, %s467, %s468
    %p472 = pneg %p466
    %p473 = scmp.eq.s32.totalorder %s23, 3
    %p474 = por %p472, %p473
    %p475 = scmp.ne.s32.totalorder %s467, %s470
    %p476 = scmp.eq.s32.totalorder %s23, 0
    %p477 = por %p475, %p476
    %p478 = scmp.ne.s32.totalorder %s467, %s470
    %p479 = scmp.eq.s32.totalorder %s28, 3
    %p480 = por %p478, %p479
    %p481 = scmp.ne.s32.totalorder %s470, %s471
    %p482 = scmp.eq.s32.totalorder %s28, 0
    %p483 = por %p481, %p482
    %p484 = scmp.ne.s32.totalorder %s470, %s471
    %p485 = scmp.eq.s32.totalorder %s29, 3
    %p486 = por %p484, %p485
    %p488 = scmp.ne.s32.totalorder %s471, %s487
    %p489 = scmp.eq.s32.totalorder %s29, 0
    %p490 = por %p488, %p489
    %p491 = scmp.le.s32.totalorder 1, %s23
    %p492 = scmp.lt.s32.totalorder %s23, 5
    %p493 = pnand %p491, %p492
    %p494 = pneg %p493
    // Predicated region
    $region9: #{forward.2} parent=5 // pred_check
      _
    $region10: #{forward.2} parent=5 // pred_check_branch
      %496 = sbr.rel (%p493) target = $region12
    $region11: #{forward.2} parent=5 // pred_region
      %s497 = ssub.s32 %s23, 1
      // Predicated region
      $region13: #{forward.2} parent=11 // pred_check
        %p498 = pneg %p394
      $region14: #{forward.2} parent=11 // pred_check_branch
        %500 = sbr.rel (%p498) target = $region16
      $region15: #{forward.2} parent=11 // pred_region
        _
      $region16: #{forward.2} parent=11 // pred_fallthru
        _
      // Predicated region
      $region17: #{forward.2} parent=11 // pred_check
        %p501 = pneg %p415
      $region18: #{forward.2} parent=11 // pred_check_branch
        %503 = sbr.rel (%p501) target = $region20
      $region19: #{forward.2} parent=11 // pred_region
        _
      $region20: #{forward.2} parent=11 // pred_fallthru
        _
      // Predicated region
      $region21: #{forward.2} parent=11 // pred_check
        %p504 = pneg %p436
      $region22: #{forward.2} parent=11 // pred_check_branch
        %506 = sbr.rel (%p504) target = $region24
      $region23: #{forward.2} parent=11 // pred_region
        _
      $region24: #{forward.2} parent=11 // pred_fallthru
        _
      // Predicated region
      $region25: #{forward.2} parent=11 // pred_check
        %p507 = pneg %p457
      $region26: #{forward.2} parent=11 // pred_check_branch
        %509 = sbr.rel (%p507) target = $region28
      $region27: #{forward.2} parent=11 // pred_region
        _
      $region28: #{forward.2} parent=11 // pred_fallthru
        _
    $region12: #{forward.2} parent=5 // pred_fallthru
      _
    %p510 = scmp.lt.s32.totalorder %s23, 4
    // Predicated region
    $region29: #{forward.2} parent=5 // pred_check
      %p511 = pneg %p510
    $region30: #{forward.2} parent=5 // pred_check_branch
      %513 = sbr.rel (%p511) target = $region32
    $region31: #{forward.2} parent=5 // pred_region
      // Predicated region
      $region33: #{forward.2} parent=31 // pred_check
        %p514 = pneg %p55
      $region34: #{forward.2} parent=31 // pred_check_branch
        %516 = sbr.rel (%p514) target = $region36
      $region35: #{forward.2} parent=31 // pred_region
        %p517 = scmp.lt.s32.totalorder %s30, 1
        %s518 = scalar_select %p517, %s30, 1
        %s519 = smul.addr %s518, 3
        %s520 = smul.addr %s519, 8
        %s521 = scalar_lea.vmem %s0, %s520
      $region36: #{forward.2} parent=31 // pred_fallthru
        _
      // Predicated region
      $region37: #{forward.2} parent=31 // pred_check
        %p522 = pneg %p81
      $region38: #{forward.2} parent=31 // pred_check_branch
        %524 = sbr.rel (%p522) target = $region40
      $region39: #{forward.2} parent=31 // pred_region
        %p525 = scmp.lt.s32.totalorder %s31, 1
        %s526 = scalar_select %p525, %s31, 1
        %s527 = scalar_lea.vmem %s1, %s526
      $region40: #{forward.2} parent=31 // pred_fallthru
        _
      // Predicated region
      $region41: #{forward.2} parent=31 // pred_check
        %p528 = pneg %p107
      $region42: #{forward.2} parent=31 // pred_check_branch
        %530 = sbr.rel (%p528) target = $region44
      $region43: #{forward.2} parent=31 // pred_region
        %p531 = scmp.lt.s32.totalorder %s31, 1
        %s532 = scalar_select %p531, %s31, 1
        %s533 = scalar_lea.vmem %s2, %s532
      $region44: #{forward.2} parent=31 // pred_fallthru
        _
      // Predicated region
      $region45: #{forward.2} parent=31 // pred_check
        %p534 = pneg %p133
      $region46: #{forward.2} parent=31 // pred_check_branch
        %536 = sbr.rel (%p534) target = $region48
      $region47: #{forward.2} parent=31 // pred_region
        %p537 = scmp.lt.s32.totalorder %s31, 1
        %s538 = scalar_select %p537, %s31, 1
        %s539 = smul.addr %s538, 4
        %s540 = smul.addr %s539, 4
        %s541 = scalar_lea.vmem %s3, %s540
      $region48: #{forward.2} parent=31 // pred_fallthru
        _
      // Predicated region
      $region49: #{forward.2} parent=31 // pred_check
        %p542 = pneg %p159
      $region50: #{forward.2} parent=31 // pred_check_branch
        %544 = sbr.rel (%p542) target = $region52
      $region51: #{forward.2} parent=31 // pred_region
        %p545 = scmp.lt.s32.totalorder %s31, 1
        %s546 = scalar_select %p545, %s31, 1
        %s547 = scalar_lea.vmem %s4, %s546
      $region52: #{forward.2} parent=31 // pred_fallthru
        _
      // Predicated region
      $region53: #{forward.2} parent=31 // pred_check
        %p548 = pneg %p185
      $region54: #{forward.2} parent=31 // pred_check_branch
        %550 = sbr.rel (%p548) target = $region56
      $region55: #{forward.2} parent=31 // pred_region
        %p551 = scmp.lt.s32.totalorder %s31, 1
        %s552 = scalar_select %p551, %s31, 1
        %s553 = smul.addr %s552, 4
        %s554 = smul.addr %s553, 4
        %s555 = scalar_lea.vmem %s5, %s554
      $region56: #{forward.2} parent=31 // pred_fallthru
        _
      // Predicated region
      $region57: #{forward.2} parent=31 // pred_check
        %p556 = pneg %p211
      $region58: #{forward.2} parent=31 // pred_check_branch
        %558 = sbr.rel (%p556) target = $region60
      $region59: #{forward.2} parent=31 // pred_region
        %p559 = scmp.lt.s32.totalorder %s31, 1
        %s560 = scalar_select %p559, %s31, 1
        %s561 = scalar_lea.vmem %s6, %s560
      $region60: #{forward.2} parent=31 // pred_fallthru
        _
      // Predicated region
      $region61: #{forward.2} parent=31 // pred_check
        %p562 = pneg %p237
      $region62: #{forward.2} parent=31 // pred_check_branch
        %564 = sbr.rel (%p562) target = $region64
      $region63: #{forward.2} parent=31 // pred_region
        %p565 = scmp.lt.s32.totalorder %s31, 1
        %s566 = scalar_select %p565, %s31, 1
        %s567 = scalar_lea.vmem %s7, %s566
      $region64: #{forward.2} parent=31 // pred_fallthru
        _
      // Predicated region
      $region65: #{forward.2} parent=31 // pred_check
        %p568 = pneg %p263
      $region66: #{forward.2} parent=31 // pred_check_branch
        %570 = sbr.rel (%p568) target = $region68
      $region67: #{forward.2} parent=31 // pred_region
        %p571 = scmp.lt.s32.totalorder %s31, 1
        %s572 = scalar_select %p571, %s31, 1
        %s573 = scalar_lea.vmem %s8, %s572
      $region68: #{forward.2} parent=31 // pred_fallthru
        _
      // Predicated region
      $region69: #{forward.2} parent=31 // pred_check
        %p574 = pneg %p289
      $region70: #{forward.2} parent=31 // pred_check_branch
        %576 = sbr.rel (%p574) target = $region72
      $region71: #{forward.2} parent=31 // pred_region
        %p577 = scmp.lt.s32.totalorder %s31, 1
        %s578 = scalar_select %p577, %s31, 1
        %s579 = smul.addr %s578, 4
        %s580 = smul.addr %s579, 4
        %s581 = scalar_lea.vmem %s9, %s580
      $region72: #{forward.2} parent=31 // pred_fallthru
        _
      // Predicated region
      $region73: #{forward.2} parent=31 // pred_check
        %p582 = pneg %p315
      $region74: #{forward.2} parent=31 // pred_check_branch
        %584 = sbr.rel (%p582) target = $region76
      $region75: #{forward.2} parent=31 // pred_region
        %p585 = scmp.lt.s32.totalorder %s31, 1
        %s586 = scalar_select %p585, %s31, 1
        %s587 = scalar_lea.vmem %s10, %s586
      $region76: #{forward.2} parent=31 // pred_fallthru
        _
      // Predicated region
      $region77: #{forward.2} parent=31 // pred_check
        %p588 = pneg %p341
      $region78: #{forward.2} parent=31 // pred_check_branch
        %590 = sbr.rel (%p588) target = $region80
      $region79: #{forward.2} parent=31 // pred_region
        %p591 = scmp.lt.s32.totalorder %s31, 1
        %s592 = scalar_select %p591, %s31, 1
        %s593 = smul.addr %s592, 16
        %s594 = smul.addr %s593, 4
        %s595 = scalar_lea.vmem %s11, %s594
      $region80: #{forward.2} parent=31 // pred_fallthru
        _
      // Predicated region
      $region81: #{forward.2} parent=31 // pred_check
        %p596 = pneg %p367
      $region82: #{forward.2} parent=31 // pred_check_branch
        %598 = sbr.rel (%p596) target = $region84
      $region83: #{forward.2} parent=31 // pred_region
        %p599 = scmp.lt.s32.totalorder %s31, 1
        %s600 = scalar_select %p599, %s31, 1
        %s601 = scalar_lea.vmem %s12, %s600
      $region84: #{forward.2} parent=31 // pred_fallthru
        _
    $region32: #{forward.2} parent=5 // pred_fallthru
      _
    %p602 = scmp.le.s32.totalorder 1, %s23
    %p603 = scmp.lt.s32.totalorder %s23, 5
    %p604 = pnand %p602, %p603
    %p605 = pneg %p604
    // Predicated region
    $region85: #{forward.2} parent=5 // pred_check
      _
    $region86: #{forward.2} parent=5 // pred_check_branch
      %607 = sbr.rel (%p604) target = $region88
    $region87: #{forward.2} parent=5 // pred_region
      %s608 = ssub.s32 %s23, 1
      %p609 = scmp.lt.s32.totalorder %s32, 1
      %s610 = scalar_select %p609, %s32, 1
      %s611 = smul.addr %s610, 3
      %s612 = smul.addr %s611, 8
      %s613 = scalar_lea.vmem %s0, %s612
      %p614 = pneg %p61
      %p615 = pneg %p58
      %p616 = scmp.lt.s32.totalorder %s33, 1
      %s617 = scalar_select %p616, %s33, 1
      %s618 = scalar_lea.vmem %s1, %s617
      %p619 = pneg %p87
      %p620 = pneg %p84
      %p621 = scmp.lt.s32.totalorder %s33, 1
      %s622 = scalar_select %p621, %s33, 1
      %s623 = scalar_lea.vmem %s2, %s622
      %p624 = pneg %p113
      %p625 = pneg %p110
      %p626 = scmp.lt.s32.totalorder %s33, 1
      %s627 = scalar_select %p626, %s33, 1
      %s628 = smul.addr %s627, 4
      %s629 = smul.addr %s628, 4
      %s630 = scalar_lea.vmem %s3, %s629
      %p631 = pneg %p139
      %p632 = pneg %p136
      %p633 = scmp.lt.s32.totalorder %s33, 1
      %s634 = scalar_select %p633, %s33, 1
      %s635 = scalar_lea.vmem %s4, %s634
      %p636 = pneg %p165
      %p637 = pneg %p162
      %p638 = scmp.lt.s32.totalorder %s33, 1
      %s639 = scalar_select %p638, %s33, 1
      %s640 = smul.addr %s639, 4
      %s641 = smul.addr %s640, 4
      %s642 = scalar_lea.vmem %s5, %s641
      %p643 = pneg %p191
      %p644 = pneg %p188
      %p645 = scmp.lt.s32.totalorder %s33, 1
      %s646 = scalar_select %p645, %s33, 1
      %s647 = scalar_lea.vmem %s6, %s646
      %p648 = pneg %p217
      %p649 = pneg %p214
      %p650 = scmp.lt.s32.totalorder %s33, 1
      %s651 = scalar_select %p650, %s33, 1
      %s652 = scalar_lea.vmem %s7, %s651
      %p653 = pneg %p243
      %p654 = pneg %p240
      %p655 = scmp.lt.s32.totalorder %s33, 1
      %s656 = scalar_select %p655, %s33, 1
      %s657 = scalar_lea.vmem %s8, %s656
      %p658 = pneg %p269
      %p659 = pneg %p266
      %p660 = scmp.lt.s32.totalorder %s33, 1
      %s661 = scalar_select %p660, %s33, 1
      %s662 = smul.addr %s661, 4
      %s663 = smul.addr %s662, 4
      %s664 = scalar_lea.vmem %s9, %s663
      %p665 = pneg %p295
      %p666 = pneg %p292
      %p667 = scmp.lt.s32.totalorder %s33, 1
      %s668 = scalar_select %p667, %s33, 1
      %s669 = scalar_lea.vmem %s10, %s668
      %p670 = pneg %p321
      %p671 = pneg %p318
      %p672 = scmp.lt.s32.totalorder %s33, 1
      %s673 = scalar_select %p672, %s33, 1
      %s674 = smul.addr %s673, 16
      %s675 = smul.addr %s674, 4
      %s676 = scalar_lea.vmem %s11, %s675
      %p677 = pneg %p347
      %p678 = pneg %p344
      %p679 = scmp.lt.s32.totalorder %s33, 1
      %s680 = scalar_select %p679, %s33, 1
      %s681 = scalar_lea.vmem %s12, %s680
      %p682 = pneg %p373
      %p683 = pneg %p370
      %p684 = pneg %p394
      %p685 = pneg %p391
      %p686 = pneg %p415
      %p687 = pneg %p412
      %p688 = pneg %p436
      %p689 = pneg %p433
      %p690 = pneg %p457
      %p691 = pneg %p454
      %p692 = pneg %p483
      %p693 = pneg %p480
      %p694 = scmp.lt.s32.totalorder %s32, 1
      %s695 = scalar_select %p694, %s32, 1
      %s696 = smul.addr %s695, 3
      %s697 = smul.addr %s696, 4
      %s698 = scalar_lea.vmem %s17, %s697
      %p699 = scmp.lt.s32.totalorder %s32, 1
      %s700 = scalar_select %p699, %s32, 1
      %s701 = smul.addr %s700, 3
      %s702 = smul.addr %s701, 8
      %s703 = scalar_lea.vmem %s0, %s702
      %p704 = scmp.lt.s32.totalorder %s33, 1
      %s705 = scalar_select %p704, %s33, 1
      %s706 = scalar_lea.vmem %s1, %s705
      %p707 = scmp.lt.s32.totalorder %s33, 1
      %s708 = scalar_select %p707, %s33, 1
      %s709 = scalar_lea.vmem %s2, %s708
      %p710 = scmp.lt.s32.totalorder %s33, 1
      %s711 = scalar_select %p710, %s33, 1
      %s712 = smul.addr %s711, 4
      %s713 = smul.addr %s712, 4
      %s714 = scalar_lea.vmem %s3, %s713
      %p715 = scmp.lt.s32.totalorder %s33, 1
      %s716 = scalar_select %p715, %s33, 1
      %s717 = scalar_lea.vmem %s4, %s716
      %p718 = scmp.lt.s32.totalorder %s33, 1
      %s719 = scalar_select %p718, %s33, 1
      %s720 = smul.addr %s719, 4
      %s721 = smul.addr %s720, 4
      %s722 = scalar_lea.vmem %s5, %s721
      %p723 = scmp.lt.s32.totalorder %s33, 1
      %s724 = scalar_select %p723, %s33, 1
      %s725 = scalar_lea.vmem %s6, %s724
      %p726 = scmp.lt.s32.totalorder %s33, 1
      %s727 = scalar_select %p726, %s33, 1
      %s728 = scalar_lea.vmem %s7, %s727
      %p729 = scmp.lt.s32.totalorder %s33, 1
      %s730 = scalar_select %p729, %s33, 1
      %s731 = scalar_lea.vmem %s8, %s730
      %p732 = scmp.lt.s32.totalorder %s33, 1
      %s733 = scalar_select %p732, %s33, 1
      %s734 = smul.addr %s733, 4
      %s735 = smul.addr %s734, 4
      %s736 = scalar_lea.vmem %s9, %s735
      %p737 = scmp.lt.s32.totalorder %s33, 1
      %s738 = scalar_select %p737, %s33, 1
      %s739 = scalar_lea.vmem %s10, %s738
      %p740 = scmp.lt.s32.totalorder %s33, 1
      %s741 = scalar_select %p740, %s33, 1
      %s742 = smul.addr %s741, 16
      %s743 = smul.addr %s742, 4
      %s744 = scalar_lea.vmem %s11, %s743
      %p745 = scmp.lt.s32.totalorder %s33, 1
      %s746 = scalar_select %p745, %s33, 1
      %s747 = scalar_lea.vmem %s12, %s746
      %p748 = scmp.lt.s32.totalorder %s32, 1
      %s749 = scalar_select %p748, %s32, 1
      %s750 = smul.addr %s749, 3
      %s751 = smul.addr %s750, 4
      %s752 = scalar_lea.vmem %s17, %s751
      %p754 = scmp.eq.s32.totalorder %s33, 0
      // Predicated region
      $region89: #{forward.2} parent=87 // pred_check
        %p755 = pneg %p754
      $region90: #{forward.2} parent=87 // pred_check_branch
        %757 = sbr.rel (%p755) target = $region92
      $region91: #{forward.2} parent=87 // pred_region
        %v758 = vld [vmem:[%s703] sm:$0xff]
        %v759 = vld [vmem:[%s703 + $0x8] sm:$0xff]
        %v760 = vld [vmem:[%s703 + $0x10] sm:$0xff]
        %vm761 = vcmask 261120
        %762 = vst.msk [vmem:[#allocation2] sm:$0xff] %vm761, %v758
        %763 = vst.msk [vmem:[#allocation2 + $0x8] sm:$0xff] %vm761, %v759
        %764 = vst.msk [vmem:[#allocation2 + $0x10] sm:$0xff] %vm761, %v760
      $region92: #{forward.2} parent=87 // pred_fallthru
        _
      %v765 = vld [vmem:[#allocation2] sm:$0xff]
      %v766 = vld [vmem:[#allocation2 + $0x8] sm:$0xff]
      %v767 = vld [vmem:[#allocation2 + $0x10] sm:$0xff]
      %v768 = vld [vmem:[%s706] sm:$0x1]
      %v769 = vld [vmem:[%s709] sm:$0x1]
      %v770 = vld [vmem:[%s714] sm:$0xf]
      %v771 = vld [vmem:[%s714 + $0x4] sm:$0xf]
      %v772 = vld [vmem:[%s714 + $0x8] sm:$0xf]
      %v773 = vld [vmem:[%s714 + $0xc] sm:$0xf]
      %v774 = vld [vmem:[%s717] sm:$0x1]
      %v775 = vld [vmem:[%s722] sm:$0xf]
      %v776 = vld [vmem:[%s722 + $0x4] sm:$0xf]
      %v777 = vld [vmem:[%s722 + $0x8] sm:$0xf]
      %v778 = vld [vmem:[%s722 + $0xc] sm:$0xf]
      %v779 = vld [vmem:[%s725] sm:$0x1]
      %v780 = vld [vmem:[%s728] sm:$0x1]
      %v781 = vld [vmem:[%s731] sm:$0x1]
      %v782 = vld [vmem:[%s736] sm:$0xf]
      %v783 = vld [vmem:[%s736 + $0x4] sm:$0xf]
      %v784 = vld [vmem:[%s736 + $0x8] sm:$0xf]
      %v785 = vld [vmem:[%s736 + $0xc] sm:$0xf]
      %v786 = vld [vmem:[%s739] sm:$0x1]
      %v787 = vld [vmem:[%s744] sm:$0xf]
      %v788 = vld [vmem:[%s744 + $0x4] sm:$0xf]
      %v789 = vld [vmem:[%s744 + $0x8] sm:$0xf]
      %v790 = vld [vmem:[%s744 + $0xc] sm:$0xf]
      %v791 = vld [vmem:[%s744 + $0x10] sm:$0xf]
      %v792 = vld [vmem:[%s744 + $0x14] sm:$0xf]
      %v793 = vld [vmem:[%s744 + $0x18] sm:$0xf]
      %v794 = vld [vmem:[%s744 + $0x1c] sm:$0xf]
      %v795 = vld [vmem:[%s744 + $0x20] sm:$0xf]
      %v796 = vld [vmem:[%s744 + $0x24] sm:$0xf]
      %v797 = vld [vmem:[%s744 + $0x28] sm:$0xf]
      %v798 = vld [vmem:[%s744 + $0x2c] sm:$0xf]
      %v799 = vld [vmem:[%s744 + $0x30] sm:$0xf]
      %v800 = vld [vmem:[%s744 + $0x34] sm:$0xf]
      %v801 = vld [vmem:[%s744 + $0x38] sm:$0xf]
      %v802 = vld [vmem:[%s744 + $0x3c] sm:$0xf]
      %v803 = vld [vmem:[%s747] sm:$0x1]
      %vm804 = vcmask 261120
      %v805 = vsel %vm804, %v765, 0.0
      %806 = vadd.xlane.f32.xlu0 %v805
      %v807 = vpop.xlane.xlu0 %806
      %v808 = vsel %vm804, %v766, 0.0
      %809 = vadd.xlane.f32.xlu0 %v808
      %v810 = vpop.xlane.xlu0 %809
      %v811 = vsel %vm804, %v767, 0.0
      %812 = vadd.xlane.f32.xlu0 %v811
      %v813 = vpop.xlane.xlu0 %812
      %v814 = vrcp.pop 32.0
      %v815 = vmul.f32 %v807, %v814
      %v816 = vmul.f32 %v810, %v814
      %v817 = vmul.f32 %v813, %v814
      %v818 = vsub.f32 %v765, %v815
      %v819 = vsub.f32 %v766, %v816
      %v820 = vsub.f32 %v767, %v817
      %v821 = vmul.f32 %v818, %v818
      %v822 = vmul.f32 %v819, %v819
      %v823 = vmul.f32 %v820, %v820
      %v824 = vsel %vm804, %v821, 0.0
      %825 = vadd.xlane.f32.xlu0 %v824
      %v826 = vpop.xlane.xlu0 %825
      %v827 = vsel %vm804, %v822, 0.0
      %828 = vadd.xlane.f32.xlu0 %v827
      %v829 = vpop.xlane.xlu0 %828
      %v830 = vsel %vm804, %v823, 0.0
      %831 = vadd.xlane.f32.xlu0 %v830
      %v832 = vpop.xlane.xlu0 %831
      %v833 = vmul.f32 %v826, %v814
      %v834 = vmul.f32 %v829, %v814
      %v835 = vmul.f32 %v832, %v814
      %v836 = vadd.f32 %v833, 1e-05
      %v837 = vadd.f32 %v834, 1e-05
      %v838 = vadd.f32 %v835, 1e-05
      %v839 = vrsqrt.pop %v836
      %v840 = vrsqrt.pop %v837
      %v841 = vrsqrt.pop %v838
      %v842 = vmul.f32 %v818, %v839
      %v843 = vmul.f32 %v819, %v840
      %v844 = vmul.f32 %v820, %v841
      %v846 = vlaneseq
      %v847 = vshrl.u32 %v846, 7
      %v848 = vsub.s32 0, %v847
      %v849 = vrot.slane %v768, %v848
      %v851 = vmul.f32 %v842, %v849
      %v852 = vmul.f32 %v843, %v849
      %v853 = vmul.f32 %v844, %v849
      %v855 = vlaneseq
      %v856 = vshrl.u32 %v855, 7
      %v857 = vsub.s32 0, %v856
      %v858 = vrot.slane %v769, %v857
      %v860 = vadd.f32 %v851, %v858
      %v861 = vadd.f32 %v852, %v858
      %v862 = vadd.f32 %v853, %v858
      %v863 = vpack.c.bf16 %v861, %v860
      %v864 = vpack.c.bf16 %v862, %v862
      %v866 = vlaneseq
      %v867 = vshrl.u32 %v866, 7
      %v868 = vsub.s32 0, %v867
      %v869 = vrot.slane %v774, %v868
      %v875 = vunpack.c.l.b16 %v770
      %v876 = vunpack.c.l.b16 %v771
      %v877 = vunpack.c.l.b16 %v772
      %v878 = vunpack.c.l.b16 %v773
      %v879 = vpack.c.b16 %v876, %v875
      %v880 = vpack.c.b16 %v878, %v877
      %v884 = vsel %vm804, %v863, 0
      %v887 = vsel %vm804, %v864, 0
      %889 = vmatprep.subr.bf16.mxu0 0
      %890 = vmatpush1.bf16.msra.mxu0 0
      %891 = vmatprep.subr.bf16.mxu0 0
      %892 = vmatpush1.bf16.msra.mxu0 0
      %893 = vmatprep.subr.bf16.mxu0 0
      %894 = vmatpush1.bf16.msra.mxu0 0
      %895 = vmatprep.subr.bf16.mxu0 0
      %896 = vmatpush1.bf16.msra.mxu0 0
      %897 = vmatprep.subr.bf16.mxu0 0
      %898 = vmatpush1.bf16.msra.mxu0 0
      %899 = vmatprep.subr.bf16.mxu0 0
      %900 = vmatpush1.bf16.msra.mxu0 0
      %901 = vmatprep.subr.bf16.mxu0 0
      %902 = vmatpush1.bf16.msra.mxu0 %v880
      %903 = vmatprep.subr.bf16.mxu0 0
      %904 = vmatpush1.bf16.msra.mxu0 %v879
      %905 = vmatprep.subr.bf16.mxu0 0
      %906 = vmatpush2.bf16.msra.mxu0 0
      %907 = vmatprep.subr.bf16.mxu0 0
      %908 = vmatpush2.bf16.msra.mxu0 0
      %909 = vmatprep.subr.bf16.mxu0 0
      %910 = vmatpush2.bf16.msra.mxu0 0
      %911 = vmatprep.subr.bf16.mxu0 0
      %912 = vmatpush2.bf16.msra.mxu0 0
      %913 = vmatprep.subr.bf16.mxu0 0
      %914 = vmatpush2.bf16.msra.mxu0 0
      %915 = vmatprep.subr.bf16.mxu0 0
      %916 = vmatpush2.bf16.msra.mxu0 0
      %917 = vmatprep.subr.bf16.mxu0 0
      %918 = vmatpush2.bf16.msra.mxu0 0
      %919 = vmatprep.subr.bf16.mxu0 0
      %920 = vmatpush2.bf16.msra.mxu0 0
      %921 = vmatprep.mubr.bf16.mxu0 0
      %922 = vmatmul.mubr.bf16.gmra.mxu0 %v884
      %v923 = vpop.f32.mrf.mxu0
      %v924 = vadd.f32 %v869, %v923
      %v925 = vpop.f32.mrf.mxu0
      %v926 = vpop.f32.mrf.mxu0
      %v927 = vadd.f32 %v869, %v926
      %v928 = vpop.f32.mrf.mxu0
      %929 = vmatprep.mubr.bf16.mxu0 0
      %930 = vmatmul.mubr.bf16.gmra.mxu0 %v887
      %v931 = vpop.f32.mrf.mxu0
      %v932 = vadd.f32 %v869, %v931
      %v933 = vpop.f32.mrf.mxu0
      %v934 = vpop.f32.mrf.mxu0
      %v935 = vpop.f32.mrf.mxu0
      %936 = vdwg.mxu0
      %940 = vrot.lane.b32.xlu0 %v924, 120
      %v941 = vpop.permute.xlu0 %940
      %942 = vrot.lane.b32.xlu0 %v927, 120
      %v943 = vpop.permute.xlu0 %942
      %944 = vrot.lane.b32.xlu0 %v932, 120
      %v945 = vpop.permute.xlu0 %944
      %949 = vrot.lane.b32.xlu0 %v924, 112
      %v950 = vpop.permute.xlu0 %949
      %951 = vrot.lane.b32.xlu0 %v927, 112
      %v952 = vpop.permute.xlu0 %951
      %953 = vrot.lane.b32.xlu0 %v932, 112
      %v954 = vpop.permute.xlu0 %953
      %958 = vrot.lane.b32.xlu0 %v924, 104
      %v959 = vpop.permute.xlu0 %958
      %960 = vrot.lane.b32.xlu0 %v927, 104
      %v961 = vpop.permute.xlu0 %960
      %962 = vrot.lane.b32.xlu0 %v932, 104
      %v963 = vpop.permute.xlu0 %962
      %v967 = vmul.f32 %v924, 0.35355338
      %v968 = vmul.f32 %v927, 0.35355338
      %v969 = vmul.f32 %v932, 0.35355338
      %v970 = vmul.f32 %v941, 0.35355338
      %v971 = vmul.f32 %v943, 0.35355338
      %v972 = vmul.f32 %v945, 0.35355338
      %v973 = vmul.f32 %v950, 0.35355338
      %v974 = vmul.f32 %v952, 0.35355338
      %v975 = vmul.f32 %v954, 0.35355338
      %v976 = vmul.f32 %v959, 0.35355338
      %v977 = vmul.f32 %v961, 0.35355338
      %v978 = vmul.f32 %v963, 0.35355338
      %v979 = vpack.c.bf16 %v968, %v967
      %v980 = vpack.c.bf16 %v969, %v969
      %v981 = vpack.c.bf16 %v971, %v970
      %v982 = vpack.c.bf16 %v972, %v972
      %v983 = vpack.c.bf16 %v974, %v973
      %v984 = vpack.c.bf16 %v975, %v975
      %v985 = vpack.c.bf16 %v977, %v976
      %v986 = vpack.c.bf16 %v978, %v978
      %v987 = vpack.c.bf16 %v927, %v924
      %v988 = vpack.c.bf16 %v932, %v932
      %v989 = vpack.c.bf16 %v943, %v941
      %v990 = vpack.c.bf16 %v945, %v945
      %v991 = vpack.c.bf16 %v952, %v950
      %v992 = vpack.c.bf16 %v954, %v954
      %v993 = vpack.c.bf16 %v961, %v959
      %v994 = vpack.c.bf16 %v963, %v963
      %997 = vrot.lane.b32.xlu0 %v987, 96
      %v998 = vpop.permute.xlu0 %997
      %999 = vrot.lane.b32.xlu0 %v988, 96
      %v1000 = vpop.permute.xlu0 %999
      %vm1001 = vcmask 64512
      %v1003 = vsel %vm1001, %v979, 0
      %v1006 = vsel %vm1001, %v980, 0
      %v1009 = vsel %vm1001, %v998, 0
      %v1012 = vsel %vm1001, %v1000, 0
      %1014 = vmatprep.subr.bf16.mxu0 0
      %1015 = vmatpush1.bf16.xpose.msra.mxu0 0
      %1016 = vmatprep.subr.bf16.mxu0 0
      %1017 = vmatpush1.bf16.xpose.msra.mxu0 0
      %1018 = vmatprep.subr.bf16.mxu0 0
      %1019 = vmatpush1.bf16.xpose.msra.mxu0 0
      %1020 = vmatprep.subr.bf16.mxu0 0
      %1021 = vmatpush1.bf16.xpose.msra.mxu0 0
      %1022 = vmatprep.subr.bf16.mxu0 0
      %1023 = vmatpush1.bf16.xpose.msra.mxu0 0
      %1024 = vmatprep.subr.bf16.mxu0 0
      %1025 = vmatpush1.bf16.xpose.msra.mxu0 0
      %1026 = vmatprep.subr.bf16.mxu0 0
      %1027 = vmatpush1.bf16.xpose.msra.mxu0 %v1012
      %1028 = vmatprep.subr.bf16.mxu0 0
      %1029 = vmatpush1.bf16.xpose.msra.mxu0 %v1009
      %1030 = vmatprep.subr.bf16.mxu0 0
      %1031 = vmatpush2.bf16.xpose.msra.mxu0 0
      %1032 = vmatprep.subr.bf16.mxu0 0
      %1033 = vmatpush2.bf16.xpose.msra.mxu0 0
      %1034 = vmatprep.subr.bf16.mxu0 0
      %1035 = vmatpush2.bf16.xpose.msra.mxu0 0
      %1036 = vmatprep.subr.bf16.mxu0 0
      %1037 = vmatpush2.bf16.xpose.msra.mxu0 0
      %1038 = vmatprep.subr.bf16.mxu0 0
      %1039 = vmatpush2.bf16.xpose.msra.mxu0 0
      %1040 = vmatprep.subr.bf16.mxu0 0
      %1041 = vmatpush2.bf16.xpose.msra.mxu0 0
      %1042 = vmatprep.subr.bf16.mxu0 0
      %1043 = vmatpush2.bf16.xpose.msra.mxu0 0
      %1044 = vmatprep.subr.bf16.mxu0 0
      %1045 = vmatpush2.bf16.xpose.msra.mxu0 0
      %1046 = vmatprep.mubr.bf16.mxu0 0
      %1047 = vmatmul.mubr.bf16.gmra.mxu0 %v1003
      %v1048 = vpop.f32.mrf.mxu0
      %v1049 = vadd.f32 0.0, %v1048
      %v1050 = vpop.f32.mrf.mxu0
      %v1051 = vpop.f32.mrf.mxu0
      %v1052 = vadd.f32 0.0, %v1051
      %v1053 = vpop.f32.mrf.mxu0
      %1054 = vmatprep.mubr.bf16.mxu0 0
      %1055 = vmatmul.mubr.bf16.gmra.mxu0 %v1006
      %v1056 = vpop.f32.mrf.mxu0
      %v1057 = vadd.f32 0.0, %v1056
      %v1058 = vpop.f32.mrf.mxu0
      %v1059 = vpop.f32.mrf.mxu0
      %v1060 = vpop.f32.mrf.mxu0
      %1061 = vdwg.mxu0
      %1064 = vrot.lane.b32.xlu0 %v989, 96
      %v1065 = vpop.permute.xlu0 %1064
      %1066 = vrot.lane.b32.xlu0 %v990, 96
      %v1067 = vpop.permute.xlu0 %1066
      %v1069 = vsel %vm1001, %v981, 0
      %v1072 = vsel %vm1001, %v982, 0
      %v1075 = vsel %vm1001, %v1065, 0
      %v1078 = vsel %vm1001, %v1067, 0
      %1080 = vmatprep.subr.bf16.mxu0 0
      %1081 = vmatpush1.bf16.xpose.msra.mxu0 0
      %1082 = vmatprep.subr.bf16.mxu0 0
      %1083 = vmatpush1.bf16.xpose.msra.mxu0 0
      %1084 = vmatprep.subr.bf16.mxu0 0
      %1085 = vmatpush1.bf16.xpose.msra.mxu0 0
      %1086 = vmatprep.subr.bf16.mxu0 0
      %1087 = vmatpush1.bf16.xpose.msra.mxu0 0
      %1088 = vmatprep.subr.bf16.mxu0 0
      %1089 = vmatpush1.bf16.xpose.msra.mxu0 0
      %1090 = vmatprep.subr.bf16.mxu0 0
      %1091 = vmatpush1.bf16.xpose.msra.mxu0 0
      %1092 = vmatprep.subr.bf16.mxu0 0
      %1093 = vmatpush1.bf16.xpose.msra.mxu0 %v1078
      %1094 = vmatprep.subr.bf16.mxu0 0
      %1095 = vmatpush1.bf16.xpose.msra.mxu0 %v1075
      %1096 = vmatprep.subr.bf16.mxu0 0
      %1097 = vmatpush2.bf16.xpose.msra.mxu0 0
      %1098 = vmatprep.subr.bf16.mxu0 0
      %1099 = vmatpush2.bf16.xpose.msra.mxu0 0
      %1100 = vmatprep.subr.bf16.mxu0 0
      %1101 = vmatpush2.bf16.xpose.msra.mxu0 0
      %1102 = vmatprep.subr.bf16.mxu0 0
      %1103 = vmatpush2.bf16.xpose.msra.mxu0 0
      %1104 = vmatprep.subr.bf16.mxu0 0
      %1105 = vmatpush2.bf16.xpose.msra.mxu0 0
      %1106 = vmatprep.subr.bf16.mxu0 0
      %1107 = vmatpush2.bf16.xpose.msra.mxu0 0
      %1108 = vmatprep.subr.bf16.mxu0 0
      %1109 = vmatpush2.bf16.xpose.msra.mxu0 0
      %1110 = vmatprep.subr.bf16.mxu0 0
      %1111 = vmatpush2.bf16.xpose.msra.mxu0 0
      %1112 = vmatprep.mubr.bf16.mxu0 0
      %1113 = vmatmul.mubr.bf16.gmra.mxu0 %v1069
      %v1114 = vpop.f32.mrf.mxu0
      %v1115 = vadd.f32 0.0, %v1114
      %v1116 = vpop.f32.mrf.mxu0
      %v1117 = vpop.f32.mrf.mxu0
      %v1118 = vadd.f32 0.0, %v1117
      %v1119 = vpop.f32.mrf.mxu0
      %1120 = vmatprep.mubr.bf16.mxu0 0
      %1121 = vmatmul.mubr.bf16.gmra.mxu0 %v1072
      %v1122 = vpop.f32.mrf.mxu0
      %v1123 = vadd.f32 0.0, %v1122
      %v1124 = vpop.f32.mrf.mxu0
      %v1125 = vpop.f32.mrf.mxu0
      %v1126 = vpop.f32.mrf.mxu0
      %1127 = vdwg.mxu0
      %1130 = vrot.lane.b32.xlu0 %v991, 96
      %v1131 = vpop.permute.xlu0 %1130
      %1132 = vrot.lane.b32.xlu0 %v992, 96
      %v1133 = vpop.permute.xlu0 %1132
      %v1135 = vsel %vm1001, %v983, 0
      %v1138 = vsel %vm1001, %v984, 0
      %v1141 = vsel %vm1001, %v1131, 0
      %v1144 = vsel %vm1001, %v1133, 0
      %1146 = vmatprep.subr.bf16.mxu0 0
      %1147 = vmatpush1.bf16.xpose.msra.mxu0 0
      %1148 = vmatprep.subr.bf16.mxu0 0
      %1149 = vmatpush1.bf16.xpose.msra.mxu0 0
      %1150 = vmatprep.subr.bf16.mxu0 0
      %1151 = vmatpush1.bf16.xpose.msra.mxu0 0
      %1152 = vmatprep.subr.bf16.mxu0 0
      %1153 = vmatpush1.bf16.xpose.msra.mxu0 0
      %1154 = vmatprep.subr.bf16.mxu0 0
      %1155 = vmatpush1.bf16.xpose.msra.mxu0 0
      %1156 = vmatprep.subr.bf16.mxu0 0
      %1157 = vmatpush1.bf16.xpose.msra.mxu0 0
      %1158 = vmatprep.subr.bf16.mxu0 0
      %1159 = vmatpush1.bf16.xpose.msra.mxu0 %v1144
      %1160 = vmatprep.subr.bf16.mxu0 0
      %1161 = vmatpush1.bf16.xpose.msra.mxu0 %v1141
      %1162 = vmatprep.subr.bf16.mxu0 0
      %1163 = vmatpush2.bf16.xpose.msra.mxu0 0
      %1164 = vmatprep.subr.bf16.mxu0 0
      %1165 = vmatpush2.bf16.xpose.msra.mxu0 0
      %1166 = vmatprep.subr.bf16.mxu0 0
      %1167 = vmatpush2.bf16.xpose.msra.mxu0 0
      %1168 = vmatprep.subr.bf16.mxu0 0
      %1169 = vmatpush2.bf16.xpose.msra.mxu0 0
      %1170 = vmatprep.subr.bf16.mxu0 0
      %1171 = vmatpush2.bf16.xpose.msra.mxu0 0
      %1172 = vmatprep.subr.bf16.mxu0 0
      %1173 = vmatpush2.bf16.xpose.msra.mxu0 0
      %1174 = vmatprep.subr.bf16.mxu0 0
      %1175 = vmatpush2.bf16.xpose.msra.mxu0 0
      %1176 = vmatprep.subr.bf16.mxu0 0
      %1177 = vmatpush2.bf16.xpose.msra.mxu0 0
      %1178 = vmatprep.mubr.bf16.mxu0 0
      %1179 = vmatmul.mubr.bf16.gmra.mxu0 %v1135
      %v1180 = vpop.f32.mrf.mxu0
      %v1181 = vadd.f32 0.0, %v1180
      %v1182 = vpop.f32.mrf.mxu0
      %v1183 = vpop.f32.mrf.mxu0
      %v1184 = vadd.f32 0.0, %v1183
      %v1185 = vpop.f32.mrf.mxu0
      %1186 = vmatprep.mubr.bf16.mxu0 0
      %1187 = vmatmul.mubr.bf16.gmra.mxu0 %v1138
      %v1188 = vpop.f32.mrf.mxu0
      %v1189 = vadd.f32 0.0, %v1188
      %v1190 = vpop.f32.mrf.mxu0
      %v1191 = vpop.f32.mrf.mxu0
      %v1192 = vpop.f32.mrf.mxu0
      %1193 = vdwg.mxu0
      %1196 = vrot.lane.b32.xlu0 %v993, 96
      %v1197 = vpop.permute.xlu0 %1196
      %1198 = vrot.lane.b32.xlu0 %v994, 96
      %v1199 = vpop.permute.xlu0 %1198
      %v1201 = vsel %vm1001, %v985, 0
      %v1204 = vsel %vm1001, %v986, 0
      %v1207 = vsel %vm1001, %v1197, 0
      %v1210 = vsel %vm1001, %v1199, 0
      %1212 = vmatprep.subr.bf16.mxu0 0
      %1213 = vmatpush1.bf16.xpose.msra.mxu0 0
      %1214 = vmatprep.subr.bf16.mxu0 0
      %1215 = vmatpush1.bf16.xpose.msra.mxu0 0
      %1216 = vmatprep.subr.bf16.mxu0 0
      %1217 = vmatpush1.bf16.xpose.msra.mxu0 0
      %1218 = vmatprep.subr.bf16.mxu0 0
      %1219 = vmatpush1.bf16.xpose.msra.mxu0 0
      %1220 = vmatprep.subr.bf16.mxu0 0
      %1221 = vmatpush1.bf16.xpose.msra.mxu0 0
      %1222 = vmatprep.subr.bf16.mxu0 0
      %1223 = vmatpush1.bf16.xpose.msra.mxu0 0
      %1224 = vmatprep.subr.bf16.mxu0 0
      %1225 = vmatpush1.bf16.xpose.msra.mxu0 %v1210
      %1226 = vmatprep.subr.bf16.mxu0 0
      %1227 = vmatpush1.bf16.xpose.msra.mxu0 %v1207
      %1228 = vmatprep.subr.bf16.mxu0 0
      %1229 = vmatpush2.bf16.xpose.msra.mxu0 0
      %1230 = vmatprep.subr.bf16.mxu0 0
      %1231 = vmatpush2.bf16.xpose.msra.mxu0 0
      %1232 = vmatprep.subr.bf16.mxu0 0
      %1233 = vmatpush2.bf16.xpose.msra.mxu0 0
      %1234 = vmatprep.subr.bf16.mxu0 0
      %1235 = vmatpush2.bf16.xpose.msra.mxu0 0
      %1236 = vmatprep.subr.bf16.mxu0 0
      %1237 = vmatpush2.bf16.xpose.msra.mxu0 0
      %1238 = vmatprep.subr.bf16.mxu0 0
      %1239 = vmatpush2.bf16.xpose.msra.mxu0 0
      %1240 = vmatprep.subr.bf16.mxu0 0
      %1241 = vmatpush2.bf16.xpose.msra.mxu0 0
      %1242 = vmatprep.subr.bf16.mxu0 0
      %1243 = vmatpush2.bf16.xpose.msra.mxu0 0
      %1244 = vmatprep.mubr.bf16.mxu0 0
      %1245 = vmatmul.mubr.bf16.gmra.mxu0 %v1201
      %v1246 = vpop.f32.mrf.mxu0
      %v1247 = vadd.f32 0.0, %v1246
      %v1248 = vpop.f32.mrf.mxu0
      %v1249 = vpop.f32.mrf.mxu0
      %v1250 = vadd.f32 0.0, %v1249
      %v1251 = vpop.f32.mrf.mxu0
      %1252 = vmatprep.mubr.bf16.mxu0 0
      %1253 = vmatmul.mubr.bf16.gmra.mxu0 %v1204
      %v1254 = vpop.f32.mrf.mxu0
      %v1255 = vadd.f32 0.0, %v1254
      %v1256 = vpop.f32.mrf.mxu0
      %v1257 = vpop.f32.mrf.mxu0
      %v1258 = vpop.f32.mrf.mxu0
      %1259 = vdwg.mxu0
      %vm1260 = vcmask 195584
      %v1261 = vsel %vm1260, %v1049, -inf
      %1262 = vmax.xlane.f32.xlu0 %v1261
      %v1263 = vpop.xlane.xlu0 %1262
      %v1264 = vsel %vm1260, %v1052, -inf
      %1265 = vmax.xlane.f32.xlu0 %v1264
      %v1266 = vpop.xlane.xlu0 %1265
      %v1267 = vsel %vm1260, %v1057, -inf
      %1268 = vmax.xlane.f32.xlu0 %v1267
      %v1269 = vpop.xlane.xlu0 %1268
      %v1270 = vsel %vm1260, %v1115, -inf
      %1271 = vmax.xlane.f32.xlu0 %v1270
      %v1272 = vpop.xlane.xlu0 %1271
      %v1273 = vsel %vm1260, %v1118, -inf
      %1274 = vmax.xlane.f32.xlu0 %v1273
      %v1275 = vpop.xlane.xlu0 %1274
      %v1276 = vsel %vm1260, %v1123, -inf
      %1277 = vmax.xlane.f32.xlu0 %v1276
      %v1278 = vpop.xlane.xlu0 %1277
      %v1279 = vsel %vm1260, %v1181, -inf
      %1280 = vmax.xlane.f32.xlu0 %v1279
      %v1281 = vpop.xlane.xlu0 %1280
      %v1282 = vsel %vm1260, %v1184, -inf
      %1283 = vmax.xlane.f32.xlu0 %v1282
      %v1284 = vpop.xlane.xlu0 %1283
      %v1285 = vsel %vm1260, %v1189, -inf
      %1286 = vmax.xlane.f32.xlu0 %v1285
      %v1287 = vpop.xlane.xlu0 %1286
      %v1288 = vsel %vm1260, %v1247, -inf
      %1289 = vmax.xlane.f32.xlu0 %v1288
      %v1290 = vpop.xlane.xlu0 %1289
      %v1291 = vsel %vm1260, %v1250, -inf
      %1292 = vmax.xlane.f32.xlu0 %v1291
      %v1293 = vpop.xlane.xlu0 %1292
      %v1294 = vsel %vm1260, %v1255, -inf
      %1295 = vmax.xlane.f32.xlu0 %v1294
      %v1296 = vpop.xlane.xlu0 %1295
      %v1297 = vsub.f32 %v1049, %v1263
      %v1298 = vsub.f32 %v1052, %v1266
      %v1299 = vsub.f32 %v1057, %v1269
      %v1300 = vsub.f32 %v1115, %v1272
      %v1301 = vsub.f32 %v1118, %v1275
      %v1302 = vsub.f32 %v1123, %v1278
      %v1303 = vsub.f32 %v1181, %v1281
      %v1304 = vsub.f32 %v1184, %v1284
      %v1305 = vsub.f32 %v1189, %v1287
      %v1306 = vsub.f32 %v1247, %v1290
      %v1307 = vsub.f32 %v1250, %v1293
      %v1308 = vsub.f32 %v1255, %v1296
      %v1309 = vmul.f32 %v1297, 1.442695
      %v1310 = vpow.pop %v1309
      %v1311 = vmul.f32 %v1298, 1.442695
      %v1312 = vpow.pop %v1311
      %v1313 = vmul.f32 %v1299, 1.442695
      %v1314 = vpow.pop %v1313
      %v1315 = vmul.f32 %v1300, 1.442695
      %v1316 = vpow.pop %v1315
      %v1317 = vmul.f32 %v1301, 1.442695
      %v1318 = vpow.pop %v1317
      %v1319 = vmul.f32 %v1302, 1.442695
      %v1320 = vpow.pop %v1319
      %v1321 = vmul.f32 %v1303, 1.442695
      %v1322 = vpow.pop %v1321
      %v1323 = vmul.f32 %v1304, 1.442695
      %v1324 = vpow.pop %v1323
      %v1325 = vmul.f32 %v1305, 1.442695
      %v1326 = vpow.pop %v1325
      %v1327 = vmul.f32 %v1306, 1.442695
      %v1328 = vpow.pop %v1327
      %v1329 = vmul.f32 %v1307, 1.442695
      %v1330 = vpow.pop %v1329
      %v1331 = vmul.f32 %v1308, 1.442695
      %v1332 = vpow.pop %v1331
      %v1333 = vsel %vm1260, %v1310, 0.0
      %1334 = vadd.xlane.f32.xlu0 %v1333
      %v1335 = vpop.xlane.xlu0 %1334
      %v1336 = vsel %vm1260, %v1312, 0.0
      %1337 = vadd.xlane.f32.xlu0 %v1336
      %v1338 = vpop.xlane.xlu0 %1337
      %v1339 = vsel %vm1260, %v1314, 0.0
      %1340 = vadd.xlane.f32.xlu0 %v1339
      %v1341 = vpop.xlane.xlu0 %1340
      %v1342 = vsel %vm1260, %v1316, 0.0
      %1343 = vadd.xlane.f32.xlu0 %v1342
      %v1344 = vpop.xlane.xlu0 %1343
      %v1345 = vsel %vm1260, %v1318, 0.0
      %1346 = vadd.xlane.f32.xlu0 %v1345
      %v1347 = vpop.xlane.xlu0 %1346
      %v1348 = vsel %vm1260, %v1320, 0.0
      %1349 = vadd.xlane.f32.xlu0 %v1348
      %v1350 = vpop.xlane.xlu0 %1349
      %v1351 = vsel %vm1260, %v1322, 0.0
      %1352 = vadd.xlane.f32.xlu0 %v1351
      %v1353 = vpop.xlane.xlu0 %1352
      %v1354 = vsel %vm1260, %v1324, 0.0
      %1355 = vadd.xlane.f32.xlu0 %v1354
      %v1356 = vpop.xlane.xlu0 %1355
      %v1357 = vsel %vm1260, %v1326, 0.0
      %1358 = vadd.xlane.f32.xlu0 %v1357
      %v1359 = vpop.xlane.xlu0 %1358
      %v1360 = vsel %vm1260, %v1328, 0.0
      %1361 = vadd.xlane.f32.xlu0 %v1360
      %v1362 = vpop.xlane.xlu0 %1361
      %v1363 = vsel %vm1260, %v1330, 0.0
      %1364 = vadd.xlane.f32.xlu0 %v1363
      %v1365 = vpop.xlane.xlu0 %1364
      %v1366 = vsel %vm1260, %v1332, 0.0
      %1367 = vadd.xlane.f32.xlu0 %v1366
      %v1368 = vpop.xlane.xlu0 %1367
      %v1369 = vrcp.pop %v1335
      %v1370 = vrcp.pop %v1338
      %v1371 = vrcp.pop %v1341
      %v1372 = vrcp.pop %v1344
      %v1373 = vrcp.pop %v1347
      %v1374 = vrcp.pop %v1350
      %v1375 = vrcp.pop %v1353
      %v1376 = vrcp.pop %v1356
      %v1377 = vrcp.pop %v1359
      %v1378 = vrcp.pop %v1362
      %v1379 = vrcp.pop %v1365
      %v1380 = vrcp.pop %v1368
      %v1381 = vmul.f32 %v1310, %v1369
      %v1382 = vmul.f32 %v1312, %v1370
      %v1383 = vmul.f32 %v1314, %v1371
      %v1384 = vmul.f32 %v1316, %v1372
      %v1385 = vmul.f32 %v1318, %v1373
      %v1386 = vmul.f32 %v1320, %v1374
      %v1387 = vmul.f32 %v1322, %v1375
      %v1388 = vmul.f32 %v1324, %v1376
      %v1389 = vmul.f32 %v1326, %v1377
      %v1390 = vmul.f32 %v1328, %v1378
      %v1391 = vmul.f32 %v1330, %v1379
      %v1392 = vmul.f32 %v1332, %v1380
      %v1393 = vpack.c.bf16 %v1382, %v1381
      %v1394 = vpack.c.bf16 %v1383, %v1383
      %v1395 = vpack.c.bf16 %v1385, %v1384
      %v1396 = vpack.c.bf16 %v1386, %v1386
      %v1397 = vpack.c.bf16 %v1388, %v1387
      %v1398 = vpack.c.bf16 %v1389, %v1389
      %v1399 = vpack.c.bf16 %v1391, %v1390
      %v1400 = vpack.c.bf16 %v1392, %v1392
      %1401 = vrot.lane.b32.xlu0 %v987, 64
      %v1402 = vpop.permute.xlu0 %1401
      %1403 = vrot.lane.b32.xlu0 %v988, 64
      %v1404 = vpop.permute.xlu0 %1403
      %v1407 = vsel %vm1260, %v1393, 0
      %v1410 = vsel %vm1260, %v1394, 0
      %vm1412 = vcmask 1043456
      %v1414 = vsel %vm1412, %v1404, 0
      %1416 = vmatprep.subr.bf16.mxu0 0
      %1417 = vmatpush1.bf16.msra.mxu0 0
      %1418 = vmatprep.subr.bf16.mxu0 0
      %1419 = vmatpush1.bf16.msra.mxu0 0
      %1420 = vmatprep.subr.bf16.mxu0 0
      %1421 = vmatpush1.bf16.msra.mxu0 0
      %1422 = vmatprep.subr.bf16.mxu0 0
      %1423 = vmatpush1.bf16.msra.mxu0 0
      %1424 = vmatprep.subr.bf16.mxu0 0
      %1425 = vmatpush1.bf16.msra.mxu0 0
      %1426 = vmatprep.subr.bf16.mxu0 0
      %1427 = vmatpush1.bf16.msra.mxu0 0
      %1428 = vmatprep.subr.bf16.mxu0 0
      %1429 = vmatpush1.bf16.msra.mxu0 %v1414
      %1430 = vmatprep.subr.bf16.mxu0 0
      %1431 = vmatpush1.bf16.msra.mxu0 %v1402
      %1432 = vmatprep.subr.bf16.mxu0 0
      %1433 = vmatpush2.bf16.msra.mxu0 0
      %1434 = vmatprep.subr.bf16.mxu0 0
      %1435 = vmatpush2.bf16.msra.mxu0 0
      %1436 = vmatprep.subr.bf16.mxu0 0
      %1437 = vmatpush2.bf16.msra.mxu0 0
      %1438 = vmatprep.subr.bf16.mxu0 0
      %1439 = vmatpush2.bf16.msra.mxu0 0
      %1440 = vmatprep.subr.bf16.mxu0 0
      %1441 = vmatpush2.bf16.msra.mxu0 0
      %1442 = vmatprep.subr.bf16.mxu0 0
      %1443 = vmatpush2.bf16.msra.mxu0 0
      %1444 = vmatprep.subr.bf16.mxu0 0
      %1445 = vmatpush2.bf16.msra.mxu0 0
      %1446 = vmatprep.subr.bf16.mxu0 0
      %1447 = vmatpush2.bf16.msra.mxu0 0
      %1448 = vmatprep.mubr.bf16.mxu0 0
      %1449 = vmatmul.mubr.bf16.gmra.mxu0 %v1407
      %v1450 = vpop.f32.mrf.mxu0
      %v1451 = vadd.f32 0.0, %v1450
      %v1452 = vpop.f32.mrf.mxu0
      %v1453 = vpop.f32.mrf.mxu0
      %v1454 = vadd.f32 0.0, %v1453
      %v1455 = vpop.f32.mrf.mxu0
      %1456 = vmatprep.mubr.bf16.mxu0 0
      %1457 = vmatmul.mubr.bf16.gmra.mxu0 %v1410
      %v1458 = vpop.f32.mrf.mxu0
      %v1459 = vadd.f32 0.0, %v1458
      %v1460 = vpop.f32.mrf.mxu0
      %v1461 = vpop.f32.mrf.mxu0
      %v1462 = vpop.f32.mrf.mxu0
      %1463 = vdwg.mxu0
      %1464 = vrot.lane.b32.xlu0 %v989, 64
      %v1465 = vpop.permute.xlu0 %1464
      %1466 = vrot.lane.b32.xlu0 %v990, 64
      %v1467 = vpop.permute.xlu0 %1466
      %v1470 = vsel %vm1260, %v1395, 0
      %v1473 = vsel %vm1260, %v1396, 0
      %v1476 = vsel %vm1412, %v1467, 0
      %1478 = vmatprep.subr.bf16.mxu0 0
      %1479 = vmatpush1.bf16.msra.mxu0 0
      %1480 = vmatprep.subr.bf16.mxu0 0
      %1481 = vmatpush1.bf16.msra.mxu0 0
      %1482 = vmatprep.subr.bf16.mxu0 0
      %1483 = vmatpush1.bf16.msra.mxu0 0
      %1484 = vmatprep.subr.bf16.mxu0 0
      %1485 = vmatpush1.bf16.msra.mxu0 0
      %1486 = vmatprep.subr.bf16.mxu0 0
      %1487 = vmatpush1.bf16.msra.mxu0 0
      %1488 = vmatprep.subr.bf16.mxu0 0
      %1489 = vmatpush1.bf16.msra.mxu0 0
      %1490 = vmatprep.subr.bf16.mxu0 0
      %1491 = vmatpush1.bf16.msra.mxu0 %v1476
      %1492 = vmatprep.subr.bf16.mxu0 0
      %1493 = vmatpush1.bf16.msra.mxu0 %v1465
      %1494 = vmatprep.subr.bf16.mxu0 0
      %1495 = vmatpush2.bf16.msra.mxu0 0
      %1496 = vmatprep.subr.bf16.mxu0 0
      %1497 = vmatpush2.bf16.msra.mxu0 0
      %1498 = vmatprep.subr.bf16.mxu0 0
      %1499 = vmatpush2.bf16.msra.mxu0 0
      %1500 = vmatprep.subr.bf16.mxu0 0
      %1501 = vmatpush2.bf16.msra.mxu0 0
      %1502 = vmatprep.subr.bf16.mxu0 0
      %1503 = vmatpush2.bf16.msra.mxu0 0
      %1504 = vmatprep.subr.bf16.mxu0 0
      %1505 = vmatpush2.bf16.msra.mxu0 0
      %1506 = vmatprep.subr.bf16.mxu0 0
      %1507 = vmatpush2.bf16.msra.mxu0 0
      %1508 = vmatprep.subr.bf16.mxu0 0
      %1509 = vmatpush2.bf16.msra.mxu0 0
      %1510 = vmatprep.mubr.bf16.mxu0 0
      %1511 = vmatmul.mubr.bf16.gmra.mxu0 %v1470
      %v1512 = vpop.f32.mrf.mxu0
      %v1513 = vadd.f32 0.0, %v1512
      %v1514 = vpop.f32.mrf.mxu0
      %v1515 = vpop.f32.mrf.mxu0
      %v1516 = vadd.f32 0.0, %v1515
      %v1517 = vpop.f32.mrf.mxu0
      %1518 = vmatprep.mubr.bf16.mxu0 0
      %1519 = vmatmul.mubr.bf16.gmra.mxu0 %v1473
      %v1520 = vpop.f32.mrf.mxu0
      %v1521 = vadd.f32 0.0, %v1520
      %v1522 = vpop.f32.mrf.mxu0
      %v1523 = vpop.f32.mrf.mxu0
      %v1524 = vpop.f32.mrf.mxu0
      %1525 = vdwg.mxu0
      %1526 = vrot.lane.b32.xlu0 %v991, 64
      %v1527 = vpop.permute.xlu0 %1526
      %1528 = vrot.lane.b32.xlu0 %v992, 64
      %v1529 = vpop.permute.xlu0 %1528
      %v1532 = vsel %vm1260, %v1397, 0
      %v1535 = vsel %vm1260, %v1398, 0
      %v1538 = vsel %vm1412, %v1529, 0
      %1540 = vmatprep.subr.bf16.mxu0 0
      %1541 = vmatpush1.bf16.msra.mxu0 0
      %1542 = vmatprep.subr.bf16.mxu0 0
      %1543 = vmatpush1.bf16.msra.mxu0 0
      %1544 = vmatprep.subr.bf16.mxu0 0
      %1545 = vmatpush1.bf16.msra.mxu0 0
      %1546 = vmatprep.subr.bf16.mxu0 0
      %1547 = vmatpush1.bf16.msra.mxu0 0
      %1548 = vmatprep.subr.bf16.mxu0 0
      %1549 = vmatpush1.bf16.msra.mxu0 0
      %1550 = vmatprep.subr.bf16.mxu0 0
      %1551 = vmatpush1.bf16.msra.mxu0 0
      %1552 = vmatprep.subr.bf16.mxu0 0
      %1553 = vmatpush1.bf16.msra.mxu0 %v1538
      %1554 = vmatprep.subr.bf16.mxu0 0
      %1555 = vmatpush1.bf16.msra.mxu0 %v1527
      %1556 = vmatprep.subr.bf16.mxu0 0
      %1557 = vmatpush2.bf16.msra.mxu0 0
      %1558 = vmatprep.subr.bf16.mxu0 0
      %1559 = vmatpush2.bf16.msra.mxu0 0
      %1560 = vmatprep.subr.bf16.mxu0 0
      %1561 = vmatpush2.bf16.msra.mxu0 0
      %1562 = vmatprep.subr.bf16.mxu0 0
      %1563 = vmatpush2.bf16.msra.mxu0 0
      %1564 = vmatprep.subr.bf16.mxu0 0
      %1565 = vmatpush2.bf16.msra.mxu0 0
      %1566 = vmatprep.subr.bf16.mxu0 0
      %1567 = vmatpush2.bf16.msra.mxu0 0
      %1568 = vmatprep.subr.bf16.mxu0 0
      %1569 = vmatpush2.bf16.msra.mxu0 0
      %1570 = vmatprep.subr.bf16.mxu0 0
      %1571 = vmatpush2.bf16.msra.mxu0 0
      %1572 = vmatprep.mubr.bf16.mxu0 0
      %1573 = vmatmul.mubr.bf16.gmra.mxu0 %v1532
      %v1574 = vpop.f32.mrf.mxu0
      %v1575 = vadd.f32 0.0, %v1574
      %v1576 = vpop.f32.mrf.mxu0
      %v1577 = vpop.f32.mrf.mxu0
      %v1578 = vadd.f32 0.0, %v1577
      %v1579 = vpop.f32.mrf.mxu0
      %1580 = vmatprep.mubr.bf16.mxu0 0
      %1581 = vmatmul.mubr.bf16.gmra.mxu0 %v1535
      %v1582 = vpop.f32.mrf.mxu0
      %v1583 = vadd.f32 0.0, %v1582
      %v1584 = vpop.f32.mrf.mxu0
      %v1585 = vpop.f32.mrf.mxu0
      %v1586 = vpop.f32.mrf.mxu0
      %1587 = vdwg.mxu0
      %1588 = vrot.lane.b32.xlu0 %v993, 64
      %v1589 = vpop.permute.xlu0 %1588
      %1590 = vrot.lane.b32.xlu0 %v994, 64
      %v1591 = vpop.permute.xlu0 %1590
      %v1594 = vsel %vm1260, %v1399, 0
      %v1597 = vsel %vm1260, %v1400, 0
      %v1600 = vsel %vm1412, %v1591, 0
      %1602 = vmatprep.subr.bf16.mxu0 0
      %1603 = vmatpush1.bf16.msra.mxu0 0
      %1604 = vmatprep.subr.bf16.mxu0 0
      %1605 = vmatpush1.bf16.msra.mxu0 0
      %1606 = vmatprep.subr.bf16.mxu0 0
      %1607 = vmatpush1.bf16.msra.mxu0 0
      %1608 = vmatprep.subr.bf16.mxu0 0
      %1609 = vmatpush1.bf16.msra.mxu0 0
      %1610 = vmatprep.subr.bf16.mxu0 0
      %1611 = vmatpush1.bf16.msra.mxu0 0
      %1612 = vmatprep.subr.bf16.mxu0 0
      %1613 = vmatpush1.bf16.msra.mxu0 0
      %1614 = vmatprep.subr.bf16.mxu0 0
      %1615 = vmatpush1.bf16.msra.mxu0 %v1600
      %1616 = vmatprep.subr.bf16.mxu0 0
      %1617 = vmatpush1.bf16.msra.mxu0 %v1589
      %1618 = vmatprep.subr.bf16.mxu0 0
      %1619 = vmatpush2.bf16.msra.mxu0 0
      %1620 = vmatprep.subr.bf16.mxu0 0
      %1621 = vmatpush2.bf16.msra.mxu0 0
      %1622 = vmatprep.subr.bf16.mxu0 0
      %1623 = vmatpush2.bf16.msra.mxu0 0
      %1624 = vmatprep.subr.bf16.mxu0 0
      %1625 = vmatpush2.bf16.msra.mxu0 0
      %1626 = vmatprep.subr.bf16.mxu0 0
      %1627 = vmatpush2.bf16.msra.mxu0 0
      %1628 = vmatprep.subr.bf16.mxu0 0
      %1629 = vmatpush2.bf16.msra.mxu0 0
      %1630 = vmatprep.subr.bf16.mxu0 0
      %1631 = vmatpush2.bf16.msra.mxu0 0
      %1632 = vmatprep.subr.bf16.mxu0 0
      %1633 = vmatpush2.bf16.msra.mxu0 0
      %1634 = vmatprep.mubr.bf16.mxu0 0
      %1635 = vmatmul.mubr.bf16.gmra.mxu0 %v1594
      %v1636 = vpop.f32.mrf.mxu0
      %v1637 = vadd.f32 0.0, %v1636
      %v1638 = vpop.f32.mrf.mxu0
      %v1639 = vpop.f32.mrf.mxu0
      %v1640 = vadd.f32 0.0, %v1639
      %v1641 = vpop.f32.mrf.mxu0
      %1642 = vmatprep.mubr.bf16.mxu0 0
      %1643 = vmatmul.mubr.bf16.gmra.mxu0 %v1597
      %v1644 = vpop.f32.mrf.mxu0
      %v1645 = vadd.f32 0.0, %v1644
      %v1646 = vpop.f32.mrf.mxu0
      %v1647 = vpop.f32.mrf.mxu0
      %v1648 = vpop.f32.mrf.mxu0
      %1649 = vdwg.mxu0
      %1653 = vrot.lane.b32.xlu0 %v1513, 8
      %v1654 = vpop.permute.xlu0 %1653
      %1655 = vrot.lane.b32.xlu0 %v1516, 8
      %v1656 = vpop.permute.xlu0 %1655
      %1657 = vrot.lane.b32.xlu0 %v1521, 8
      %v1658 = vpop.permute.xlu0 %1657
      %1665 = vrot.lane.b32.xlu0 %v1575, 16
      %v1666 = vpop.permute.xlu0 %1665
      %1667 = vrot.lane.b32.xlu0 %v1578, 16
      %v1668 = vpop.permute.xlu0 %1667
      %1669 = vrot.lane.b32.xlu0 %v1583, 16
      %v1670 = vpop.permute.xlu0 %1669
      %1677 = vrot.lane.b32.xlu0 %v1637, 24
      %v1678 = vpop.permute.xlu0 %1677
      %1679 = vrot.lane.b32.xlu0 %v1640, 24
      %v1680 = vpop.permute.xlu0 %1679
      %1681 = vrot.lane.b32.xlu0 %v1645, 24
      %v1682 = vpop.permute.xlu0 %1681
      %v1686 = vsel %vm1001, %v1451, %v1654
      %v1687 = vsel %vm1001, %v1454, %v1656
      %v1688 = vsel %vm1001, %v1459, %v1658
      %vm1689 = vcmask 130048
      %v1690 = vsel %vm1689, %v1686, %v1666
      %v1691 = vsel %vm1689, %v1687, %v1668
      %v1692 = vsel %vm1689, %v1688, %v1670
      %v1693 = vsel %vm1260, %v1690, %v1678
      %v1694 = vsel %vm1260, %v1691, %v1680
      %v1695 = vsel %vm1260, %v1692, %v1682
      %v1696 = vpack.c.bf16 %v1694, %v1693
      %v1697 = vpack.c.bf16 %v1695, %v1695
      %v1699 = vlaneseq
      %v1700 = vshrl.u32 %v1699, 7
      %v1701 = vsub.s32 0, %v1700
      %v1702 = vrot.slane %v779, %v1701
      %v1708 = vunpack.c.l.b16 %v775
      %v1709 = vunpack.c.l.b16 %v776
      %v1710 = vunpack.c.l.b16 %v777
      %v1711 = vunpack.c.l.b16 %v778
      %v1712 = vpack.c.b16 %v1709, %v1708
      %v1713 = vpack.c.b16 %v1711, %v1710
      %v1717 = vsel %vm804, %v1696, 0
      %v1720 = vsel %vm804, %v1697, 0
      %1722 = vmatprep.subr.bf16.mxu0 0
      %1723 = vmatpush1.bf16.msra.mxu0 0
      %1724 = vmatprep.subr.bf16.mxu0 0
      %1725 = vmatpush1.bf16.msra.mxu0 0
      %1726 = vmatprep.subr.bf16.mxu0 0
      %1727 = vmatpush1.bf16.msra.mxu0 0
      %1728 = vmatprep.subr.bf16.mxu0 0
      %1729 = vmatpush1.bf16.msra.mxu0 0
      %1730 = vmatprep.subr.bf16.mxu0 0
      %1731 = vmatpush1.bf16.msra.mxu0 0
      %1732 = vmatprep.subr.bf16.mxu0 0
      %1733 = vmatpush1.bf16.msra.mxu0 0
      %1734 = vmatprep.subr.bf16.mxu0 0
      %1735 = vmatpush1.bf16.msra.mxu0 %v1713
      %1736 = vmatprep.subr.bf16.mxu0 0
      %1737 = vmatpush1.bf16.msra.mxu0 %v1712
      %1738 = vmatprep.subr.bf16.mxu0 0
      %1739 = vmatpush2.bf16.msra.mxu0 0
      %1740 = vmatprep.subr.bf16.mxu0 0
      %1741 = vmatpush2.bf16.msra.mxu0 0
      %1742 = vmatprep.subr.bf16.mxu0 0
      %1743 = vmatpush2.bf16.msra.mxu0 0
      %1744 = vmatprep.subr.bf16.mxu0 0
      %1745 = vmatpush2.bf16.msra.mxu0 0
      %1746 = vmatprep.subr.bf16.mxu0 0
      %1747 = vmatpush2.bf16.msra.mxu0 0
      %1748 = vmatprep.subr.bf16.mxu0 0
      %1749 = vmatpush2.bf16.msra.mxu0 0
      %1750 = vmatprep.subr.bf16.mxu0 0
      %1751 = vmatpush2.bf16.msra.mxu0 0
      %1752 = vmatprep.subr.bf16.mxu0 0
      %1753 = vmatpush2.bf16.msra.mxu0 0
      %1754 = vmatprep.mubr.bf16.mxu0 0
      %1755 = vmatmul.mubr.bf16.gmra.mxu0 %v1717
      %v1756 = vpop.f32.mrf.mxu0
      %v1757 = vadd.f32 %v1702, %v1756
      %v1758 = vpop.f32.mrf.mxu0
      %v1759 = vpop.f32.mrf.mxu0
      %v1760 = vadd.f32 %v1702, %v1759
      %v1761 = vpop.f32.mrf.mxu0
      %1762 = vmatprep.mubr.bf16.mxu0 0
      %1763 = vmatmul.mubr.bf16.gmra.mxu0 %v1720
      %v1764 = vpop.f32.mrf.mxu0
      %v1765 = vadd.f32 %v1702, %v1764
      %v1766 = vpop.f32.mrf.mxu0
      %v1767 = vpop.f32.mrf.mxu0
      %v1768 = vpop.f32.mrf.mxu0
      %1769 = vdwg.mxu0
      %v1770 = vadd.f32 %v765, %v1757
      %v1771 = vadd.f32 %v766, %v1760
      %v1772 = vadd.f32 %v767, %v1765
      %v1773 = vsel %vm804, %v1770, 0.0
      %1774 = vadd.xlane.f32.xlu0 %v1773
      %v1775 = vpop.xlane.xlu0 %1774
      %v1776 = vsel %vm804, %v1771, 0.0
      %1777 = vadd.xlane.f32.xlu0 %v1776
      %v1778 = vpop.xlane.xlu0 %1777
      %v1779 = vsel %vm804, %v1772, 0.0
      %1780 = vadd.xlane.f32.xlu0 %v1779
      %v1781 = vpop.xlane.xlu0 %1780
      %v1782 = vmul.f32 %v1775, %v814
      %v1783 = vmul.f32 %v1778, %v814
      %v1784 = vmul.f32 %v1781, %v814
      %v1785 = vsub.f32 %v1770, %v1782
      %v1786 = vsub.f32 %v1771, %v1783
      %v1787 = vsub.f32 %v1772, %v1784
      %v1788 = vmul.f32 %v1785, %v1785
      %v1789 = vmul.f32 %v1786, %v1786
      %v1790 = vmul.f32 %v1787, %v1787
      %v1791 = vsel %vm804, %v1788, 0.0
      %1792 = vadd.xlane.f32.xlu0 %v1791
      %v1793 = vpop.xlane.xlu0 %1792
      %v1794 = vsel %vm804, %v1789, 0.0
      %1795 = vadd.xlane.f32.xlu0 %v1794
      %v1796 = vpop.xlane.xlu0 %1795
      %v1797 = vsel %vm804, %v1790, 0.0
      %1798 = vadd.xlane.f32.xlu0 %v1797
      %v1799 = vpop.xlane.xlu0 %1798
      %v1800 = vmul.f32 %v1793, %v814
      %v1801 = vmul.f32 %v1796, %v814
      %v1802 = vmul.f32 %v1799, %v814
      %v1803 = vadd.f32 %v1800, 1e-05
      %v1804 = vadd.f32 %v1801, 1e-05
      %v1805 = vadd.f32 %v1802, 1e-05
      %v1806 = vrsqrt.pop %v1803
      %v1807 = vrsqrt.pop %v1804
      %v1808 = vrsqrt.pop %v1805
      %v1809 = vmul.f32 %v1785, %v1806
      %v1810 = vmul.f32 %v1786, %v1807
      %v1811 = vmul.f32 %v1787, %v1808
      %v1813 = vlaneseq
      %v1814 = vshrl.u32 %v1813, 7
      %v1815 = vsub.s32 0, %v1814
      %v1816 = vrot.slane %v780, %v1815
      %v1818 = vmul.f32 %v1809, %v1816
      %v1819 = vmul.f32 %v1810, %v1816
      %v1820 = vmul.f32 %v1811, %v1816
      %v1822 = vlaneseq
      %v1823 = vshrl.u32 %v1822, 7
      %v1824 = vsub.s32 0, %v1823
      %v1825 = vrot.slane %v781, %v1824
      %v1827 = vadd.f32 %v1818, %v1825
      %v1828 = vadd.f32 %v1819, %v1825
      %v1829 = vadd.f32 %v1820, %v1825
      %v1830 = vpack.c.bf16 %v1828, %v1827
      %v1831 = vpack.c.bf16 %v1829, %v1829
      %v1833 = vlaneseq
      %v1834 = vshrl.u32 %v1833, 7
      %v1835 = vsub.s32 0, %v1834
      %v1836 = vrot.slane %v786, %v1835
      %v1842 = vunpack.c.l.b16 %v782
      %v1843 = vunpack.c.l.b16 %v783
      %v1844 = vunpack.c.l.b16 %v784
      %v1845 = vunpack.c.l.b16 %v785
      %v1846 = vpack.c.b16 %v1843, %v1842
      %v1847 = vpack.c.b16 %v1845, %v1844
      %v1851 = vsel %vm804, %v1830, 0
      %v1854 = vsel %vm804, %v1831, 0
      %1856 = vmatprep.subr.bf16.mxu0 0
      %1857 = vmatpush1.bf16.msra.mxu0 0
      %1858 = vmatprep.subr.bf16.mxu0 0
      %1859 = vmatpush1.bf16.msra.mxu0 0
      %1860 = vmatprep.subr.bf16.mxu0 0
      %1861 = vmatpush1.bf16.msra.mxu0 0
      %1862 = vmatprep.subr.bf16.mxu0 0
      %1863 = vmatpush1.bf16.msra.mxu0 0
      %1864 = vmatprep.subr.bf16.mxu0 0
      %1865 = vmatpush1.bf16.msra.mxu0 0
      %1866 = vmatprep.subr.bf16.mxu0 0
      %1867 = vmatpush1.bf16.msra.mxu0 0
      %1868 = vmatprep.subr.bf16.mxu0 0
      %1869 = vmatpush1.bf16.msra.mxu0 %v1847
      %1870 = vmatprep.subr.bf16.mxu0 0
      %1871 = vmatpush1.bf16.msra.mxu0 %v1846
      %1872 = vmatprep.subr.bf16.mxu0 0
      %1873 = vmatpush2.bf16.msra.mxu0 0
      %1874 = vmatprep.subr.bf16.mxu0 0
      %1875 = vmatpush2.bf16.msra.mxu0 0
      %1876 = vmatprep.subr.bf16.mxu0 0
      %1877 = vmatpush2.bf16.msra.mxu0 0
      %1878 = vmatprep.subr.bf16.mxu0 0
      %1879 = vmatpush2.bf16.msra.mxu0 0
      %1880 = vmatprep.subr.bf16.mxu0 0
      %1881 = vmatpush2.bf16.msra.mxu0 0
      %1882 = vmatprep.subr.bf16.mxu0 0
      %1883 = vmatpush2.bf16.msra.mxu0 0
      %1884 = vmatprep.subr.bf16.mxu0 0
      %1885 = vmatpush2.bf16.msra.mxu0 0
      %1886 = vmatprep.subr.bf16.mxu0 0
      %1887 = vmatpush2.bf16.msra.mxu0 0
      %1888 = vmatprep.mubr.bf16.mxu0 0
      %1889 = vmatmul.mubr.bf16.gmra.mxu0 %v1851
      %v1890 = vpop.f32.mrf.mxu0
      %v1891 = vadd.f32 %v1836, %v1890
      %v1892 = vpop.f32.mrf.mxu0
      %v1893 = vpop.f32.mrf.mxu0
      %v1894 = vadd.f32 %v1836, %v1893
      %v1895 = vpop.f32.mrf.mxu0
      %1896 = vmatprep.mubr.bf16.mxu0 0
      %1897 = vmatmul.mubr.bf16.gmra.mxu0 %v1854
      %v1898 = vpop.f32.mrf.mxu0
      %v1899 = vadd.f32 %v1836, %v1898
      %v1900 = vpop.f32.mrf.mxu0
      %v1901 = vpop.f32.mrf.mxu0
      %v1902 = vpop.f32.mrf.mxu0
      %1903 = vdwg.mxu0
      %v1904 = vmul.f32 %v1891, 0.5
      %v1905 = vmul.f32 %v1894, 0.5
      %v1906 = vmul.f32 %v1899, 0.5
      %v1907 = vmul.f32 %v1891, 0.044715
      %v1908 = vmul.f32 %v1894, 0.044715
      %v1909 = vmul.f32 %v1899, 0.044715
      %v1910 = vmul.f32 %v1907, %v1891
      %v1911 = vmul.f32 %v1908, %v1894
      %v1912 = vmul.f32 %v1909, %v1899
      %v1913 = vmul.f32 %v1910, %v1891
      %v1914 = vmul.f32 %v1911, %v1894
      %v1915 = vmul.f32 %v1912, %v1899
      %v1916 = vadd.f32 %v1891, %v1913
      %v1917 = vadd.f32 %v1894, %v1914
      %v1918 = vadd.f32 %v1899, %v1915
      %v1919 = vmul.f32 %v1916, 0.7978846
      %v1920 = vmul.f32 %v1917, 0.7978846
      %v1921 = vmul.f32 %v1918, 0.7978846
      %v1922 = vtanh.pop %v1919
      %v1923 = vtanh.pop %v1920
      %v1924 = vtanh.pop %v1921
      %v1925 = vadd.f32 %v1922, 1.0
      %v1926 = vadd.f32 %v1923, 1.0
      %v1927 = vadd.f32 %v1924, 1.0
      %v1928 = vmul.f32 %v1904, %v1925
      %v1929 = vmul.f32 %v1905, %v1926
      %v1930 = vmul.f32 %v1906, %v1927
      %v1931 = vpack.c.bf16 %v1929, %v1928
      %v1932 = vpack.c.bf16 %v1930, %v1930
      %v1934 = vlaneseq
      %v1935 = vshrl.u32 %v1934, 7
      %v1936 = vsub.s32 0, %v1935
      %v1937 = vrot.slane %v803, %v1936
      %v1955 = vunpack.c.l.b16 %v787
      %v1956 = vunpack.c.l.b16 %v788
      %v1957 = vunpack.c.l.b16 %v789
      %v1958 = vunpack.c.l.b16 %v790
      %v1959 = vunpack.c.l.b16 %v791
      %v1960 = vunpack.c.l.b16 %v792
      %v1961 = vunpack.c.l.b16 %v793
      %v1962 = vunpack.c.l.b16 %v794
      %v1963 = vunpack.c.l.b16 %v795
      %v1964 = vunpack.c.l.b16 %v796
      %v1965 = vunpack.c.l.b16 %v797
      %v1966 = vunpack.c.l.b16 %v798
      %v1967 = vunpack.c.l.b16 %v799
      %v1968 = vunpack.c.l.b16 %v800
      %v1969 = vunpack.c.l.b16 %v801
      %v1970 = vunpack.c.l.b16 %v802
      %v1971 = vpack.c.b16 %v1956, %v1955
      %v1972 = vpack.c.b16 %v1958, %v1957
      %v1973 = vpack.c.b16 %v1960, %v1959
      %v1974 = vpack.c.b16 %v1962, %v1961
      %v1975 = vpack.c.b16 %v1964, %v1963
      %v1976 = vpack.c.b16 %v1966, %v1965
      %v1977 = vpack.c.b16 %v1968, %v1967
      %v1978 = vpack.c.b16 %v1970, %v1969
      %1987 = vmatprep.subr.bf16.mxu0 0
      %1988 = vmatpush1.bf16.msra.mxu0 %v1978
      %1989 = vmatprep.subr.bf16.mxu0 0
      %1990 = vmatpush1.bf16.msra.mxu0 %v1977
      %1991 = vmatprep.subr.bf16.mxu0 0
      %1992 = vmatpush1.bf16.msra.mxu0 %v1976
      %1993 = vmatprep.subr.bf16.mxu0 0
      %1994 = vmatpush1.bf16.msra.mxu0 %v1975
      %1995 = vmatprep.subr.bf16.mxu0 0
      %1996 = vmatpush1.bf16.msra.mxu0 %v1974
      %1997 = vmatprep.subr.bf16.mxu0 0
      %1998 = vmatpush1.bf16.msra.mxu0 %v1973
      %1999 = vmatprep.subr.bf16.mxu0 0
      %2000 = vmatpush1.bf16.msra.mxu0 %v1972
      %2001 = vmatprep.subr.bf16.mxu0 0
      %2002 = vmatpush1.bf16.msra.mxu0 %v1971
      %2003 = vmatprep.subr.bf16.mxu0 0
      %2004 = vmatpush2.bf16.msra.mxu0 0
      %2005 = vmatprep.subr.bf16.mxu0 0
      %2006 = vmatpush2.bf16.msra.mxu0 0
      %2007 = vmatprep.subr.bf16.mxu0 0
      %2008 = vmatpush2.bf16.msra.mxu0 0
      %2009 = vmatprep.subr.bf16.mxu0 0
      %2010 = vmatpush2.bf16.msra.mxu0 0
      %2011 = vmatprep.subr.bf16.mxu0 0
      %2012 = vmatpush2.bf16.msra.mxu0 0
      %2013 = vmatprep.subr.bf16.mxu0 0
      %2014 = vmatpush2.bf16.msra.mxu0 0
      %2015 = vmatprep.subr.bf16.mxu0 0
      %2016 = vmatpush2.bf16.msra.mxu0 0
      %2017 = vmatprep.subr.bf16.mxu0 0
      %2018 = vmatpush2.bf16.msra.mxu0 0
      %2019 = vmatprep.mubr.bf16.mxu0 0
      %2020 = vmatmul.mubr.bf16.gmra.mxu0 %v1931
      %v2021 = vpop.f32.mrf.mxu0
      %v2022 = vadd.f32 %v1937, %v2021
      %v2023 = vpop.f32.mrf.mxu0
      %v2024 = vpop.f32.mrf.mxu0
      %v2025 = vadd.f32 %v1937, %v2024
      %v2026 = vpop.f32.mrf.mxu0
      %2027 = vmatprep.mubr.bf16.mxu0 0
      %2028 = vmatmul.mubr.bf16.gmra.mxu0 %v1932
      %v2029 = vpop.f32.mrf.mxu0
      %v2030 = vadd.f32 %v1937, %v2029
      %v2031 = vpop.f32.mrf.mxu0
      %v2032 = vpop.f32.mrf.mxu0
      %v2033 = vpop.f32.mrf.mxu0
      %2034 = vdwg.mxu0
      %v2035 = vadd.f32 %v1770, %v2022
      %v2036 = vadd.f32 %v1771, %v2025
      %v2037 = vadd.f32 %v1772, %v2030
      %2038 = vst.msk [vmem:[#allocation2] sm:$0xff] %vm804, %v2035
      %2039 = vst.msk [vmem:[#allocation2 + $0x8] sm:$0xff] %vm804, %v2036
      %2040 = vst.msk [vmem:[#allocation2 + $0x10] sm:$0xff] %vm804, %v2037
      %p2041 = scmp.eq.s32.totalorder %s33, 1
      // Predicated region
      $region93: #{forward.2} parent=87 // pred_check
        %p2042 = pneg %p2041
      $region94: #{forward.2} parent=87 // pred_check_branch
        %2044 = sbr.rel (%p2042) target = $region96
      $region95: #{forward.2} parent=87 // pred_region
        %v2045 = vld [vmem:[%s13] sm:$0x1]
        %v2046 = vld [vmem:[%s14] sm:$0x1]
        %v2047 = vld [vmem:[%s15] sm:$0xf]
        %v2048 = vld [vmem:[%s15 + $0x4] sm:$0xf]
        %v2049 = vld [vmem:[%s15 + $0x8] sm:$0xf]
        %v2050 = vld [vmem:[%s15 + $0xc] sm:$0xf]
        %v2051 = vld [vmem:[%s16] sm:$0x1]
        %v2052 = vsel %vm804, %v2035, 0.0
        %2053 = vadd.xlane.f32.xlu0 %v2052
        %v2054 = vpop.xlane.xlu0 %2053
        %v2055 = vsel %vm804, %v2036, 0.0
        %2056 = vadd.xlane.f32.xlu0 %v2055
        %v2057 = vpop.xlane.xlu0 %2056
        %v2058 = vsel %vm804, %v2037, 0.0
        %2059 = vadd.xlane.f32.xlu0 %v2058
        %v2060 = vpop.xlane.xlu0 %2059
        %v2061 = vmul.f32 %v2054, %v814
        %v2062 = vmul.f32 %v2057, %v814
        %v2063 = vmul.f32 %v2060, %v814
        %v2064 = vsub.f32 %v2035, %v2061
        %v2065 = vsub.f32 %v2036, %v2062
        %v2066 = vsub.f32 %v2037, %v2063
        %v2067 = vmul.f32 %v2064, %v2064
        %v2068 = vmul.f32 %v2065, %v2065
        %v2069 = vmul.f32 %v2066, %v2066
        %v2070 = vsel %vm804, %v2067, 0.0
        %2071 = vadd.xlane.f32.xlu0 %v2070
        %v2072 = vpop.xlane.xlu0 %2071
        %v2073 = vsel %vm804, %v2068, 0.0
        %2074 = vadd.xlane.f32.xlu0 %v2073
        %v2075 = vpop.xlane.xlu0 %2074
        %v2076 = vsel %vm804, %v2069, 0.0
        %2077 = vadd.xlane.f32.xlu0 %v2076
        %v2078 = vpop.xlane.xlu0 %2077
        %v2079 = vmul.f32 %v2072, %v814
        %v2080 = vmul.f32 %v2075, %v814
        %v2081 = vmul.f32 %v2078, %v814
        %v2082 = vadd.f32 %v2079, 1e-05
        %v2083 = vadd.f32 %v2080, 1e-05
        %v2084 = vadd.f32 %v2081, 1e-05
        %v2085 = vrsqrt.pop %v2082
        %v2086 = vrsqrt.pop %v2083
        %v2087 = vrsqrt.pop %v2084
        %v2088 = vmul.f32 %v2064, %v2085
        %v2089 = vmul.f32 %v2065, %v2086
        %v2090 = vmul.f32 %v2066, %v2087
        %v2092 = vlaneseq
        %v2093 = vshrl.u32 %v2092, 7
        %v2094 = vsub.s32 0, %v2093
        %v2095 = vrot.slane %v2045, %v2094
        %v2097 = vmul.f32 %v2088, %v2095
        %v2098 = vmul.f32 %v2089, %v2095
        %v2099 = vmul.f32 %v2090, %v2095
        %v2101 = vlaneseq
        %v2102 = vshrl.u32 %v2101, 7
        %v2103 = vsub.s32 0, %v2102
        %v2104 = vrot.slane %v2046, %v2103
        %v2106 = vadd.f32 %v2097, %v2104
        %v2107 = vadd.f32 %v2098, %v2104
        %v2108 = vadd.f32 %v2099, %v2104
        %v2109 = vpack.c.bf16 %v2107, %v2106
        %v2110 = vpack.c.bf16 %v2108, %v2108
        %v2112 = vlaneseq
        %v2113 = vshrl.u32 %v2112, 7
        %v2114 = vsub.s32 0, %v2113
        %v2115 = vrot.slane %v2051, %v2114
        %v2121 = vunpack.c.l.b16 %v2047
        %v2122 = vunpack.c.l.b16 %v2048
        %v2123 = vunpack.c.l.b16 %v2049
        %v2124 = vunpack.c.l.b16 %v2050
        %v2125 = vpack.c.b16 %v2122, %v2121
        %v2126 = vpack.c.b16 %v2124, %v2123
        %v2130 = vsel %vm804, %v2109, 0
        %v2133 = vsel %vm804, %v2110, 0
        %2135 = vmatprep.subr.bf16.mxu0 0
        %2136 = vmatpush1.bf16.msra.mxu0 0
        %2137 = vmatprep.subr.bf16.mxu0 0
        %2138 = vmatpush1.bf16.msra.mxu0 0
        %2139 = vmatprep.subr.bf16.mxu0 0
        %2140 = vmatpush1.bf16.msra.mxu0 0
        %2141 = vmatprep.subr.bf16.mxu0 0
        %2142 = vmatpush1.bf16.msra.mxu0 0
        %2143 = vmatprep.subr.bf16.mxu0 0
        %2144 = vmatpush1.bf16.msra.mxu0 0
        %2145 = vmatprep.subr.bf16.mxu0 0
        %2146 = vmatpush1.bf16.msra.mxu0 0
        %2147 = vmatprep.subr.bf16.mxu0 0
        %2148 = vmatpush1.bf16.msra.mxu0 %v2126
        %2149 = vmatprep.subr.bf16.mxu0 0
        %2150 = vmatpush1.bf16.msra.mxu0 %v2125
        %2151 = vmatprep.subr.bf16.mxu0 0
        %2152 = vmatpush2.bf16.msra.mxu0 0
        %2153 = vmatprep.subr.bf16.mxu0 0
        %2154 = vmatpush2.bf16.msra.mxu0 0
        %2155 = vmatprep.subr.bf16.mxu0 0
        %2156 = vmatpush2.bf16.msra.mxu0 0
        %2157 = vmatprep.subr.bf16.mxu0 0
        %2158 = vmatpush2.bf16.msra.mxu0 0
        %2159 = vmatprep.subr.bf16.mxu0 0
        %2160 = vmatpush2.bf16.msra.mxu0 0
        %2161 = vmatprep.subr.bf16.mxu0 0
        %2162 = vmatpush2.bf16.msra.mxu0 0
        %2163 = vmatprep.subr.bf16.mxu0 0
        %2164 = vmatpush2.bf16.msra.mxu0 0
        %2165 = vmatprep.subr.bf16.mxu0 0
        %2166 = vmatpush2.bf16.msra.mxu0 0
        %2167 = vmatprep.mubr.bf16.mxu0 0
        %2168 = vmatmul.mubr.bf16.gmra.mxu0 %v2130
        %v2169 = vpop.f32.mrf.mxu0
        %v2170 = vadd.f32 %v2115, %v2169
        %v2171 = vpop.f32.mrf.mxu0
        %v2172 = vpop.f32.mrf.mxu0
        %v2173 = vadd.f32 %v2115, %v2172
        %v2174 = vpop.f32.mrf.mxu0
        %2175 = vmatprep.mubr.bf16.mxu0 0
        %2176 = vmatmul.mubr.bf16.gmra.mxu0 %v2133
        %v2177 = vpop.f32.mrf.mxu0
        %v2178 = vadd.f32 %v2115, %v2177
        %v2179 = vpop.f32.mrf.mxu0
        %v2180 = vpop.f32.mrf.mxu0
        %v2181 = vpop.f32.mrf.mxu0
        %2182 = vdwg.mxu0
        %v2183 = vpack.c.bf16 %v2173, %v2170
        %v2184 = vpack.c.bf16 %v2178, %v2178
        %v2187 = vunpack.c.l.b16 %v2183
        %v2188 = vunpack.c.h.b16 %v2183
        %v2189 = vunpack.c.l.b16 %v2184
        %v2190 = vpack.c.b16 %v2187, %v2187
        %v2191 = vpack.c.b16 %v2188, %v2188
        %v2192 = vpack.c.b16 %v2189, %v2189
        %vm2196 = vcmask 125952
        %2197 = vst.msk [vmem:[%s752] sm:$0xf] %vm2196, %v2190
        %2198 = vst.msk [vmem:[%s752 + $0x4] sm:$0xf] %vm2196, %v2191
        %2199 = vst.msk [vmem:[%s752 + $0x8] sm:$0xf] %vm2196, %v2192
      $region96: #{forward.2} parent=87 // pred_fallthru
        _
      %p2200 = scmp.lt.s32.totalorder %s32, 1
      %s2201 = scalar_select %p2200, %s32, 1
      %s2202 = smul.addr %s2201, 3
      %s2203 = smul.addr %s2202, 4
      %s2204 = scalar_lea.vmem %s17, %s2203
      // Predicated region
      $region97: #{forward.2} parent=87 // pred_check
        %p2205 = pneg %p480
      $region98: #{forward.2} parent=87 // pred_check_branch
        %2207 = sbr.rel (%p2205) target = $region100
      $region99: #{forward.2} parent=87 // pred_region
        _
      $region100: #{forward.2} parent=87 // pred_fallthru
        _
    $region88: #{forward.2} parent=5 // pred_fallthru
      _
    %p2208 = scmp.le.s32.totalorder 2, %s23
    // Predicated region
    $region101: #{forward.2} parent=5 // pred_check
      %p2209 = pneg %p2208
    $region102: #{forward.2} parent=5 // pred_check_branch
      %2211 = sbr.rel (%p2209) target = $region104
    $region103: #{forward.2} parent=5 // pred_region
      %s2212 = ssub.s32 %s23, 2
      // Predicated region
      $region105: #{forward.2} parent=103 // pred_check
        %p2213 = pneg %p486
      $region106: #{forward.2} parent=103 // pred_check_branch
        %2215 = sbr.rel (%p2213) target = $region108
      $region107: #{forward.2} parent=103 // pred_region
        %p2216 = scmp.lt.s32.totalorder %s34, 1
        %s2217 = scalar_select %p2216, %s34, 1
        %s2218 = smul.addr %s2217, 3
        %s2219 = smul.addr %s2218, 4
        %s2220 = scalar_lea.vmem %s17, %s2219
      $region108: #{forward.2} parent=103 // pred_fallthru
        _
    $region104: #{forward.2} parent=5 // pred_fallthru
      _
  $region6: #{forward.2} parent=0 // loop_footer
    %s27 = sadd.s32 1, %s23
  $region7: #{forward.2} parent=0 // loop_footer_branch
    %22 = sbr.rel target = $region3
  $region8: #{forward.2} parent=0 // loop_exit
    _

// kernel: forward.3
$region0: #{forward.3}
  #allocation0 [shape = 'u32[]', space=smem, size = 0x4, offset = 0x4, fixed_abs, tag = 'smem constant byte address 0x4 - core index']
  #allocation1 [shape = 'u32[144,128]{1,0:T(1,128)}', space=vmem, size = 0x12000, scoped, tag = 'internal scratch']
  #allocation2 [shape = 'f32[32,16]{1,0:T(8,128)}', space=vmem, size = 0x4000, scoped, tag = 'scratch operand']
  %s0 = inlined_call_operand.vmem [shape: f32[2,32,16], index: 0, kind: input, shape index: {}]
  %s1 = inlined_call_operand.vmem [shape: f32[2,32,32], index: 1, kind: input, shape index: {}]
  %s2 = inlined_call_operand.vmem [shape: f32[2,1,32], index: 2, kind: input, shape index: {}]
  %s3 = inlined_call_operand.vmem [shape: f32[1,1,16], index: 3, kind: input, shape index: {}]
  %s4 = inlined_call_operand.vmem [shape: f32[1,1,16], index: 4, kind: input, shape index: {}]
  %s5 = inlined_call_operand.vmem [shape: bf16[1,16,48], index: 5, kind: input, shape index: {}]
  %s6 = inlined_call_operand.vmem [shape: f32[1,1,48], index: 6, kind: input, shape index: {}]
  %s7 = inlined_call_operand.vmem [shape: bf16[1,16,16], index: 7, kind: input, shape index: {}]
  %s8 = inlined_call_operand.vmem [shape: f32[1,1,16], index: 8, kind: input, shape index: {}]
  %s9 = inlined_call_operand.vmem [shape: f32[1,1,16], index: 9, kind: input, shape index: {}]
  %s10 = inlined_call_operand.vmem [shape: f32[1,1,16], index: 10, kind: input, shape index: {}]
  %s11 = inlined_call_operand.vmem [shape: bf16[1,16,64], index: 11, kind: input, shape index: {}]
  %s12 = inlined_call_operand.vmem [shape: f32[1,1,64], index: 12, kind: input, shape index: {}]
  %s13 = inlined_call_operand.vmem [shape: bf16[1,64,16], index: 13, kind: input, shape index: {}]
  %s14 = inlined_call_operand.vmem [shape: f32[1,1,16], index: 14, kind: input, shape index: {}]
  %s15 = inlined_call_operand.vmem [shape: f32[1,16], index: 15, kind: input, shape index: {}]
  %s16 = inlined_call_operand.vmem [shape: f32[1,16], index: 16, kind: input, shape index: {}]
  %s17 = inlined_call_operand.vmem [shape: bf16[16,32], index: 17, kind: input, shape index: {}]
  %s18 = inlined_call_operand.vmem [shape: f32[1,32], index: 18, kind: input, shape index: {}]
  %s19 = inlined_call_operand.hbm [shape: f32[2,32,32], index: 19, kind: output, shape index: {0}]
  %s20 = inlined_call_operand.vmem [shape: f32[2,1,1], index: 20, kind: output, shape index: {1}]
  %s21 = inlined_call_operand.vmem [shape: f32[2,1,1], index: 21, kind: output, shape index: {2}]
  %22 = xla_tuple %s19, %s20, %s21
  %s23 = sld [smem:[#allocation0]]
  $region133: #{forward.3} parent=0
    _
  %s25 = ssub.s32 1, %s23
  %s26 = scalar_select 0, %s25, %s23
  $region1: #{forward.3} parent=0
    #allocation3 [shape = 'u8[32768]{0}', space=vmem, size = 0x8000, scoped, tag = 'output window, operand 0']
    #allocation4 [shape = 's32[2]{0}', space=sflag, size = 0x8, scoped, tag = 'scoped memory for forward.3']
    %27 = vsyncpa [#allocation4], 0
    %s28 = scalar_lea.sflag [#allocation4], 1
    %29 = vsyncpa %s28, 0
    loop: start=0, step=1, limit=4
    $region2: #{forward.3} parent=1 // loop_pre_header
      _
    $region3: #{forward.3} parent=1 // loop_header
      %s31 = sphi 0, %s35
      %p32 = scmp.ge.s32.totalorder %s31, 4
      %s38 = sphi 0, %s50
      %s39 = sphi 0, %s46
      %s40 = sphi 0, %s38
      %s41 = sphi 0, %s39
      %s42 = sphi 0, %s40
      %s43 = sphi 0, %s41
      %s53 = sphi 0, %s55
      %s56 = sphi 0, %s53
      %s57 = sphi 0, %s56
      %s73 = sphi 0, %s57
      %s79 = sphi 0, %s81
      %s82 = sphi 0, %s79
      %s83 = sphi 0, %s82
      %s99 = sphi 0, %s83
      %s105 = sphi 0, %s107
      %s108 = sphi 0, %s105
      %s109 = sphi 0, %s108
      %s125 = sphi 0, %s109
      %s131 = sphi 0, %s133
      %s134 = sphi 0, %s131
      %s135 = sphi 0, %s134
      %s151 = sphi 0, %s135
      %s157 = sphi 0, %s159
      %s160 = sphi 0, %s157
      %s161 = sphi 0, %s160
      %s177 = sphi 0, %s161
      %s183 = sphi 0, %s185
      %s186 = sphi 0, %s183
      %s187 = sphi 0, %s186
      %s203 = sphi 0, %s187
      %s209 = sphi 0, %s211
      %s212 = sphi 0, %s209
      %s213 = sphi 0, %s212
      %s229 = sphi 0, %s213
      %s235 = sphi 0, %s237
      %s238 = sphi 0, %s235
      %s239 = sphi 0, %s238
      %s255 = sphi 0, %s239
      %s261 = sphi 0, %s263
      %s264 = sphi 0, %s261
      %s265 = sphi 0, %s264
      %s281 = sphi 0, %s265
      %s287 = sphi 0, %s289
      %s290 = sphi 0, %s287
      %s291 = sphi 0, %s290
      %s307 = sphi 0, %s291
      %s313 = sphi 0, %s315
      %s316 = sphi 0, %s313
      %s317 = sphi 0, %s316
      %s333 = sphi 0, %s317
      %s339 = sphi 0, %s341
      %s342 = sphi 0, %s339
      %s343 = sphi 0, %s342
      %s359 = sphi 0, %s343
      %s365 = sphi 0, %s367
      %s368 = sphi 0, %s365
      %s369 = sphi 0, %s368
      %s385 = sphi 0, %s369
      %s391 = sphi 0, %s393
      %s394 = sphi 0, %s391
      %s395 = sphi 0, %s394
      %s411 = sphi 0, %s395
      %s417 = sphi 0, %s419
      %s420 = sphi 0, %s417
      %s421 = sphi 0, %s420
      %s437 = sphi 0, %s421
      %s441 = sphi 0, %s441
      %s443 = sphi 0, %s441
      %s444 = sphi 0, %s443
      %s458 = sphi 0, %s444
      %s462 = sphi 0, %s462
      %s464 = sphi 0, %s462
      %s465 = sphi 0, %s464
      %s479 = sphi 0, %s465
      %s483 = sphi 0, %s483
      %s485 = sphi 0, %s483
      %s486 = sphi 0, %s485
      %s500 = sphi 0, %s486
      %s504 = sphi 0, %s504
      %s506 = sphi 0, %s504
      %s507 = sphi 0, %s506
      %s521 = sphi 0, %s507
      %s527 = sphi 0, %s529
      %s530 = sphi 0, %s527
      %s531 = sphi 0, %s530
      %s547 = sphi 0, %s531
      %s553 = sphi 0, %s555
      %s556 = sphi 0, %s553
      %s557 = sphi 0, %s556
      %s573 = sphi 0, %s557
      %s579 = sphi 0, %s581
      %s582 = sphi 0, %s579
      %s583 = sphi 0, %s582
      %s599 = sphi 0, %s583
    $region4: #{forward.3} parent=1 // loop_header_branch
      %34 = sbr.rel (%p32) target = $region8
    $region5: #{forward.3} parent=1 // loop_body
      %s36 = ssub.s32 %s31, 1
      %s37 = ssub.s32 %s31, 2
      %s44 = sadd.s32 1, %s39
      %p45 = scmp.ge.s32.totalorder %s44, 1
      %s46 = scalar_select %p45, 0, %s44
      %s47 = sadd.s32 1, %s38
      %s48 = scalar_select %p45, %s47, %s38
      %p49 = scmp.ge.s32.totalorder %s48, 2
      %s50 = scalar_select %p49, 0, %s48
      %s51 = ssub.s32 %s38, %s50
      %p52 = scmp.eq.s32.totalorder %s51, 0
      %s54 = sadd.s32 %s53, 1
      %s55 = scalar_select %p52, %s53, %s54
      %p58 = pneg %p52
      %p59 = scmp.eq.s32.totalorder %s31, 1
      %p60 = por %p58, %p59
      %p61 = scmp.ne.s32.totalorder %s53, %s56
      %p62 = scmp.eq.s32.totalorder %s31, 0
      %p63 = por %p61, %p62
      %p64 = scmp.ne.s32.totalorder %s53, %s56
      %p65 = scmp.eq.s32.totalorder %s36, 1
      %p66 = por %p64, %p65
      %p67 = scmp.ne.s32.totalorder %s56, %s57
      %p68 = scmp.eq.s32.totalorder %s36, 0
      %p69 = por %p67, %p68
      %p70 = scmp.ne.s32.totalorder %s56, %s57
      %p71 = scmp.eq.s32.totalorder %s37, 1
      %p72 = por %p70, %p71
      %p74 = scmp.ne.s32.totalorder %s57, %s73
      %p75 = scmp.eq.s32.totalorder %s37, 0
      %p76 = por %p74, %p75
      %s77 = ssub.s32 %s38, %s50
      %p78 = scmp.eq.s32.totalorder %s77, 0
      %s80 = sadd.s32 %s79, 1
      %s81 = scalar_select %p78, %s79, %s80
      %p84 = pneg %p78
      %p85 = scmp.eq.s32.totalorder %s31, 1
      %p86 = por %p84, %p85
      %p87 = scmp.ne.s32.totalorder %s79, %s82
      %p88 = scmp.eq.s32.totalorder %s31, 0
      %p89 = por %p87, %p88
      %p90 = scmp.ne.s32.totalorder %s79, %s82
      %p91 = scmp.eq.s32.totalorder %s36, 1
      %p92 = por %p90, %p91
      %p93 = scmp.ne.s32.totalorder %s82, %s83
      %p94 = scmp.eq.s32.totalorder %s36, 0
      %p95 = por %p93, %p94
      %p96 = scmp.ne.s32.totalorder %s82, %s83
      %p97 = scmp.eq.s32.totalorder %s37, 1
      %p98 = por %p96, %p97
      %p100 = scmp.ne.s32.totalorder %s83, %s99
      %p101 = scmp.eq.s32.totalorder %s37, 0
      %p102 = por %p100, %p101
      %s103 = ssub.s32 %s38, %s50
      %p104 = scmp.eq.s32.totalorder %s103, 0
      %s106 = sadd.s32 %s105, 1
      %s107 = scalar_select %p104, %s105, %s106
      %p110 = pneg %p104
      %p111 = scmp.eq.s32.totalorder %s31, 1
      %p112 = por %p110, %p111
      %p113 = scmp.ne.s32.totalorder %s105, %s108
      %p114 = scmp.eq.s32.totalorder %s31, 0
      %p115 = por %p113, %p114
      %p116 = scmp.ne.s32.totalorder %s105, %s108
      %p117 = scmp.eq.s32.totalorder %s36, 1
      %p118 = por %p116, %p117
      %p119 = scmp.ne.s32.totalorder %s108, %s109
      %p120 = scmp.eq.s32.totalorder %s36, 0
      %p121 = por %p119, %p120
      %p122 = scmp.ne.s32.totalorder %s108, %s109
      %p123 = scmp.eq.s32.totalorder %s37, 1
      %p124 = por %p122, %p123
      %p126 = scmp.ne.s32.totalorder %s109, %s125
      %p127 = scmp.eq.s32.totalorder %s37, 0
      %p128 = por %p126, %p127
      %s129 = ssub.s32 %s39, %s46
      %p130 = scmp.eq.s32.totalorder %s129, 0
      %s132 = sadd.s32 %s131, 1
      %s133 = scalar_select %p130, %s131, %s132
      %p136 = pneg %p130
      %p137 = scmp.eq.s32.totalorder %s31, 1
      %p138 = por %p136, %p137
      %p139 = scmp.ne.s32.totalorder %s131, %s134
      %p140 = scmp.eq.s32.totalorder %s31, 0
      %p141 = por %p139, %p140
      %p142 = scmp.ne.s32.totalorder %s131, %s134
      %p143 = scmp.eq.s32.totalorder %s36, 1
      %p144 = por %p142, %p143
      %p145 = scmp.ne.s32.totalorder %s134, %s135
      %p146 = scmp.eq.s32.totalorder %s36, 0
      %p147 = por %p145, %p146
      %p148 = scmp.ne.s32.totalorder %s134, %s135
      %p149 = scmp.eq.s32.totalorder %s37, 1
      %p150 = por %p148, %p149
      %p152 = scmp.ne.s32.totalorder %s135, %s151
      %p153 = scmp.eq.s32.totalorder %s37, 0
      %p154 = por %p152, %p153
      %s155 = ssub.s32 %s39, %s46
      %p156 = scmp.eq.s32.totalorder %s155, 0
      %s158 = sadd.s32 %s157, 1
      %s159 = scalar_select %p156, %s157, %s158
      %p162 = pneg %p156
      %p163 = scmp.eq.s32.totalorder %s31, 1
      %p164 = por %p162, %p163
      %p165 = scmp.ne.s32.totalorder %s157, %s160
      %p166 = scmp.eq.s32.totalorder %s31, 0
      %p167 = por %p165, %p166
      %p168 = scmp.ne.s32.totalorder %s157, %s160
      %p169 = scmp.eq.s32.totalorder %s36, 1
      %p170 = por %p168, %p169
      %p171 = scmp.ne.s32.totalorder %s160, %s161
      %p172 = scmp.eq.s32.totalorder %s36, 0
      %p173 = por %p171, %p172
      %p174 = scmp.ne.s32.totalorder %s160, %s161
      %p175 = scmp.eq.s32.totalorder %s37, 1
      %p176 = por %p174, %p175
      %p178 = scmp.ne.s32.totalorder %s161, %s177
      %p179 = scmp.eq.s32.totalorder %s37, 0
      %p180 = por %p178, %p179
      %s181 = ssub.s32 %s39, %s46
      %p182 = scmp.eq.s32.totalorder %s181, 0
      %s184 = sadd.s32 %s183, 1
      %s185 = scalar_select %p182, %s183, %s184
      %p188 = pneg %p182
      %p189 = scmp.eq.s32.totalorder %s31, 1
      %p190 = por %p188, %p189
      %p191 = scmp.ne.s32.totalorder %s183, %s186
      %p192 = scmp.eq.s32.totalorder %s31, 0
      %p193 = por %p191, %p192
      %p194 = scmp.ne.s32.totalorder %s183, %s186
      %p195 = scmp.eq.s32.totalorder %s36, 1
      %p196 = por %p194, %p195
      %p197 = scmp.ne.s32.totalorder %s186, %s187
      %p198 = scmp.eq.s32.totalorder %s36, 0
      %p199 = por %p197, %p198
      %p200 = scmp.ne.s32.totalorder %s186, %s187
      %p201 = scmp.eq.s32.totalorder %s37, 1
      %p202 = por %p200, %p201
      %p204 = scmp.ne.s32.totalorder %s187, %s203
      %p205 = scmp.eq.s32.totalorder %s37, 0
      %p206 = por %p204, %p205
      %s207 = ssub.s32 %s39, %s46
      %p208 = scmp.eq.s32.totalorder %s207, 0
      %s210 = sadd.s32 %s209, 1
      %s211 = scalar_select %p208, %s209, %s210
      %p214 = pneg %p208
      %p215 = scmp.eq.s32.totalorder %s31, 1
      %p216 = por %p214, %p215
      %p217 = scmp.ne.s32.totalorder %s209, %s212
      %p218 = scmp.eq.s32.totalorder %s31, 0
      %p219 = por %p217, %p218
      %p220 = scmp.ne.s32.totalorder %s209, %s212
      %p221 = scmp.eq.s32.totalorder %s36, 1
      %p222 = por %p220, %p221
      %p223 = scmp.ne.s32.totalorder %s212, %s213
      %p224 = scmp.eq.s32.totalorder %s36, 0
      %p225 = por %p223, %p224
      %p226 = scmp.ne.s32.totalorder %s212, %s213
      %p227 = scmp.eq.s32.totalorder %s37, 1
      %p228 = por %p226, %p227
      %p230 = scmp.ne.s32.totalorder %s213, %s229
      %p231 = scmp.eq.s32.totalorder %s37, 0
      %p232 = por %p230, %p231
      %s233 = ssub.s32 %s39, %s46
      %p234 = scmp.eq.s32.totalorder %s233, 0
      %s236 = sadd.s32 %s235, 1
      %s237 = scalar_select %p234, %s235, %s236
      %p240 = pneg %p234
      %p241 = scmp.eq.s32.totalorder %s31, 1
      %p242 = por %p240, %p241
      %p243 = scmp.ne.s32.totalorder %s235, %s238
      %p244 = scmp.eq.s32.totalorder %s31, 0
      %p245 = por %p243, %p244
      %p246 = scmp.ne.s32.totalorder %s235, %s238
      %p247 = scmp.eq.s32.totalorder %s36, 1
      %p248 = por %p246, %p247
      %p249 = scmp.ne.s32.totalorder %s238, %s239
      %p250 = scmp.eq.s32.totalorder %s36, 0
      %p251 = por %p249, %p250
      %p252 = scmp.ne.s32.totalorder %s238, %s239
      %p253 = scmp.eq.s32.totalorder %s37, 1
      %p254 = por %p252, %p253
      %p256 = scmp.ne.s32.totalorder %s239, %s255
      %p257 = scmp.eq.s32.totalorder %s37, 0
      %p258 = por %p256, %p257
      %s259 = ssub.s32 %s39, %s46
      %p260 = scmp.eq.s32.totalorder %s259, 0
      %s262 = sadd.s32 %s261, 1
      %s263 = scalar_select %p260, %s261, %s262
      %p266 = pneg %p260
      %p267 = scmp.eq.s32.totalorder %s31, 1
      %p268 = por %p266, %p267
      %p269 = scmp.ne.s32.totalorder %s261, %s264
      %p270 = scmp.eq.s32.totalorder %s31, 0
      %p271 = por %p269, %p270
      %p272 = scmp.ne.s32.totalorder %s261, %s264
      %p273 = scmp.eq.s32.totalorder %s36, 1
      %p274 = por %p272, %p273
      %p275 = scmp.ne.s32.totalorder %s264, %s265
      %p276 = scmp.eq.s32.totalorder %s36, 0
      %p277 = por %p275, %p276
      %p278 = scmp.ne.s32.totalorder %s264, %s265
      %p279 = scmp.eq.s32.totalorder %s37, 1
      %p280 = por %p278, %p279
      %p282 = scmp.ne.s32.totalorder %s265, %s281
      %p283 = scmp.eq.s32.totalorder %s37, 0
      %p284 = por %p282, %p283
      %s285 = ssub.s32 %s39, %s46
      %p286 = scmp.eq.s32.totalorder %s285, 0
      %s288 = sadd.s32 %s287, 1
      %s289 = scalar_select %p286, %s287, %s288
      %p292 = pneg %p286
      %p293 = scmp.eq.s32.totalorder %s31, 1
      %p294 = por %p292, %p293
      %p295 = scmp.ne.s32.totalorder %s287, %s290
      %p296 = scmp.eq.s32.totalorder %s31, 0
      %p297 = por %p295, %p296
      %p298 = scmp.ne.s32.totalorder %s287, %s290
      %p299 = scmp.eq.s32.totalorder %s36, 1
      %p300 = por %p298, %p299
      %p301 = scmp.ne.s32.totalorder %s290, %s291
      %p302 = scmp.eq.s32.totalorder %s36, 0
      %p303 = por %p301, %p302
      %p304 = scmp.ne.s32.totalorder %s290, %s291
      %p305 = scmp.eq.s32.totalorder %s37, 1
      %p306 = por %p304, %p305
      %p308 = scmp.ne.s32.totalorder %s291, %s307
      %p309 = scmp.eq.s32.totalorder %s37, 0
      %p310 = por %p308, %p309
      %s311 = ssub.s32 %s39, %s46
      %p312 = scmp.eq.s32.totalorder %s311, 0
      %s314 = sadd.s32 %s313, 1
      %s315 = scalar_select %p312, %s313, %s314
      %p318 = pneg %p312
      %p319 = scmp.eq.s32.totalorder %s31, 1
      %p320 = por %p318, %p319
      %p321 = scmp.ne.s32.totalorder %s313, %s316
      %p322 = scmp.eq.s32.totalorder %s31, 0
      %p323 = por %p321, %p322
      %p324 = scmp.ne.s32.totalorder %s313, %s316
      %p325 = scmp.eq.s32.totalorder %s36, 1
      %p326 = por %p324, %p325
      %p327 = scmp.ne.s32.totalorder %s316, %s317
      %p328 = scmp.eq.s32.totalorder %s36, 0
      %p329 = por %p327, %p328
      %p330 = scmp.ne.s32.totalorder %s316, %s317
      %p331 = scmp.eq.s32.totalorder %s37, 1
      %p332 = por %p330, %p331
      %p334 = scmp.ne.s32.totalorder %s317, %s333
      %p335 = scmp.eq.s32.totalorder %s37, 0
      %p336 = por %p334, %p335
      %s337 = ssub.s32 %s39, %s46
      %p338 = scmp.eq.s32.totalorder %s337, 0
      %s340 = sadd.s32 %s339, 1
      %s341 = scalar_select %p338, %s339, %s340
      %p344 = pneg %p338
      %p345 = scmp.eq.s32.totalorder %s31, 1
      %p346 = por %p344, %p345
      %p347 = scmp.ne.s32.totalorder %s339, %s342
      %p348 = scmp.eq.s32.totalorder %s31, 0
      %p349 = por %p347, %p348
      %p350 = scmp.ne.s32.totalorder %s339, %s342
      %p351 = scmp.eq.s32.totalorder %s36, 1
      %p352 = por %p350, %p351
      %p353 = scmp.ne.s32.totalorder %s342, %s343
      %p354 = scmp.eq.s32.totalorder %s36, 0
      %p355 = por %p353, %p354
      %p356 = scmp.ne.s32.totalorder %s342, %s343
      %p357 = scmp.eq.s32.totalorder %s37, 1
      %p358 = por %p356, %p357
      %p360 = scmp.ne.s32.totalorder %s343, %s359
      %p361 = scmp.eq.s32.totalorder %s37, 0
      %p362 = por %p360, %p361
      %s363 = ssub.s32 %s39, %s46
      %p364 = scmp.eq.s32.totalorder %s363, 0
      %s366 = sadd.s32 %s365, 1
      %s367 = scalar_select %p364, %s365, %s366
      %p370 = pneg %p364
      %p371 = scmp.eq.s32.totalorder %s31, 1
      %p372 = por %p370, %p371
      %p373 = scmp.ne.s32.totalorder %s365, %s368
      %p374 = scmp.eq.s32.totalorder %s31, 0
      %p375 = por %p373, %p374
      %p376 = scmp.ne.s32.totalorder %s365, %s368
      %p377 = scmp.eq.s32.totalorder %s36, 1
      %p378 = por %p376, %p377
      %p379 = scmp.ne.s32.totalorder %s368, %s369
      %p380 = scmp.eq.s32.totalorder %s36, 0
      %p381 = por %p379, %p380
      %p382 = scmp.ne.s32.totalorder %s368, %s369
      %p383 = scmp.eq.s32.totalorder %s37, 1
      %p384 = por %p382, %p383
      %p386 = scmp.ne.s32.totalorder %s369, %s385
      %p387 = scmp.eq.s32.totalorder %s37, 0
      %p388 = por %p386, %p387
      %s389 = ssub.s32 %s39, %s46
      %p390 = scmp.eq.s32.totalorder %s389, 0
      %s392 = sadd.s32 %s391, 1
      %s393 = scalar_select %p390, %s391, %s392
      %p396 = pneg %p390
      %p397 = scmp.eq.s32.totalorder %s31, 1
      %p398 = por %p396, %p397
      %p399 = scmp.ne.s32.totalorder %s391, %s394
      %p400 = scmp.eq.s32.totalorder %s31, 0
      %p401 = por %p399, %p400
      %p402 = scmp.ne.s32.totalorder %s391, %s394
      %p403 = scmp.eq.s32.totalorder %s36, 1
      %p404 = por %p402, %p403
      %p405 = scmp.ne.s32.totalorder %s394, %s395
      %p406 = scmp.eq.s32.totalorder %s36, 0
      %p407 = por %p405, %p406
      %p408 = scmp.ne.s32.totalorder %s394, %s395
      %p409 = scmp.eq.s32.totalorder %s37, 1
      %p410 = por %p408, %p409
      %p412 = scmp.ne.s32.totalorder %s395, %s411
      %p413 = scmp.eq.s32.totalorder %s37, 0
      %p414 = por %p412, %p413
      %s415 = ssub.s32 %s39, %s46
      %p416 = scmp.eq.s32.totalorder %s415, 0
      %s418 = sadd.s32 %s417, 1
      %s419 = scalar_select %p416, %s417, %s418
      %p422 = pneg %p416
      %p423 = scmp.eq.s32.totalorder %s31, 1
      %p424 = por %p422, %p423
      %p425 = scmp.ne.s32.totalorder %s417, %s420
      %p426 = scmp.eq.s32.totalorder %s31, 0
      %p427 = por %p425, %p426
      %p428 = scmp.ne.s32.totalorder %s417, %s420
      %p429 = scmp.eq.s32.totalorder %s36, 1
      %p430 = por %p428, %p429
      %p431 = scmp.ne.s32.totalorder %s420, %s421
      %p432 = scmp.eq.s32.totalorder %s36, 0
      %p433 = por %p431, %p432
      %p434 = scmp.ne.s32.totalorder %s420, %s421
      %p435 = scmp.eq.s32.totalorder %s37, 1
      %p436 = por %p434, %p435
      %p438 = scmp.ne.s32.totalorder %s421, %s437
      %p439 = scmp.eq.s32.totalorder %s37, 0
      %p440 = por %p438, %p439
      %s442 = sadd.s32 %s441, 1
      %p445 = scmp.eq.s32.totalorder %s31, 1
      %p446 = scmp.ne.s32.totalorder %s441, %s443
      %p447 = scmp.eq.s32.totalorder %s31, 0
      %p448 = por %p446, %p447
      %p449 = scmp.ne.s32.totalorder %s441, %s443
      %p450 = scmp.eq.s32.totalorder %s36, 1
      %p451 = por %p449, %p450
      %p452 = scmp.ne.s32.totalorder %s443, %s444
      %p453 = scmp.eq.s32.totalorder %s36, 0
      %p454 = por %p452, %p453
      %p455 = scmp.ne.s32.totalorder %s443, %s444
      %p456 = scmp.eq.s32.totalorder %s37, 1
      %p457 = por %p455, %p456
      %p459 = scmp.ne.s32.totalorder %s444, %s458
      %p460 = scmp.eq.s32.totalorder %s37, 0
      %p461 = por %p459, %p460
      %s463 = sadd.s32 %s462, 1
      %p466 = scmp.eq.s32.totalorder %s31, 1
      %p467 = scmp.ne.s32.totalorder %s462, %s464
      %p468 = scmp.eq.s32.totalorder %s31, 0
      %p469 = por %p467, %p468
      %p470 = scmp.ne.s32.totalorder %s462, %s464
      %p471 = scmp.eq.s32.totalorder %s36, 1
      %p472 = por %p470, %p471
      %p473 = scmp.ne.s32.totalorder %s464, %s465
      %p474 = scmp.eq.s32.totalorder %s36, 0
      %p475 = por %p473, %p474
      %p476 = scmp.ne.s32.totalorder %s464, %s465
      %p477 = scmp.eq.s32.totalorder %s37, 1
      %p478 = por %p476, %p477
      %p480 = scmp.ne.s32.totalorder %s465, %s479
      %p481 = scmp.eq.s32.totalorder %s37, 0
      %p482 = por %p480, %p481
      %s484 = sadd.s32 %s483, 1
      %p487 = scmp.eq.s32.totalorder %s31, 1
      %p488 = scmp.ne.s32.totalorder %s483, %s485
      %p489 = scmp.eq.s32.totalorder %s31, 0
      %p490 = por %p488, %p489
      %p491 = scmp.ne.s32.totalorder %s483, %s485
      %p492 = scmp.eq.s32.totalorder %s36, 1
      %p493 = por %p491, %p492
      %p494 = scmp.ne.s32.totalorder %s485, %s486
      %p495 = scmp.eq.s32.totalorder %s36, 0
      %p496 = por %p494, %p495
      %p497 = scmp.ne.s32.totalorder %s485, %s486
      %p498 = scmp.eq.s32.totalorder %s37, 1
      %p499 = por %p497, %p498
      %p501 = scmp.ne.s32.totalorder %s486, %s500
      %p502 = scmp.eq.s32.totalorder %s37, 0
      %p503 = por %p501, %p502
      %s505 = sadd.s32 %s504, 1
      %p508 = scmp.eq.s32.totalorder %s31, 1
      %p509 = scmp.ne.s32.totalorder %s504, %s506
      %p510 = scmp.eq.s32.totalorder %s31, 0
      %p511 = por %p509, %p510
      %p512 = scmp.ne.s32.totalorder %s504, %s506
      %p513 = scmp.eq.s32.totalorder %s36, 1
      %p514 = por %p512, %p513
      %p515 = scmp.ne.s32.totalorder %s506, %s507
      %p516 = scmp.eq.s32.totalorder %s36, 0
      %p517 = por %p515, %p516
      %p518 = scmp.ne.s32.totalorder %s506, %s507
      %p519 = scmp.eq.s32.totalorder %s37, 1
      %p520 = por %p518, %p519
      %p522 = scmp.ne.s32.totalorder %s507, %s521
      %p523 = scmp.eq.s32.totalorder %s37, 0
      %p524 = por %p522, %p523
      %s525 = ssub.s32 %s38, %s50
      %p526 = scmp.eq.s32.totalorder %s525, 0
      %s528 = sadd.s32 %s527, 1
      %s529 = scalar_select %p526, %s527, %s528
      %p532 = pneg %p526
      %p533 = scmp.eq.s32.totalorder %s31, 1
      %p534 = por %p532, %p533
      %p535 = scmp.ne.s32.totalorder %s527, %s530
      %p536 = scmp.eq.s32.totalorder %s31, 0
      %p537 = por %p535, %p536
      %p538 = scmp.ne.s32.totalorder %s527, %s530
      %p539 = scmp.eq.s32.totalorder %s36, 1
      %p540 = por %p538, %p539
      %p541 = scmp.ne.s32.totalorder %s530, %s531
      %p542 = scmp.eq.s32.totalorder %s36, 0
      %p543 = por %p541, %p542
      %p544 = scmp.ne.s32.totalorder %s530, %s531
      %p545 = scmp.eq.s32.totalorder %s37, 1
      %p546 = por %p544, %p545
      %p548 = scmp.ne.s32.totalorder %s531, %s547
      %p549 = scmp.eq.s32.totalorder %s37, 0
      %p550 = por %p548, %p549
      %s551 = ssub.s32 %s38, %s50
      %p552 = scmp.eq.s32.totalorder %s551, 0
      %s554 = sadd.s32 %s553, 1
      %s555 = scalar_select %p552, %s553, %s554
      %p558 = pneg %p552
      %p559 = scmp.eq.s32.totalorder %s31, 1
      %p560 = por %p558, %p559
      %p561 = scmp.ne.s32.totalorder %s553, %s556
      %p562 = scmp.eq.s32.totalorder %s31, 0
      %p563 = por %p561, %p562
      %p564 = scmp.ne.s32.totalorder %s553, %s556
      %p565 = scmp.eq.s32.totalorder %s36, 1
      %p566 = por %p564, %p565
      %p567 = scmp.ne.s32.totalorder %s556, %s557
      %p568 = scmp.eq.s32.totalorder %s36, 0
      %p569 = por %p567, %p568
      %p570 = scmp.ne.s32.totalorder %s556, %s557
      %p571 = scmp.eq.s32.totalorder %s37, 1
      %p572 = por %p570, %p571
      %p574 = scmp.ne.s32.totalorder %s557, %s573
      %p575 = scmp.eq.s32.totalorder %s37, 0
      %p576 = por %p574, %p575
      %s577 = ssub.s32 %s38, %s50
      %p578 = scmp.eq.s32.totalorder %s577, 0
      %s580 = sadd.s32 %s579, 1
      %s581 = scalar_select %p578, %s579, %s580
      %p584 = pneg %p578
      %p585 = scmp.eq.s32.totalorder %s31, 1
      %p586 = por %p584, %p585
      %p587 = scmp.ne.s32.totalorder %s579, %s582
      %p588 = scmp.eq.s32.totalorder %s31, 0
      %p589 = por %p587, %p588
      %p590 = scmp.ne.s32.totalorder %s579, %s582
      %p591 = scmp.eq.s32.totalorder %s36, 1
      %p592 = por %p590, %p591
      %p593 = scmp.ne.s32.totalorder %s582, %s583
      %p594 = scmp.eq.s32.totalorder %s36, 0
      %p595 = por %p593, %p594
      %p596 = scmp.ne.s32.totalorder %s582, %s583
      %p597 = scmp.eq.s32.totalorder %s37, 1
      %p598 = por %p596, %p597
      %p600 = scmp.ne.s32.totalorder %s583, %s599
      %p601 = scmp.eq.s32.totalorder %s37, 0
      %p602 = por %p600, %p601
      %p603 = scmp.le.s32.totalorder 1, %s31
      %p604 = scmp.lt.s32.totalorder %s31, 3
      %p605 = pnand %p603, %p604
      %p606 = pneg %p605
      // Predicated region
      $region9: #{forward.3} parent=5 // pred_check
        _
      $region10: #{forward.3} parent=5 // pred_check_branch
        %608 = sbr.rel (%p605) target = $region12
      $region11: #{forward.3} parent=5 // pred_region
        %s609 = ssub.s32 %s31, 1
        // Predicated region
        $region13: #{forward.3} parent=11 // pred_check
          %p610 = pneg %p147
        $region14: #{forward.3} parent=11 // pred_check_branch
          %612 = sbr.rel (%p610) target = $region16
        $region15: #{forward.3} parent=11 // pred_region
          %p613 = scmp.lt.s32.totalorder %s41, 0
          %s614 = scalar_select %p613, %s41, 0
          %s615 = scalar_lea.vmem %s3, %s614
        $region16: #{forward.3} parent=11 // pred_fallthru
          _
        // Predicated region
        $region17: #{forward.3} parent=11 // pred_check
          %p616 = pneg %p173
        $region18: #{forward.3} parent=11 // pred_check_branch
          %618 = sbr.rel (%p616) target = $region20
        $region19: #{forward.3} parent=11 // pred_region
          %p619 = scmp.lt.s32.totalorder %s41, 0
          %s620 = scalar_select %p619, %s41, 0
          %s621 = scalar_lea.vmem %s4, %s620
        $region20: #{forward.3} parent=11 // pred_fallthru
          _
        // Predicated region
        $region21: #{forward.3} parent=11 // pred_check
          %p622 = pneg %p199
        $region22: #{forward.3} parent=11 // pred_check_branch
          %624 = sbr.rel (%p622) target = $region24
        $region23: #{forward.3} parent=11 // pred_region
          %p625 = scmp.lt.s32.totalorder %s41, 0
          %s626 = scalar_select %p625, %s41, 0
          %s627 = smul.addr %s626, 2
          %s628 = smul.addr %s627, 4
          %s629 = scalar_lea.vmem %s5, %s628
        $region24: #{forward.3} parent=11 // pred_fallthru
          _
        // Predicated region
        $region25: #{forward.3} parent=11 // pred_check
          %p630 = pneg %p225
        $region26: #{forward.3} parent=11 // pred_check_branch
          %632 = sbr.rel (%p630) target = $region28
        $region27: #{forward.3} parent=11 // pred_region
          %p633 = scmp.lt.s32.totalorder %s41, 0
          %s634 = scalar_select %p633, %s41, 0
          %s635 = scalar_lea.vmem %s6, %s634
        $region28: #{forward.3} parent=11 // pred_fallthru
          _
        // Predicated region
        $region29: #{forward.3} parent=11 // pred_check
          %p636 = pneg %p251
        $region30: #{forward.3} parent=11 // pred_check_branch
          %638 = sbr.rel (%p636) target = $region32
        $region31: #{forward.3} parent=11 // pred_region
          %p639 = scmp.lt.s32.totalorder %s41, 0
          %s640 = scalar_select %p639, %s41, 0
          %s641 = smul.addr %s640, 2
          %s642 = smul.addr %s641, 4
          %s643 = scalar_lea.vmem %s7, %s642
        $region32: #{forward.3} parent=11 // pred_fallthru
          _
        // Predicated region
        $region33: #{forward.3} parent=11 // pred_check
          %p644 = pneg %p277
        $region34: #{forward.3} parent=11 // pred_check_branch
          %646 = sbr.rel (%p644) target = $region36
        $region35: #{forward.3} parent=11 // pred_region
          %p647 = scmp.lt.s32.totalorder %s41, 0
          %s648 = scalar_select %p647, %s41, 0
          %s649 = scalar_lea.vmem %s8, %s648
        $region36: #{forward.3} parent=11 // pred_fallthru
          _
        // Predicated region
        $region37: #{forward.3} parent=11 // pred_check
          %p650 = pneg %p303
        $region38: #{forward.3} parent=11 // pred_check_branch
          %652 = sbr.rel (%p650) target = $region40
        $region39: #{forward.3} parent=11 // pred_region
          %p653 = scmp.lt.s32.totalorder %s41, 0
          %s654 = scalar_select %p653, %s41, 0
          %s655 = scalar_lea.vmem %s9, %s654
        $region40: #{forward.3} parent=11 // pred_fallthru
          _
        // Predicated region
        $region41: #{forward.3} parent=11 // pred_check
          %p656 = pneg %p329
        $region42: #{forward.3} parent=11 // pred_check_branch
          %658 = sbr.rel (%p656) target = $region44
        $region43: #{forward.3} parent=11 // pred_region
          %p659 = scmp.lt.s32.totalorder %s41, 0
          %s660 = scalar_select %p659, %s41, 0
          %s661 = scalar_lea.vmem %s10, %s660
        $region44: #{forward.3} parent=11 // pred_fallthru
          _
        // Predicated region
        $region45: #{forward.3} parent=11 // pred_check
          %p662 = pneg %p355
        $region46: #{forward.3} parent=11 // pred_check_branch
          %664 = sbr.rel (%p662) target = $region48
        $region47: #{forward.3} parent=11 // pred_region
          %p665 = scmp.lt.s32.totalorder %s41, 0
          %s666 = scalar_select %p665, %s41, 0
          %s667 = smul.addr %s666, 2
          %s668 = smul.addr %s667, 4
          %s669 = scalar_lea.vmem %s11, %s668
        $region48: #{forward.3} parent=11 // pred_fallthru
          _
        // Predicated region
        $region49: #{forward.3} parent=11 // pred_check
          %p670 = pneg %p381
        $region50: #{forward.3} parent=11 // pred_check_branch
          %672 = sbr.rel (%p670) target = $region52
        $region51: #{forward.3} parent=11 // pred_region
          %p673 = scmp.lt.s32.totalorder %s41, 0
          %s674 = scalar_select %p673, %s41, 0
          %s675 = scalar_lea.vmem %s12, %s674
        $region52: #{forward.3} parent=11 // pred_fallthru
          _
        // Predicated region
        $region53: #{forward.3} parent=11 // pred_check
          %p676 = pneg %p407
        $region54: #{forward.3} parent=11 // pred_check_branch
          %678 = sbr.rel (%p676) target = $region56
        $region55: #{forward.3} parent=11 // pred_region
          %p679 = scmp.lt.s32.totalorder %s41, 0
          %s680 = scalar_select %p679, %s41, 0
          %s681 = smul.addr %s680, 8
          %s682 = smul.addr %s681, 4
          %s683 = scalar_lea.vmem %s13, %s682
        $region56: #{forward.3} parent=11 // pred_fallthru
          _
        // Predicated region
        $region57: #{forward.3} parent=11 // pred_check
          %p684 = pneg %p433
        $region58: #{forward.3} parent=11 // pred_check_branch
          %686 = sbr.rel (%p684) target = $region60
        $region59: #{forward.3} parent=11 // pred_region
          %p687 = scmp.lt.s32.totalorder %s41, 0
          %s688 = scalar_select %p687, %s41, 0
          %s689 = scalar_lea.vmem %s14, %s688
        $region60: #{forward.3} parent=11 // pred_fallthru
          _
        // Predicated region
        $region61: #{forward.3} parent=11 // pred_check
          %p690 = pneg %p454
        $region62: #{forward.3} parent=11 // pred_check_branch
          %692 = sbr.rel (%p690) target = $region64
        $region63: #{forward.3} parent=11 // pred_region
          _
        $region64: #{forward.3} parent=11 // pred_fallthru
          _
        // Predicated region
        $region65: #{forward.3} parent=11 // pred_check
          %p693 = pneg %p475
        $region66: #{forward.3} parent=11 // pred_check_branch
          %695 = sbr.rel (%p693) target = $region68
        $region67: #{forward.3} parent=11 // pred_region
          _
        $region68: #{forward.3} parent=11 // pred_fallthru
          _
        // Predicated region
        $region69: #{forward.3} parent=11 // pred_check
          %p696 = pneg %p496
        $region70: #{forward.3} parent=11 // pred_check_branch
          %698 = sbr.rel (%p696) target = $region72
        $region71: #{forward.3} parent=11 // pred_region
          _
        $region72: #{forward.3} parent=11 // pred_fallthru
          _
        // Predicated region
        $region73: #{forward.3} parent=11 // pred_check
          %p699 = pneg %p517
        $region74: #{forward.3} parent=11 // pred_check_branch
          %701 = sbr.rel (%p699) target = $region76
        $region75: #{forward.3} parent=11 // pred_region
          _
        $region76: #{forward.3} parent=11 // pred_fallthru
          _
      $region12: #{forward.3} parent=5 // pred_fallthru
        _
      %p702 = scmp.lt.s32.totalorder %s31, 2
      // Predicated region
      $region77: #{forward.3} parent=5 // pred_check
        %p703 = pneg %p702
      $region78: #{forward.3} parent=5 // pred_check_branch
        %705 = sbr.rel (%p703) target = $region80
      $region79: #{forward.3} parent=5 // pred_region
        // Predicated region
        $region81: #{forward.3} parent=79 // pred_check
          %p706 = pneg %p63
        $region82: #{forward.3} parent=79 // pred_check_branch
          %708 = sbr.rel (%p706) target = $region84
        $region83: #{forward.3} parent=79 // pred_region
          %p709 = scmp.lt.s32.totalorder %s38, 1
          %s710 = scalar_select %p709, %s38, 1
          %s711 = smul.addr %s710, 4
          %s712 = smul.addr %s711, 8
          %s713 = scalar_lea.vmem %s0, %s712
        $region84: #{forward.3} parent=79 // pred_fallthru
          _
        // Predicated region
        $region85: #{forward.3} parent=79 // pred_check
          %p714 = pneg %p89
        $region86: #{forward.3} parent=79 // pred_check_branch
          %716 = sbr.rel (%p714) target = $region88
        $region87: #{forward.3} parent=79 // pred_region
          %p717 = scmp.lt.s32.totalorder %s38, 1
          %s718 = scalar_select %p717, %s38, 1
          %s719 = smul.addr %s718, 4
          %s720 = smul.addr %s719, 8
          %s721 = scalar_lea.vmem %s1, %s720
        $region88: #{forward.3} parent=79 // pred_fallthru
          _
        // Predicated region
        $region89: #{forward.3} parent=79 // pred_check
          %p722 = pneg %p115
        $region90: #{forward.3} parent=79 // pred_check_branch
          %724 = sbr.rel (%p722) target = $region92
        $region91: #{forward.3} parent=79 // pred_region
          %p725 = scmp.lt.s32.totalorder %s38, 1
          %s726 = scalar_select %p725, %s38, 1
          %s727 = scalar_lea.vmem %s2, %s726
        $region92: #{forward.3} parent=79 // pred_fallthru
          _
      $region80: #{forward.3} parent=5 // pred_fallthru
        _
      %p728 = scmp.le.s32.totalorder 1, %s31
      %p729 = scmp.lt.s32.totalorder %s31, 3
      %p730 = pnand %p728, %p729
      %p731 = pneg %p730
      // Predicated region
      $region93: #{forward.3} parent=5 // pred_check
        _
      $region94: #{forward.3} parent=5 // pred_check_branch
        %733 = sbr.rel (%p730) target = $region96
      $region95: #{forward.3} parent=5 // pred_region
        %s734 = ssub.s32 %s31, 1
        %p735 = scmp.lt.s32.totalorder %s40, 1
        %s736 = scalar_select %p735, %s40, 1
        %s737 = smul.addr %s736, 4
        %s738 = smul.addr %s737, 8
        %s739 = scalar_lea.vmem %s0, %s738
        %p740 = pneg %p69
        %p741 = pneg %p66
        %p742 = scmp.lt.s32.totalorder %s40, 1
        %s743 = scalar_select %p742, %s40, 1
        %s744 = smul.addr %s743, 4
        %s745 = smul.addr %s744, 8
        %s746 = scalar_lea.vmem %s1, %s745
        %p747 = pneg %p95
        %p748 = pneg %p92
        %p749 = scmp.lt.s32.totalorder %s40, 1
        %s750 = scalar_select %p749, %s40, 1
        %s751 = scalar_lea.vmem %s2, %s750
        %p752 = pneg %p121
        %p753 = pneg %p118
        %p754 = scmp.lt.s32.totalorder %s41, 0
        %s755 = scalar_select %p754, %s41, 0
        %s756 = scalar_lea.vmem %s3, %s755
        %p757 = pneg %p147
        %p758 = pneg %p144
        %p759 = scmp.lt.s32.totalorder %s41, 0
        %s760 = scalar_select %p759, %s41, 0
        %s761 = scalar_lea.vmem %s4, %s760
        %p762 = pneg %p173
        %p763 = pneg %p170
        %p764 = scmp.lt.s32.totalorder %s41, 0
        %s765 = scalar_select %p764, %s41, 0
        %s766 = smul.addr %s765, 2
        %s767 = smul.addr %s766, 4
        %s768 = scalar_lea.vmem %s5, %s767
        %p769 = pneg %p199
        %p770 = pneg %p196
        %p771 = scmp.lt.s32.totalorder %s41, 0
        %s772 = scalar_select %p771, %s41, 0
        %s773 = scalar_lea.vmem %s6, %s772
        %p774 = pneg %p225
        %p775 = pneg %p222
        %p776 = scmp.lt.s32.totalorder %s41, 0
        %s777 = scalar_select %p776, %s41, 0
        %s778 = smul.addr %s777, 2
        %s779 = smul.addr %s778, 4
        %s780 = scalar_lea.vmem %s7, %s779
        %p781 = pneg %p251
        %p782 = pneg %p248
        %p783 = scmp.lt.s32.totalorder %s41, 0
        %s784 = scalar_select %p783, %s41, 0
        %s785 = scalar_lea.vmem %s8, %s784
        %p786 = pneg %p277
        %p787 = pneg %p274
        %p788 = scmp.lt.s32.totalorder %s41, 0
        %s789 = scalar_select %p788, %s41, 0
        %s790 = scalar_lea.vmem %s9, %s789
        %p791 = pneg %p303
        %p792 = pneg %p300
        %p793 = scmp.lt.s32.totalorder %s41, 0
        %s794 = scalar_select %p793, %s41, 0
        %s795 = scalar_lea.vmem %s10, %s794
        %p796 = pneg %p329
        %p797 = pneg %p326
        %p798 = scmp.lt.s32.totalorder %s41, 0
        %s799 = scalar_select %p798, %s41, 0
        %s800 = smul.addr %s799, 2
        %s801 = smul.addr %s800, 4
        %s802 = scalar_lea.vmem %s11, %s801
        %p803 = pneg %p355
        %p804 = pneg %p352
        %p805 = scmp.lt.s32.totalorder %s41, 0
        %s806 = scalar_select %p805, %s41, 0
        %s807 = scalar_lea.vmem %s12, %s806
        %p808 = pneg %p381
        %p809 = pneg %p378
        %p810 = scmp.lt.s32.totalorder %s41, 0
        %s811 = scalar_select %p810, %s41, 0
        %s812 = smul.addr %s811, 8
        %s813 = smul.addr %s812, 4
        %s814 = scalar_lea.vmem %s13, %s813
        %p815 = pneg %p407
        %p816 = pneg %p404
        %p817 = scmp.lt.s32.totalorder %s41, 0
        %s818 = scalar_select %p817, %s41, 0
        %s819 = scalar_lea.vmem %s14, %s818
        %p820 = pneg %p433
        %p821 = pneg %p430
        %p822 = pneg %p454
        %p823 = pneg %p451
        %p824 = pneg %p475
        %p825 = pneg %p472
        %p826 = pneg %p496
        %p827 = pneg %p493
        %p828 = pneg %p517
        %p829 = pneg %p514
        %p830 = pneg %p543
        %p831 = pneg %p540
        %s832 = sand.u32 %s530, 1
        %s833 = scalar_lea.sflag [#allocation4], %s832
        %s834 = sand.u32 %s530, 1
        %s835 = smul.addr %s834, 32
        %s836 = scalar_lea.vmem [#allocation3], %s835
        %p837 = pneg %p569
        %p838 = pneg %p566
        %p839 = scmp.lt.s32.totalorder %s40, 1
        %s840 = scalar_select %p839, %s40, 1
        %s841 = scalar_lea.vmem %s20, %s840
        %p842 = pneg %p595
        %p843 = pneg %p592
        %p844 = scmp.lt.s32.totalorder %s40, 1
        %s845 = scalar_select %p844, %s40, 1
        %s846 = scalar_lea.vmem %s21, %s845
        %p847 = scmp.lt.s32.totalorder %s40, 1
        %s848 = scalar_select %p847, %s40, 1
        %s849 = smul.addr %s848, 4
        %s850 = smul.addr %s849, 8
        %s851 = scalar_lea.vmem %s0, %s850
        %p852 = scmp.lt.s32.totalorder %s40, 1
        %s853 = scalar_select %p852, %s40, 1
        %s854 = smul.addr %s853, 4
        %s855 = smul.addr %s854, 8
        %s856 = scalar_lea.vmem %s1, %s855
        %p857 = scmp.lt.s32.totalorder %s40, 1
        %s858 = scalar_select %p857, %s40, 1
        %s859 = scalar_lea.vmem %s2, %s858
        %p860 = scmp.lt.s32.totalorder %s41, 0
        %s861 = scalar_select %p860, %s41, 0
        %s862 = scalar_lea.vmem %s3, %s861
        %p863 = scmp.lt.s32.totalorder %s41, 0
        %s864 = scalar_select %p863, %s41, 0
        %s865 = scalar_lea.vmem %s4, %s864
        %p866 = scmp.lt.s32.totalorder %s41, 0
        %s867 = scalar_select %p866, %s41, 0
        %s868 = smul.addr %s867, 2
        %s869 = smul.addr %s868, 4
        %s870 = scalar_lea.vmem %s5, %s869
        %p871 = scmp.lt.s32.totalorder %s41, 0
        %s872 = scalar_select %p871, %s41, 0
        %s873 = scalar_lea.vmem %s6, %s872
        %p874 = scmp.lt.s32.totalorder %s41, 0
        %s875 = scalar_select %p874, %s41, 0
        %s876 = smul.addr %s875, 2
        %s877 = smul.addr %s876, 4
        %s878 = scalar_lea.vmem %s7, %s877
        %p879 = scmp.lt.s32.totalorder %s41, 0
        %s880 = scalar_select %p879, %s41, 0
        %s881 = scalar_lea.vmem %s8, %s880
        %p882 = scmp.lt.s32.totalorder %s41, 0
        %s883 = scalar_select %p882, %s41, 0
        %s884 = scalar_lea.vmem %s9, %s883
        %p885 = scmp.lt.s32.totalorder %s41, 0
        %s886 = scalar_select %p885, %s41, 0
        %s887 = scalar_lea.vmem %s10, %s886
        %p888 = scmp.lt.s32.totalorder %s41, 0
        %s889 = scalar_select %p888, %s41, 0
        %s890 = smul.addr %s889, 2
        %s891 = smul.addr %s890, 4
        %s892 = scalar_lea.vmem %s11, %s891
        %p893 = scmp.lt.s32.totalorder %s41, 0
        %s894 = scalar_select %p893, %s41, 0
        %s895 = scalar_lea.vmem %s12, %s894
        %p896 = scmp.lt.s32.totalorder %s41, 0
        %s897 = scalar_select %p896, %s41, 0
        %s898 = smul.addr %s897, 8
        %s899 = smul.addr %s898, 4
        %s900 = scalar_lea.vmem %s13, %s899
        %p901 = scmp.lt.s32.totalorder %s41, 0
        %s902 = scalar_select %p901, %s41, 0
        %s903 = scalar_lea.vmem %s14, %s902
        %p904 = scmp.lt.s32.totalorder %s40, 1
        %s905 = scalar_select %p904, %s40, 1
        %s906 = scalar_lea.vmem %s20, %s905
        %p907 = scmp.lt.s32.totalorder %s40, 1
        %s908 = scalar_select %p907, %s40, 1
        %s909 = scalar_lea.vmem %s21, %s908
        %p911 = scmp.eq.s32.totalorder %s41, 0
        // Predicated region
        $region97: #{forward.3} parent=95 // pred_check
          %p912 = pneg %p911
        $region98: #{forward.3} parent=95 // pred_check_branch
          %914 = sbr.rel (%p912) target = $region100
        $region99: #{forward.3} parent=95 // pred_region
          %v915 = vld [vmem:[%s851] sm:$0xff]
          %v916 = vld [vmem:[%s851 + $0x8] sm:$0xff]
          %v917 = vld [vmem:[%s851 + $0x10] sm:$0xff]
          %v918 = vld [vmem:[%s851 + $0x18] sm:$0xff]
          %vm919 = vcmask 130048
          %920 = vst.msk [vmem:[#allocation2] sm:$0xff] %vm919, %v915
          %921 = vst.msk [vmem:[#allocation2 + $0x8] sm:$0xff] %vm919, %v916
          %922 = vst.msk [vmem:[#allocation2 + $0x10] sm:$0xff] %vm919, %v917
          %923 = vst.msk [vmem:[#allocation2 + $0x18] sm:$0xff] %vm919, %v918
        $region100: #{forward.3} parent=95 // pred_fallthru
          _
        %v924 = vld [vmem:[#allocation2] sm:$0xff]
        %v925 = vld [vmem:[#allocation2 + $0x8] sm:$0xff]
        %v926 = vld [vmem:[#allocation2 + $0x10] sm:$0xff]
        %v927 = vld [vmem:[#allocation2 + $0x18] sm:$0xff]
        %v928 = vld [vmem:[%s862] sm:$0x1]
        %v929 = vld [vmem:[%s865] sm:$0x1]
        %v930 = vld [vmem:[%s870] sm:$0xf]
        %v931 = vld [vmem:[%s870 + $0x4] sm:$0xf]
        %v932 = vld [vmem:[%s873] sm:$0x1]
        %v933 = vld [vmem:[%s878] sm:$0xf]
        %v934 = vld [vmem:[%s878 + $0x4] sm:$0xf]
        %v935 = vld [vmem:[%s881] sm:$0x1]
        %v936 = vld [vmem:[%s884] sm:$0x1]
        %v937 = vld [vmem:[%s887] sm:$0x1]
        %v938 = vld [vmem:[%s892] sm:$0xf]
        %v939 = vld [vmem:[%s892 + $0x4] sm:$0xf]
        %v940 = vld [vmem:[%s895] sm:$0x1]
        %v941 = vld [vmem:[%s900] sm:$0xf]
        %v942 = vld [vmem:[%s900 + $0x4] sm:$0xf]
        %v943 = vld [vmem:[%s900 + $0x8] sm:$0xf]
        %v944 = vld [vmem:[%s900 + $0xc] sm:$0xf]
        %v945 = vld [vmem:[%s900 + $0x10] sm:$0xf]
        %v946 = vld [vmem:[%s900 + $0x14] sm:$0xf]
        %v947 = vld [vmem:[%s900 + $0x18] sm:$0xf]
        %v948 = vld [vmem:[%s900 + $0x1c] sm:$0xf]
        %v949 = vld [vmem:[%s903] sm:$0x1]
        %vm950 = vcmask 130048
        %v951 = vsel %vm950, %v924, 0.0
        %952 = vadd.xlane.f32.xlu0 %v951
        %v953 = vpop.xlane.xlu0 %952
        %v954 = vsel %vm950, %v925, 0.0
        %955 = vadd.xlane.f32.xlu0 %v954
        %v956 = vpop.xlane.xlu0 %955
        %v957 = vsel %vm950, %v926, 0.0
        %958 = vadd.xlane.f32.xlu0 %v957
        %v959 = vpop.xlane.xlu0 %958
        %v960 = vsel %vm950, %v927, 0.0
        %961 = vadd.xlane.f32.xlu0 %v960
        %v962 = vpop.xlane.xlu0 %961
        %v963 = vrcp.pop 16.0
        %v964 = vmul.f32 %v953, %v963
        %v965 = vmul.f32 %v956, %v963
        %v966 = vmul.f32 %v959, %v963
        %v967 = vmul.f32 %v962, %v963
        %v968 = vsub.f32 %v924, %v964
        %v969 = vsub.f32 %v925, %v965
        %v970 = vsub.f32 %v926, %v966
        %v971 = vsub.f32 %v927, %v967
        %v972 = vmul.f32 %v968, %v968
        %v973 = vmul.f32 %v969, %v969
        %v974 = vmul.f32 %v970, %v970
        %v975 = vmul.f32 %v971, %v971
        %v976 = vsel %vm950, %v972, 0.0
        %977 = vadd.xlane.f32.xlu0 %v976
        %v978 = vpop.xlane.xlu0 %977
        %v979 = vsel %vm950, %v973, 0.0
        %980 = vadd.xlane.f32.xlu0 %v979
        %v981 = vpop.xlane.xlu0 %980
        %v982 = vsel %vm950, %v974, 0.0
        %983 = vadd.xlane.f32.xlu0 %v982
        %v984 = vpop.xlane.xlu0 %983
        %v985 = vsel %vm950, %v975, 0.0
        %986 = vadd.xlane.f32.xlu0 %v985
        %v987 = vpop.xlane.xlu0 %986
        %v988 = vmul.f32 %v978, %v963
        %v989 = vmul.f32 %v981, %v963
        %v990 = vmul.f32 %v984, %v963
        %v991 = vmul.f32 %v987, %v963
        %v992 = vadd.f32 %v988, 1e-05
        %v993 = vadd.f32 %v989, 1e-05
        %v994 = vadd.f32 %v990, 1e-05
        %v995 = vadd.f32 %v991, 1e-05
        %v996 = vrsqrt.pop %v992
        %v997 = vrsqrt.pop %v993
        %v998 = vrsqrt.pop %v994
        %v999 = vrsqrt.pop %v995
        %v1000 = vmul.f32 %v968, %v996
        %v1001 = vmul.f32 %v969, %v997
        %v1002 = vmul.f32 %v970, %v998
        %v1003 = vmul.f32 %v971, %v999
        %v1005 = vlaneseq
        %v1006 = vshrl.u32 %v1005, 7
        %v1007 = vsub.s32 0, %v1006
        %v1008 = vrot.slane %v928, %v1007
        %v1010 = vmul.f32 %v1000, %v1008
        %v1011 = vmul.f32 %v1001, %v1008
        %v1012 = vmul.f32 %v1002, %v1008
        %v1013 = vmul.f32 %v1003, %v1008
        %v1015 = vlaneseq
        %v1016 = vshrl.u32 %v1015, 7
        %v1017 = vsub.s32 0, %v1016
        %v1018 = vrot.slane %v929, %v1017
        %v1020 = vadd.f32 %v1010, %v1018
        %v1021 = vadd.f32 %v1011, %v1018
        %v1022 = vadd.f32 %v1012, %v1018
        %v1023 = vadd.f32 %v1013, %v1018
        %v1024 = vpack.c.bf16 %v1021, %v1020
        %v1025 = vpack.c.bf16 %v1023, %v1022
        %v1027 = vlaneseq
        %v1028 = vshrl.u32 %v1027, 7
        %v1029 = vsub.s32 0, %v1028
        %v1030 = vrot.slane %v932, %v1029
        %v1034 = vunpack.c.l.b16 %v930
        %v1035 = vunpack.c.l.b16 %v931
        %v1036 = vpack.c.b16 %v1035, %v1034
        %v1039 = vsel %vm950, %v1024, 0
        %v1042 = vsel %vm950, %v1025, 0
        %1044 = vmatprep.subr.bf16.mxu0 0
        %1045 = vmatpush1.bf16.msra.mxu0 0
        %1046 = vmatprep.subr.bf16.mxu0 0
        %1047 = vmatpush1.bf16.msra.mxu0 0
        %1048 = vmatprep.subr.bf16.mxu0 0
        %1049 = vmatpush1.bf16.msra.mxu0 0
        %1050 = vmatprep.subr.bf16.mxu0 0
        %1051 = vmatpush1.bf16.msra.mxu0 0
        %1052 = vmatprep.subr.bf16.mxu0 0
        %1053 = vmatpush1.bf16.msra.mxu0 0
        %1054 = vmatprep.subr.bf16.mxu0 0
        %1055 = vmatpush1.bf16.msra.mxu0 0
        %1056 = vmatprep.subr.bf16.mxu0 0
        %1057 = vmatpush1.bf16.msra.mxu0 0
        %1058 = vmatprep.subr.bf16.mxu0 0
        %1059 = vmatpush1.bf16.msra.mxu0 %v1036
        %1060 = vmatprep.subr.bf16.mxu0 0
        %1061 = vmatpush2.bf16.msra.mxu0 0
        %1062 = vmatprep.subr.bf16.mxu0 0
        %1063 = vmatpush2.bf16.msra.mxu0 0
        %1064 = vmatprep.subr.bf16.mxu0 0
        %1065 = vmatpush2.bf16.msra.mxu0 0
        %1066 = vmatprep.subr.bf16.mxu0 0
        %1067 = vmatpush2.bf16.msra.mxu0 0
        %1068 = vmatprep.subr.bf16.mxu0 0
        %1069 = vmatpush2.bf16.msra.mxu0 0
        %1070 = vmatprep.subr.bf16.mxu0 0
        %1071 = vmatpush2.bf16.msra.mxu0 0
        %1072 = vmatprep.subr.bf16.mxu0 0
        %1073 = vmatpush2.bf16.msra.mxu0 0
        %1074 = vmatprep.subr.bf16.mxu0 0
        %1075 = vmatpush2.bf16.msra.mxu0 0
        %1076 = vmatprep.mubr.bf16.mxu0 0
        %1077 = vmatmul.mubr.bf16.gmra.mxu0 %v1039
        %v1078 = vpop.f32.mrf.mxu0
        %v1079 = vadd.f32 %v1030, %v1078
        %v1080 = vpop.f32.mrf.mxu0
        %v1081 = vpop.f32.mrf.mxu0
        %v1082 = vadd.f32 %v1030, %v1081
        %v1083 = vpop.f32.mrf.mxu0
        %1084 = vmatprep.mubr.bf16.mxu0 0
        %1085 = vmatmul.mubr.bf16.gmra.mxu0 %v1042
        %v1086 = vpop.f32.mrf.mxu0
        %v1087 = vadd.f32 %v1030, %v1086
        %v1088 = vpop.f32.mrf.mxu0
        %v1089 = vpop.f32.mrf.mxu0
        %v1090 = vadd.f32 %v1030, %v1089
        %v1091 = vpop.f32.mrf.mxu0
        %1092 = vdwg.mxu0
        %1097 = vrot.lane.b32.xlu0 %v1079, 120
        %v1098 = vpop.permute.xlu0 %1097
        %1099 = vrot.lane.b32.xlu0 %v1082, 120
        %v1100 = vpop.permute.xlu0 %1099
        %1101 = vrot.lane.b32.xlu0 %v1087, 120
        %v1102 = vpop.permute.xlu0 %1101
        %1103 = vrot.lane.b32.xlu0 %v1090, 120
        %v1104 = vpop.permute.xlu0 %1103
        %v1109 = vmul.f32 %v1079, 0.35355338
        %v1110 = vmul.f32 %v1082, 0.35355338
        %v1111 = vmul.f32 %v1087, 0.35355338
        %v1112 = vmul.f32 %v1090, 0.35355338
        %v1113 = vmul.f32 %v1098, 0.35355338
        %v1114 = vmul.f32 %v1100, 0.35355338
        %v1115 = vmul.f32 %v1102, 0.35355338
        %v1116 = vmul.f32 %v1104, 0.35355338
        %v1117 = vpack.c.bf16 %v1110, %v1109
        %v1118 = vpack.c.bf16 %v1112, %v1111
        %v1119 = vpack.c.bf16 %v1114, %v1113
        %v1120 = vpack.c.bf16 %v1116, %v1115
        %v1121 = vpack.c.bf16 %v1082, %v1079
        %v1122 = vpack.c.bf16 %v1090, %v1087
        %v1123 = vpack.c.bf16 %v1100, %v1098
        %v1124 = vpack.c.bf16 %v1104, %v1102
        %1127 = vrot.lane.b32.xlu0 %v1121, 112
        %v1128 = vpop.permute.xlu0 %1127
        %1129 = vrot.lane.b32.xlu0 %v1122, 112
        %v1130 = vpop.permute.xlu0 %1129
        %vm1131 = vcmask 64512
        %v1133 = vsel %vm1131, %v1117, 0
        %v1136 = vsel %vm1131, %v1118, 0
        %v1139 = vsel %vm1131, %v1128, 0
        %v1142 = vsel %vm1131, %v1130, 0
        %1144 = vmatprep.subr.bf16.mxu0 0
        %1145 = vmatpush1.bf16.xpose.msra.mxu0 0
        %1146 = vmatprep.subr.bf16.mxu0 0
        %1147 = vmatpush1.bf16.xpose.msra.mxu0 0
        %1148 = vmatprep.subr.bf16.mxu0 0
        %1149 = vmatpush1.bf16.xpose.msra.mxu0 0
        %1150 = vmatprep.subr.bf16.mxu0 0
        %1151 = vmatpush1.bf16.xpose.msra.mxu0 0
        %1152 = vmatprep.subr.bf16.mxu0 0
        %1153 = vmatpush1.bf16.xpose.msra.mxu0 0
        %1154 = vmatprep.subr.bf16.mxu0 0
        %1155 = vmatpush1.bf16.xpose.msra.mxu0 0
        %1156 = vmatprep.subr.bf16.mxu0 0
        %1157 = vmatpush1.bf16.xpose.msra.mxu0 %v1142
        %1158 = vmatprep.subr.bf16.mxu0 0
        %1159 = vmatpush1.bf16.xpose.msra.mxu0 %v1139
        %1160 = vmatprep.subr.bf16.mxu0 0
        %1161 = vmatpush2.bf16.xpose.msra.mxu0 0
        %1162 = vmatprep.subr.bf16.mxu0 0
        %1163 = vmatpush2.bf16.xpose.msra.mxu0 0
        %1164 = vmatprep.subr.bf16.mxu0 0
        %1165 = vmatpush2.bf16.xpose.msra.mxu0 0
        %1166 = vmatprep.subr.bf16.mxu0 0
        %1167 = vmatpush2.bf16.xpose.msra.mxu0 0
        %1168 = vmatprep.subr.bf16.mxu0 0
        %1169 = vmatpush2.bf16.xpose.msra.mxu0 0
        %1170 = vmatprep.subr.bf16.mxu0 0
        %1171 = vmatpush2.bf16.xpose.msra.mxu0 0
        %1172 = vmatprep.subr.bf16.mxu0 0
        %1173 = vmatpush2.bf16.xpose.msra.mxu0 0
        %1174 = vmatprep.subr.bf16.mxu0 0
        %1175 = vmatpush2.bf16.xpose.msra.mxu0 0
        %1176 = vmatprep.mubr.bf16.mxu0 0
        %1177 = vmatmul.mubr.bf16.gmra.mxu0 %v1133
        %v1178 = vpop.f32.mrf.mxu0
        %v1179 = vadd.f32 0.0, %v1178
        %v1180 = vpop.f32.mrf.mxu0
        %v1181 = vpop.f32.mrf.mxu0
        %v1182 = vadd.f32 0.0, %v1181
        %v1183 = vpop.f32.mrf.mxu0
        %1184 = vmatprep.mubr.bf16.mxu0 0
        %1185 = vmatmul.mubr.bf16.gmra.mxu0 %v1136
        %v1186 = vpop.f32.mrf.mxu0
        %v1187 = vadd.f32 0.0, %v1186
        %v1188 = vpop.f32.mrf.mxu0
        %v1189 = vpop.f32.mrf.mxu0
        %v1190 = vadd.f32 0.0, %v1189
        %v1191 = vpop.f32.mrf.mxu0
        %1192 = vdwg.mxu0
        %1195 = vrot.lane.b32.xlu0 %v1123, 112
        %v1196 = vpop.permute.xlu0 %1195
        %1197 = vrot.lane.b32.xlu0 %v1124, 112
        %v1198 = vpop.permute.xlu0 %1197
        %v1200 = vsel %vm1131, %v1119, 0
        %v1203 = vsel %vm1131, %v1120, 0
        %v1206 = vsel %vm1131, %v1196, 0
        %v1209 = vsel %vm1131, %v1198, 0
        %1211 = vmatprep.subr.bf16.mxu0 0
        %1212 = vmatpush1.bf16.xpose.msra.mxu0 0
        %1213 = vmatprep.subr.bf16.mxu0 0
        %1214 = vmatpush1.bf16.xpose.msra.mxu0 0
        %1215 = vmatprep.subr.bf16.mxu0 0
        %1216 = vmatpush1.bf16.xpose.msra.mxu0 0
        %1217 = vmatprep.subr.bf16.mxu0 0
        %1218 = vmatpush1.bf16.xpose.msra.mxu0 0
        %1219 = vmatprep.subr.bf16.mxu0 0
        %1220 = vmatpush1.bf16.xpose.msra.mxu0 0
        %1221 = vmatprep.subr.bf16.mxu0 0
        %1222 = vmatpush1.bf16.xpose.msra.mxu0 0
        %1223 = vmatprep.subr.bf16.mxu0 0
        %1224 = vmatpush1.bf16.xpose.msra.mxu0 %v1209
        %1225 = vmatprep.subr.bf16.mxu0 0
        %1226 = vmatpush1.bf16.xpose.msra.mxu0 %v1206
        %1227 = vmatprep.subr.bf16.mxu0 0
        %1228 = vmatpush2.bf16.xpose.msra.mxu0 0
        %1229 = vmatprep.subr.bf16.mxu0 0
        %1230 = vmatpush2.bf16.xpose.msra.mxu0 0
        %1231 = vmatprep.subr.bf16.mxu0 0
        %1232 = vmatpush2.bf16.xpose.msra.mxu0 0
        %1233 = vmatprep.subr.bf16.mxu0 0
        %1234 = vmatpush2.bf16.xpose.msra.mxu0 0
        %1235 = vmatprep.subr.bf16.mxu0 0
        %1236 = vmatpush2.bf16.xpose.msra.mxu0 0
        %1237 = vmatprep.subr.bf16.mxu0 0
        %1238 = vmatpush2.bf16.xpose.msra.mxu0 0
        %1239 = vmatprep.subr.bf16.mxu0 0
        %1240 = vmatpush2.bf16.xpose.msra.mxu0 0
        %1241 = vmatprep.subr.bf16.mxu0 0
        %1242 = vmatpush2.bf16.xpose.msra.mxu0 0
        %1243 = vmatprep.mubr.bf16.mxu0 0
        %1244 = vmatmul.mubr.bf16.gmra.mxu0 %v1200
        %v1245 = vpop.f32.mrf.mxu0
        %v1246 = vadd.f32 0.0, %v1245
        %v1247 = vpop.f32.mrf.mxu0
        %v1248 = vpop.f32.mrf.mxu0
        %v1249 = vadd.f32 0.0, %v1248
        %v1250 = vpop.f32.mrf.mxu0
        %1251 = vmatprep.mubr.bf16.mxu0 0
        %1252 = vmatmul.mubr.bf16.gmra.mxu0 %v1203
        %v1253 = vpop.f32.mrf.mxu0
        %v1254 = vadd.f32 0.0, %v1253
        %v1255 = vpop.f32.mrf.mxu0
        %v1256 = vpop.f32.mrf.mxu0
        %v1257 = vadd.f32 0.0, %v1256
        %v1258 = vpop.f32.mrf.mxu0
        %1259 = vdwg.mxu0
        %vm1260 = vcmask 261120
        %v1261 = vsel %vm1260, %v1179, -inf
        %1262 = vmax.xlane.f32.xlu0 %v1261
        %v1263 = vpop.xlane.xlu0 %1262
        %v1264 = vsel %vm1260, %v1182, -inf
        %1265 = vmax.xlane.f32.xlu0 %v1264
        %v1266 = vpop.xlane.xlu0 %1265
        %v1267 = vsel %vm1260, %v1187, -inf
        %1268 = vmax.xlane.f32.xlu0 %v1267
        %v1269 = vpop.xlane.xlu0 %1268
        %v1270 = vsel %vm1260, %v1190, -inf
        %1271 = vmax.xlane.f32.xlu0 %v1270
        %v1272 = vpop.xlane.xlu0 %1271
        %v1273 = vsel %vm1260, %v1246, -inf
        %1274 = vmax.xlane.f32.xlu0 %v1273
        %v1275 = vpop.xlane.xlu0 %1274
        %v1276 = vsel %vm1260, %v1249, -inf
        %1277 = vmax.xlane.f32.xlu0 %v1276
        %v1278 = vpop.xlane.xlu0 %1277
        %v1279 = vsel %vm1260, %v1254, -inf
        %1280 = vmax.xlane.f32.xlu0 %v1279
        %v1281 = vpop.xlane.xlu0 %1280
        %v1282 = vsel %vm1260, %v1257, -inf
        %1283 = vmax.xlane.f32.xlu0 %v1282
        %v1284 = vpop.xlane.xlu0 %1283
        %v1285 = vsub.f32 %v1179, %v1263
        %v1286 = vsub.f32 %v1182, %v1266
        %v1287 = vsub.f32 %v1187, %v1269
        %v1288 = vsub.f32 %v1190, %v1272
        %v1289 = vsub.f32 %v1246, %v1275
        %v1290 = vsub.f32 %v1249, %v1278
        %v1291 = vsub.f32 %v1254, %v1281
        %v1292 = vsub.f32 %v1257, %v1284
        %v1293 = vmul.f32 %v1285, 1.442695
        %v1294 = vpow.pop %v1293
        %v1295 = vmul.f32 %v1286, 1.442695
        %v1296 = vpow.pop %v1295
        %v1297 = vmul.f32 %v1287, 1.442695
        %v1298 = vpow.pop %v1297
        %v1299 = vmul.f32 %v1288, 1.442695
        %v1300 = vpow.pop %v1299
        %v1301 = vmul.f32 %v1289, 1.442695
        %v1302 = vpow.pop %v1301
        %v1303 = vmul.f32 %v1290, 1.442695
        %v1304 = vpow.pop %v1303
        %v1305 = vmul.f32 %v1291, 1.442695
        %v1306 = vpow.pop %v1305
        %v1307 = vmul.f32 %v1292, 1.442695
        %v1308 = vpow.pop %v1307
        %v1309 = vsel %vm1260, %v1294, 0.0
        %1310 = vadd.xlane.f32.xlu0 %v1309
        %v1311 = vpop.xlane.xlu0 %1310
        %v1312 = vsel %vm1260, %v1296, 0.0
        %1313 = vadd.xlane.f32.xlu0 %v1312
        %v1314 = vpop.xlane.xlu0 %1313
        %v1315 = vsel %vm1260, %v1298, 0.0
        %1316 = vadd.xlane.f32.xlu0 %v1315
        %v1317 = vpop.xlane.xlu0 %1316
        %v1318 = vsel %vm1260, %v1300, 0.0
        %1319 = vadd.xlane.f32.xlu0 %v1318
        %v1320 = vpop.xlane.xlu0 %1319
        %v1321 = vsel %vm1260, %v1302, 0.0
        %1322 = vadd.xlane.f32.xlu0 %v1321
        %v1323 = vpop.xlane.xlu0 %1322
        %v1324 = vsel %vm1260, %v1304, 0.0
        %1325 = vadd.xlane.f32.xlu0 %v1324
        %v1326 = vpop.xlane.xlu0 %1325
        %v1327 = vsel %vm1260, %v1306, 0.0
        %1328 = vadd.xlane.f32.xlu0 %v1327
        %v1329 = vpop.xlane.xlu0 %1328
        %v1330 = vsel %vm1260, %v1308, 0.0
        %1331 = vadd.xlane.f32.xlu0 %v1330
        %v1332 = vpop.xlane.xlu0 %1331
        %v1333 = vrcp.pop %v1311
        %v1334 = vrcp.pop %v1314
        %v1335 = vrcp.pop %v1317
        %v1336 = vrcp.pop %v1320
        %v1337 = vrcp.pop %v1323
        %v1338 = vrcp.pop %v1326
        %v1339 = vrcp.pop %v1329
        %v1340 = vrcp.pop %v1332
        %v1341 = vmul.f32 %v1294, %v1333
        %v1342 = vmul.f32 %v1296, %v1334
        %v1343 = vmul.f32 %v1298, %v1335
        %v1344 = vmul.f32 %v1300, %v1336
        %v1345 = vmul.f32 %v1302, %v1337
        %v1346 = vmul.f32 %v1304, %v1338
        %v1347 = vmul.f32 %v1306, %v1339
        %v1348 = vmul.f32 %v1308, %v1340
        %v1349 = vpack.c.bf16 %v1342, %v1341
        %v1350 = vpack.c.bf16 %v1344, %v1343
        %v1351 = vpack.c.bf16 %v1346, %v1345
        %v1352 = vpack.c.bf16 %v1348, %v1347
        %1353 = vrot.lane.b32.xlu0 %v1121, 96
        %v1354 = vpop.permute.xlu0 %1353
        %1355 = vrot.lane.b32.xlu0 %v1122, 96
        %v1356 = vpop.permute.xlu0 %1355
        %v1360 = vsel %vm1260, %v1349, 0
        %v1363 = vsel %vm1260, %v1350, 0
        %1365 = vmatprep.subr.bf16.mxu0 0
        %1366 = vmatpush1.bf16.msra.mxu0 0
        %1367 = vmatprep.subr.bf16.mxu0 0
        %1368 = vmatpush1.bf16.msra.mxu0 0
        %1369 = vmatprep.subr.bf16.mxu0 0
        %1370 = vmatpush1.bf16.msra.mxu0 0
        %1371 = vmatprep.subr.bf16.mxu0 0
        %1372 = vmatpush1.bf16.msra.mxu0 0
        %1373 = vmatprep.subr.bf16.mxu0 0
        %1374 = vmatpush1.bf16.msra.mxu0 0
        %1375 = vmatprep.subr.bf16.mxu0 0
        %1376 = vmatpush1.bf16.msra.mxu0 0
        %1377 = vmatprep.subr.bf16.mxu0 0
        %1378 = vmatpush1.bf16.msra.mxu0 %v1356
        %1379 = vmatprep.subr.bf16.mxu0 0
        %1380 = vmatpush1.bf16.msra.mxu0 %v1354
        %1381 = vmatprep.subr.bf16.mxu0 0
        %1382 = vmatpush2.bf16.msra.mxu0 0
        %1383 = vmatprep.subr.bf16.mxu0 0
        %1384 = vmatpush2.bf16.msra.mxu0 0
        %1385 = vmatprep.subr.bf16.mxu0 0
        %1386 = vmatpush2.bf16.msra.mxu0 0
        %1387 = vmatprep.subr.bf16.mxu0 0
        %1388 = vmatpush2.bf16.msra.mxu0 0
        %1389 = vmatprep.subr.bf16.mxu0 0
        %1390 = vmatpush2.bf16.msra.mxu0 0
        %1391 = vmatprep.subr.bf16.mxu0 0
        %1392 = vmatpush2.bf16.msra.mxu0 0
        %1393 = vmatprep.subr.bf16.mxu0 0
        %1394 = vmatpush2.bf16.msra.mxu0 0
        %1395 = vmatprep.subr.bf16.mxu0 0
        %1396 = vmatpush2.bf16.msra.mxu0 0
        %1397 = vmatprep.mubr.bf16.mxu0 0
        %1398 = vmatmul.mubr.bf16.gmra.mxu0 %v1360
        %v1399 = vpop.f32.mrf.mxu0
        %v1400 = vadd.f32 0.0, %v1399
        %v1401 = vpop.f32.mrf.mxu0
        %v1402 = vpop.f32.mrf.mxu0
        %v1403 = vadd.f32 0.0, %v1402
        %v1404 = vpop.f32.mrf.mxu0
        %1405 = vmatprep.mubr.bf16.mxu0 0
        %1406 = vmatmul.mubr.bf16.gmra.mxu0 %v1363
        %v1407 = vpop.f32.mrf.mxu0
        %v1408 = vadd.f32 0.0, %v1407
        %v1409 = vpop.f32.mrf.mxu0
        %v1410 = vpop.f32.mrf.mxu0
        %v1411 = vadd.f32 0.0, %v1410
        %v1412 = vpop.f32.mrf.mxu0
        %1413 = vdwg.mxu0
        %1414 = vrot.lane.b32.xlu0 %v1123, 96
        %v1415 = vpop.permute.xlu0 %1414
        %1416 = vrot.lane.b32.xlu0 %v1124, 96
        %v1417 = vpop.permute.xlu0 %1416
        %v1421 = vsel %vm1260, %v1351, 0
        %v1424 = vsel %vm1260, %v1352, 0
        %1426 = vmatprep.subr.bf16.mxu0 0
        %1427 = vmatpush1.bf16.msra.mxu0 0
        %1428 = vmatprep.subr.bf16.mxu0 0
        %1429 = vmatpush1.bf16.msra.mxu0 0
        %1430 = vmatprep.subr.bf16.mxu0 0
        %1431 = vmatpush1.bf16.msra.mxu0 0
        %1432 = vmatprep.subr.bf16.mxu0 0
        %1433 = vmatpush1.bf16.msra.mxu0 0
        %1434 = vmatprep.subr.bf16.mxu0 0
        %1435 = vmatpush1.bf16.msra.mxu0 0
        %1436 = vmatprep.subr.bf16.mxu0 0
        %1437 = vmatpush1.bf16.msra.mxu0 0
        %1438 = vmatprep.subr.bf16.mxu0 0
        %1439 = vmatpush1.bf16.msra.mxu0 %v1417
        %1440 = vmatprep.subr.bf16.mxu0 0
        %1441 = vmatpush1.bf16.msra.mxu0 %v1415
        %1442 = vmatprep.subr.bf16.mxu0 0
        %1443 = vmatpush2.bf16.msra.mxu0 0
        %1444 = vmatprep.subr.bf16.mxu0 0
        %1445 = vmatpush2.bf16.msra.mxu0 0
        %1446 = vmatprep.subr.bf16.mxu0 0
        %1447 = vmatpush2.bf16.msra.mxu0 0
        %1448 = vmatprep.subr.bf16.mxu0 0
        %1449 = vmatpush2.bf16.msra.mxu0 0
        %1450 = vmatprep.subr.bf16.mxu0 0
        %1451 = vmatpush2.bf16.msra.mxu0 0
        %1452 = vmatprep.subr.bf16.mxu0 0
        %1453 = vmatpush2.bf16.msra.mxu0 0
        %1454 = vmatprep.subr.bf16.mxu0 0
        %1455 = vmatpush2.bf16.msra.mxu0 0
        %1456 = vmatprep.subr.bf16.mxu0 0
        %1457 = vmatpush2.bf16.msra.mxu0 0
        %1458 = vmatprep.mubr.bf16.mxu0 0
        %1459 = vmatmul.mubr.bf16.gmra.mxu0 %v1421
        %v1460 = vpop.f32.mrf.mxu0
        %v1461 = vadd.f32 0.0, %v1460
        %v1462 = vpop.f32.mrf.mxu0
        %v1463 = vpop.f32.mrf.mxu0
        %v1464 = vadd.f32 0.0, %v1463
        %v1465 = vpop.f32.mrf.mxu0
        %1466 = vmatprep.mubr.bf16.mxu0 0
        %1467 = vmatmul.mubr.bf16.gmra.mxu0 %v1424
        %v1468 = vpop.f32.mrf.mxu0
        %v1469 = vadd.f32 0.0, %v1468
        %v1470 = vpop.f32.mrf.mxu0
        %v1471 = vpop.f32.mrf.mxu0
        %v1472 = vadd.f32 0.0, %v1471
        %v1473 = vpop.f32.mrf.mxu0
        %1474 = vdwg.mxu0
        %1479 = vrot.lane.b32.xlu0 %v1461, 8
        %v1480 = vpop.permute.xlu0 %1479
        %1481 = vrot.lane.b32.xlu0 %v1464, 8
        %v1482 = vpop.permute.xlu0 %1481
        %1483 = vrot.lane.b32.xlu0 %v1469, 8
        %v1484 = vpop.permute.xlu0 %1483
        %1485 = vrot.lane.b32.xlu0 %v1472, 8
        %v1486 = vpop.permute.xlu0 %1485
        %v1491 = vsel %vm1131, %v1400, %v1480
        %v1492 = vsel %vm1131, %v1403, %v1482
        %v1493 = vsel %vm1131, %v1408, %v1484
        %v1494 = vsel %vm1131, %v1411, %v1486
        %v1495 = vpack.c.bf16 %v1492, %v1491
        %v1496 = vpack.c.bf16 %v1494, %v1493
        %v1498 = vlaneseq
        %v1499 = vshrl.u32 %v1498, 7
        %v1500 = vsub.s32 0, %v1499
        %v1501 = vrot.slane %v935, %v1500
        %v1505 = vunpack.c.l.b16 %v933
        %v1506 = vunpack.c.l.b16 %v934
        %v1507 = vpack.c.b16 %v1506, %v1505
        %v1510 = vsel %vm950, %v1495, 0
        %v1513 = vsel %vm950, %v1496, 0
        %1515 = vmatprep.subr.bf16.mxu0 0
        %1516 = vmatpush1.bf16.msra.mxu0 0
        %1517 = vmatprep.subr.bf16.mxu0 0
        %1518 = vmatpush1.bf16.msra.mxu0 0
        %1519 = vmatprep.subr.bf16.mxu0 0
        %1520 = vmatpush1.bf16.msra.mxu0 0
        %1521 = vmatprep.subr.bf16.mxu0 0
        %1522 = vmatpush1.bf16.msra.mxu0 0
        %1523 = vmatprep.subr.bf16.mxu0 0
        %1524 = vmatpush1.bf16.msra.mxu0 0
        %1525 = vmatprep.subr.bf16.mxu0 0
        %1526 = vmatpush1.bf16.msra.mxu0 0
        %1527 = vmatprep.subr.bf16.mxu0 0
        %1528 = vmatpush1.bf16.msra.mxu0 0
        %1529 = vmatprep.subr.bf16.mxu0 0
        %1530 = vmatpush1.bf16.msra.mxu0 %v1507
        %1531 = vmatprep.subr.bf16.mxu0 0
        %1532 = vmatpush2.bf16.msra.mxu0 0
        %1533 = vmatprep.subr.bf16.mxu0 0
        %1534 = vmatpush2.bf16.msra.mxu0 0
        %1535 = vmatprep.subr.bf16.mxu0 0
        %1536 = vmatpush2.bf16.msra.mxu0 0
        %1537 = vmatprep.subr.bf16.mxu0 0
        %1538 = vmatpush2.bf16.msra.mxu0 0
        %1539 = vmatprep.subr.bf16.mxu0 0
        %1540 = vmatpush2.bf16.msra.mxu0 0
        %1541 = vmatprep.subr.bf16.mxu0 0
        %1542 = vmatpush2.bf16.msra.mxu0 0
        %1543 = vmatprep.subr.bf16.mxu0 0
        %1544 = vmatpush2.bf16.msra.mxu0 0
        %1545 = vmatprep.subr.bf16.mxu0 0
        %1546 = vmatpush2.bf16.msra.mxu0 0
        %1547 = vmatprep.mubr.bf16.mxu0 0
        %1548 = vmatmul.mubr.bf16.gmra.mxu0 %v1510
        %v1549 = vpop.f32.mrf.mxu0
        %v1550 = vadd.f32 %v1501, %v1549
        %v1551 = vpop.f32.mrf.mxu0
        %v1552 = vpop.f32.mrf.mxu0
        %v1553 = vadd.f32 %v1501, %v1552
        %v1554 = vpop.f32.mrf.mxu0
        %1555 = vmatprep.mubr.bf16.mxu0 0
        %1556 = vmatmul.mubr.bf16.gmra.mxu0 %v1513
        %v1557 = vpop.f32.mrf.mxu0
        %v1558 = vadd.f32 %v1501, %v1557
        %v1559 = vpop.f32.mrf.mxu0
        %v1560 = vpop.f32.mrf.mxu0
        %v1561 = vadd.f32 %v1501, %v1560
        %v1562 = vpop.f32.mrf.mxu0
        %1563 = vdwg.mxu0
        %v1564 = vadd.f32 %v924, %v1550
        %v1565 = vadd.f32 %v925, %v1553
        %v1566 = vadd.f32 %v926, %v1558
        %v1567 = vadd.f32 %v927, %v1561
        %v1568 = vsel %vm950, %v1564, 0.0
        %1569 = vadd.xlane.f32.xlu0 %v1568
        %v1570 = vpop.xlane.xlu0 %1569
        %v1571 = vsel %vm950, %v1565, 0.0
        %1572 = vadd.xlane.f32.xlu0 %v1571
        %v1573 = vpop.xlane.xlu0 %1572
        %v1574 = vsel %vm950, %v1566, 0.0
        %1575 = vadd.xlane.f32.xlu0 %v1574
        %v1576 = vpop.xlane.xlu0 %1575
        %v1577 = vsel %vm950, %v1567, 0.0
        %1578 = vadd.xlane.f32.xlu0 %v1577
        %v1579 = vpop.xlane.xlu0 %1578
        %v1580 = vmul.f32 %v1570, %v963
        %v1581 = vmul.f32 %v1573, %v963
        %v1582 = vmul.f32 %v1576, %v963
        %v1583 = vmul.f32 %v1579, %v963
        %v1584 = vsub.f32 %v1564, %v1580
        %v1585 = vsub.f32 %v1565, %v1581
        %v1586 = vsub.f32 %v1566, %v1582
        %v1587 = vsub.f32 %v1567, %v1583
        %v1588 = vmul.f32 %v1584, %v1584
        %v1589 = vmul.f32 %v1585, %v1585
        %v1590 = vmul.f32 %v1586, %v1586
        %v1591 = vmul.f32 %v1587, %v1587
        %v1592 = vsel %vm950, %v1588, 0.0
        %1593 = vadd.xlane.f32.xlu0 %v1592
        %v1594 = vpop.xlane.xlu0 %1593
        %v1595 = vsel %vm950, %v1589, 0.0
        %1596 = vadd.xlane.f32.xlu0 %v1595
        %v1597 = vpop.xlane.xlu0 %1596
        %v1598 = vsel %vm950, %v1590, 0.0
        %1599 = vadd.xlane.f32.xlu0 %v1598
        %v1600 = vpop.xlane.xlu0 %1599
        %v1601 = vsel %vm950, %v1591, 0.0
        %1602 = vadd.xlane.f32.xlu0 %v1601
        %v1603 = vpop.xlane.xlu0 %1602
        %v1604 = vmul.f32 %v1594, %v963
        %v1605 = vmul.f32 %v1597, %v963
        %v1606 = vmul.f32 %v1600, %v963
        %v1607 = vmul.f32 %v1603, %v963
        %v1608 = vadd.f32 %v1604, 1e-05
        %v1609 = vadd.f32 %v1605, 1e-05
        %v1610 = vadd.f32 %v1606, 1e-05
        %v1611 = vadd.f32 %v1607, 1e-05
        %v1612 = vrsqrt.pop %v1608
        %v1613 = vrsqrt.pop %v1609
        %v1614 = vrsqrt.pop %v1610
        %v1615 = vrsqrt.pop %v1611
        %v1616 = vmul.f32 %v1584, %v1612
        %v1617 = vmul.f32 %v1585, %v1613
        %v1618 = vmul.f32 %v1586, %v1614
        %v1619 = vmul.f32 %v1587, %v1615
        %v1621 = vlaneseq
        %v1622 = vshrl.u32 %v1621, 7
        %v1623 = vsub.s32 0, %v1622
        %v1624 = vrot.slane %v936, %v1623
        %v1626 = vmul.f32 %v1616, %v1624
        %v1627 = vmul.f32 %v1617, %v1624
        %v1628 = vmul.f32 %v1618, %v1624
        %v1629 = vmul.f32 %v1619, %v1624
        %v1631 = vlaneseq
        %v1632 = vshrl.u32 %v1631, 7
        %v1633 = vsub.s32 0, %v1632
        %v1634 = vrot.slane %v937, %v1633
        %v1636 = vadd.f32 %v1626, %v1634
        %v1637 = vadd.f32 %v1627, %v1634
        %v1638 = vadd.f32 %v1628, %v1634
        %v1639 = vadd.f32 %v1629, %v1634
        %v1640 = vpack.c.bf16 %v1637, %v1636
        %v1641 = vpack.c.bf16 %v1639, %v1638
        %v1643 = vlaneseq
        %v1644 = vshrl.u32 %v1643, 7
        %v1645 = vsub.s32 0, %v1644
        %v1646 = vrot.slane %v940, %v1645
        %v1650 = vunpack.c.l.b16 %v938
        %v1651 = vunpack.c.l.b16 %v939
        %v1652 = vpack.c.b16 %v1651, %v1650
        %v1655 = vsel %vm950, %v1640, 0
        %v1658 = vsel %vm950, %v1641, 0
        %1660 = vmatprep.subr.bf16.mxu0 0
        %1661 = vmatpush1.bf16.msra.mxu0 0
        %1662 = vmatprep.subr.bf16.mxu0 0
        %1663 = vmatpush1.bf16.msra.mxu0 0
        %1664 = vmatprep.subr.bf16.mxu0 0
        %1665 = vmatpush1.bf16.msra.mxu0 0
        %1666 = vmatprep.subr.bf16.mxu0 0
        %1667 = vmatpush1.bf16.msra.mxu0 0
        %1668 = vmatprep.subr.bf16.mxu0 0
        %1669 = vmatpush1.bf16.msra.mxu0 0
        %1670 = vmatprep.subr.bf16.mxu0 0
        %1671 = vmatpush1.bf16.msra.mxu0 0
        %1672 = vmatprep.subr.bf16.mxu0 0
        %1673 = vmatpush1.bf16.msra.mxu0 0
        %1674 = vmatprep.subr.bf16.mxu0 0
        %1675 = vmatpush1.bf16.msra.mxu0 %v1652
        %1676 = vmatprep.subr.bf16.mxu0 0
        %1677 = vmatpush2.bf16.msra.mxu0 0
        %1678 = vmatprep.subr.bf16.mxu0 0
        %1679 = vmatpush2.bf16.msra.mxu0 0
        %1680 = vmatprep.subr.bf16.mxu0 0
        %1681 = vmatpush2.bf16.msra.mxu0 0
        %1682 = vmatprep.subr.bf16.mxu0 0
        %1683 = vmatpush2.bf16.msra.mxu0 0
        %1684 = vmatprep.subr.bf16.mxu0 0
        %1685 = vmatpush2.bf16.msra.mxu0 0
        %1686 = vmatprep.subr.bf16.mxu0 0
        %1687 = vmatpush2.bf16.msra.mxu0 0
        %1688 = vmatprep.subr.bf16.mxu0 0
        %1689 = vmatpush2.bf16.msra.mxu0 0
        %1690 = vmatprep.subr.bf16.mxu0 0
        %1691 = vmatpush2.bf16.msra.mxu0 0
        %1692 = vmatprep.mubr.bf16.mxu0 0
        %1693 = vmatmul.mubr.bf16.gmra.mxu0 %v1655
        %v1694 = vpop.f32.mrf.mxu0
        %v1695 = vadd.f32 %v1646, %v1694
        %v1696 = vpop.f32.mrf.mxu0
        %v1697 = vpop.f32.mrf.mxu0
        %v1698 = vadd.f32 %v1646, %v1697
        %v1699 = vpop.f32.mrf.mxu0
        %1700 = vmatprep.mubr.bf16.mxu0 0
        %1701 = vmatmul.mubr.bf16.gmra.mxu0 %v1658
        %v1702 = vpop.f32.mrf.mxu0
        %v1703 = vadd.f32 %v1646, %v1702
        %v1704 = vpop.f32.mrf.mxu0
        %v1705 = vpop.f32.mrf.mxu0
        %v1706 = vadd.f32 %v1646, %v1705
        %v1707 = vpop.f32.mrf.mxu0
        %1708 = vdwg.mxu0
        %v1709 = vmul.f32 %v1695, 0.5
        %v1710 = vmul.f32 %v1698, 0.5
        %v1711 = vmul.f32 %v1703, 0.5
        %v1712 = vmul.f32 %v1706, 0.5
        %v1713 = vmul.f32 %v1695, 0.044715
        %v1714 = vmul.f32 %v1698, 0.044715
        %v1715 = vmul.f32 %v1703, 0.044715
        %v1716 = vmul.f32 %v1706, 0.044715
        %v1717 = vmul.f32 %v1713, %v1695
        %v1718 = vmul.f32 %v1714, %v1698
        %v1719 = vmul.f32 %v1715, %v1703
        %v1720 = vmul.f32 %v1716, %v1706
        %v1721 = vmul.f32 %v1717, %v1695
        %v1722 = vmul.f32 %v1718, %v1698
        %v1723 = vmul.f32 %v1719, %v1703
        %v1724 = vmul.f32 %v1720, %v1706
        %v1725 = vadd.f32 %v1695, %v1721
        %v1726 = vadd.f32 %v1698, %v1722
        %v1727 = vadd.f32 %v1703, %v1723
        %v1728 = vadd.f32 %v1706, %v1724
        %v1729 = vmul.f32 %v1725, 0.7978846
        %v1730 = vmul.f32 %v1726, 0.7978846
        %v1731 = vmul.f32 %v1727, 0.7978846
        %v1732 = vmul.f32 %v1728, 0.7978846
        %v1733 = vtanh.pop %v1729
        %v1734 = vtanh.pop %v1730
        %v1735 = vtanh.pop %v1731
        %v1736 = vtanh.pop %v1732
        %v1737 = vadd.f32 %v1733, 1.0
        %v1738 = vadd.f32 %v1734, 1.0
        %v1739 = vadd.f32 %v1735, 1.0
        %v1740 = vadd.f32 %v1736, 1.0
        %v1741 = vmul.f32 %v1709, %v1737
        %v1742 = vmul.f32 %v1710, %v1738
        %v1743 = vmul.f32 %v1711, %v1739
        %v1744 = vmul.f32 %v1712, %v1740
        %v1745 = vpack.c.bf16 %v1742, %v1741
        %v1746 = vpack.c.bf16 %v1744, %v1743
        %v1748 = vlaneseq
        %v1749 = vshrl.u32 %v1748, 7
        %v1750 = vsub.s32 0, %v1749
        %v1751 = vrot.slane %v949, %v1750
        %v1761 = vunpack.c.l.b16 %v941
        %v1762 = vunpack.c.l.b16 %v942
        %v1763 = vunpack.c.l.b16 %v943
        %v1764 = vunpack.c.l.b16 %v944
        %v1765 = vunpack.c.l.b16 %v945
        %v1766 = vunpack.c.l.b16 %v946
        %v1767 = vunpack.c.l.b16 %v947
        %v1768 = vunpack.c.l.b16 %v948
        %v1769 = vpack.c.b16 %v1762, %v1761
        %v1770 = vpack.c.b16 %v1764, %v1763
        %v1771 = vpack.c.b16 %v1766, %v1765
        %v1772 = vpack.c.b16 %v1768, %v1767
        %vm1777 = vcmask 523264
        %v1779 = vsel %vm1777, %v1745, 0
        %v1782 = vsel %vm1777, %v1746, 0
        %1784 = vmatprep.subr.bf16.mxu0 0
        %1785 = vmatpush1.bf16.msra.mxu0 0
        %1786 = vmatprep.subr.bf16.mxu0 0
        %1787 = vmatpush1.bf16.msra.mxu0 0
        %1788 = vmatprep.subr.bf16.mxu0 0
        %1789 = vmatpush1.bf16.msra.mxu0 0
        %1790 = vmatprep.subr.bf16.mxu0 0
        %1791 = vmatpush1.bf16.msra.mxu0 0
        %1792 = vmatprep.subr.bf16.mxu0 0
        %1793 = vmatpush1.bf16.msra.mxu0 %v1772
        %1794 = vmatprep.subr.bf16.mxu0 0
        %1795 = vmatpush1.bf16.msra.mxu0 %v1771
        %1796 = vmatprep.subr.bf16.mxu0 0
        %1797 = vmatpush1.bf16.msra.mxu0 %v1770
        %1798 = vmatprep.subr.bf16.mxu0 0
        %1799 = vmatpush1.bf16.msra.mxu0 %v1769
        %1800 = vmatprep.subr.bf16.mxu0 0
        %1801 = vmatpush2.bf16.msra.mxu0 0
        %1802 = vmatprep.subr.bf16.mxu0 0
        %1803 = vmatpush2.bf16.msra.mxu0 0
        %1804 = vmatprep.subr.bf16.mxu0 0
        %1805 = vmatpush2.bf16.msra.mxu0 0
        %1806 = vmatprep.subr.bf16.mxu0 0
        %1807 = vmatpush2.bf16.msra.mxu0 0
        %1808 = vmatprep.subr.bf16.mxu0 0
        %1809 = vmatpush2.bf16.msra.mxu0 0
        %1810 = vmatprep.subr.bf16.mxu0 0
        %1811 = vmatpush2.bf16.msra.mxu0 0
        %1812 = vmatprep.subr.bf16.mxu0 0
        %1813 = vmatpush2.bf16.msra.mxu0 0
        %1814 = vmatprep.subr.bf16.mxu0 0
        %1815 = vmatpush2.bf16.msra.mxu0 0
        %1816 = vmatprep.mubr.bf16.mxu0 0
        %1817 = vmatmul.mubr.bf16.gmra.mxu0 %v1779
        %v1818 = vpop.f32.mrf.mxu0
        %v1819 = vadd.f32 %v1751, %v1818
        %v1820 = vpop.f32.mrf.mxu0
        %v1821 = vpop.f32.mrf.mxu0
        %v1822 = vadd.f32 %v1751, %v1821
        %v1823 = vpop.f32.mrf.mxu0
        %1824 = vmatprep.mubr.bf16.mxu0 0
        %1825 = vmatmul.mubr.bf16.gmra.mxu0 %v1782
        %v1826 = vpop.f32.mrf.mxu0
        %v1827 = vadd.f32 %v1751, %v1826
        %v1828 = vpop.f32.mrf.mxu0
        %v1829 = vpop.f32.mrf.mxu0
        %v1830 = vadd.f32 %v1751, %v1829
        %v1831 = vpop.f32.mrf.mxu0
        %1832 = vdwg.mxu0
        %v1833 = vadd.f32 %v1564, %v1819
        %v1834 = vadd.f32 %v1565, %v1822
        %v1835 = vadd.f32 %v1566, %v1827
        %v1836 = vadd.f32 %v1567, %v1830
        %1837 = vst.msk [vmem:[#allocation2] sm:$0xff] %vm950, %v1833
        %1838 = vst.msk [vmem:[#allocation2 + $0x8] sm:$0xff] %vm950, %v1834
        %1839 = vst.msk [vmem:[#allocation2 + $0x10] sm:$0xff] %vm950, %v1835
        %1840 = vst.msk [vmem:[#allocation2 + $0x18] sm:$0xff] %vm950, %v1836
        // Predicated region
        $region101: #{forward.3} parent=95 // pred_check
          %p1841 = pneg %p911
        $region102: #{forward.3} parent=95 // pred_check_branch
          %1843 = sbr.rel (%p1841) target = $region104
        $region103: #{forward.3} parent=95 // pred_region
          %v1844 = vld [vmem:[%s15] sm:$0x1]
          %v1845 = vld [vmem:[%s16] sm:$0x1]
          %v1846 = vld [vmem:[%s17] sm:$0xf]
          %v1847 = vld [vmem:[%s17 + $0x4] sm:$0xf]
          %v1848 = vld [vmem:[%s18] sm:$0x1]
          %v1849 = vsel %vm950, %v1833, 0.0
          %1850 = vadd.xlane.f32.xlu0 %v1849
          %v1851 = vpop.xlane.xlu0 %1850
          %v1852 = vsel %vm950, %v1834, 0.0
          %1853 = vadd.xlane.f32.xlu0 %v1852
          %v1854 = vpop.xlane.xlu0 %1853
          %v1855 = vsel %vm950, %v1835, 0.0
          %1856 = vadd.xlane.f32.xlu0 %v1855
          %v1857 = vpop.xlane.xlu0 %1856
          %v1858 = vsel %vm950, %v1836, 0.0
          %1859 = vadd.xlane.f32.xlu0 %v1858
          %v1860 = vpop.xlane.xlu0 %1859
          %v1861 = vmul.f32 %v1851, %v963
          %v1862 = vmul.f32 %v1854, %v963
          %v1863 = vmul.f32 %v1857, %v963
          %v1864 = vmul.f32 %v1860, %v963
          %v1865 = vsub.f32 %v1833, %v1861
          %v1866 = vsub.f32 %v1834, %v1862
          %v1867 = vsub.f32 %v1835, %v1863
          %v1868 = vsub.f32 %v1836, %v1864
          %v1869 = vmul.f32 %v1865, %v1865
          %v1870 = vmul.f32 %v1866, %v1866
          %v1871 = vmul.f32 %v1867, %v1867
          %v1872 = vmul.f32 %v1868, %v1868
          %v1873 = vsel %vm950, %v1869, 0.0
          %1874 = vadd.xlane.f32.xlu0 %v1873
          %v1875 = vpop.xlane.xlu0 %1874
          %v1876 = vsel %vm950, %v1870, 0.0
          %1877 = vadd.xlane.f32.xlu0 %v1876
          %v1878 = vpop.xlane.xlu0 %1877
          %v1879 = vsel %vm950, %v1871, 0.0
          %1880 = vadd.xlane.f32.xlu0 %v1879
          %v1881 = vpop.xlane.xlu0 %1880
          %v1882 = vsel %vm950, %v1872, 0.0
          %1883 = vadd.xlane.f32.xlu0 %v1882
          %v1884 = vpop.xlane.xlu0 %1883
          %v1885 = vmul.f32 %v1875, %v963
          %v1886 = vmul.f32 %v1878, %v963
          %v1887 = vmul.f32 %v1881, %v963
          %v1888 = vmul.f32 %v1884, %v963
          %v1889 = vadd.f32 %v1885, 1e-05
          %v1890 = vadd.f32 %v1886, 1e-05
          %v1891 = vadd.f32 %v1887, 1e-05
          %v1892 = vadd.f32 %v1888, 1e-05
          %v1893 = vrsqrt.pop %v1889
          %v1894 = vrsqrt.pop %v1890
          %v1895 = vrsqrt.pop %v1891
          %v1896 = vrsqrt.pop %v1892
          %v1897 = vmul.f32 %v1865, %v1893
          %v1898 = vmul.f32 %v1866, %v1894
          %v1899 = vmul.f32 %v1867, %v1895
          %v1900 = vmul.f32 %v1868, %v1896
          %v1902 = vlaneseq
          %v1903 = vshrl.u32 %v1902, 7
          %v1904 = vsub.s32 0, %v1903
          %v1905 = vrot.slane %v1844, %v1904
          %v1907 = vmul.f32 %v1897, %v1905
          %v1908 = vmul.f32 %v1898, %v1905
          %v1909 = vmul.f32 %v1899, %v1905
          %v1910 = vmul.f32 %v1900, %v1905
          %v1912 = vlaneseq
          %v1913 = vshrl.u32 %v1912, 7
          %v1914 = vsub.s32 0, %v1913
          %v1915 = vrot.slane %v1845, %v1914
          %v1917 = vadd.f32 %v1907, %v1915
          %v1918 = vadd.f32 %v1908, %v1915
          %v1919 = vadd.f32 %v1909, %v1915
          %v1920 = vadd.f32 %v1910, %v1915
          %v1921 = vpack.c.bf16 %v1918, %v1917
          %v1922 = vpack.c.bf16 %v1920, %v1919
          %v1924 = vlaneseq
          %v1925 = vshrl.u32 %v1924, 7
          %v1926 = vsub.s32 0, %v1925
          %v1927 = vrot.slane %v1848, %v1926
          %v1931 = vunpack.c.l.b16 %v1846
          %v1932 = vunpack.c.l.b16 %v1847
          %v1933 = vpack.c.b16 %v1932, %v1931
          %v1936 = vsel %vm950, %v1921, 0
          %v1939 = vsel %vm950, %v1922, 0
          %1941 = vmatprep.subr.bf16.mxu0 0
          %1942 = vmatpush1.bf16.msra.mxu0 0
          %1943 = vmatprep.subr.bf16.mxu0 0
          %1944 = vmatpush1.bf16.msra.mxu0 0
          %1945 = vmatprep.subr.bf16.mxu0 0
          %1946 = vmatpush1.bf16.msra.mxu0 0
          %1947 = vmatprep.subr.bf16.mxu0 0
          %1948 = vmatpush1.bf16.msra.mxu0 0
          %1949 = vmatprep.subr.bf16.mxu0 0
          %1950 = vmatpush1.bf16.msra.mxu0 0
          %1951 = vmatprep.subr.bf16.mxu0 0
          %1952 = vmatpush1.bf16.msra.mxu0 0
          %1953 = vmatprep.subr.bf16.mxu0 0
          %1954 = vmatpush1.bf16.msra.mxu0 0
          %1955 = vmatprep.subr.bf16.mxu0 0
          %1956 = vmatpush1.bf16.msra.mxu0 %v1933
          %1957 = vmatprep.subr.bf16.mxu0 0
          %1958 = vmatpush2.bf16.msra.mxu0 0
          %1959 = vmatprep.subr.bf16.mxu0 0
          %1960 = vmatpush2.bf16.msra.mxu0 0
          %1961 = vmatprep.subr.bf16.mxu0 0
          %1962 = vmatpush2.bf16.msra.mxu0 0
          %1963 = vmatprep.subr.bf16.mxu0 0
          %1964 = vmatpush2.bf16.msra.mxu0 0
          %1965 = vmatprep.subr.bf16.mxu0 0
          %1966 = vmatpush2.bf16.msra.mxu0 0
          %1967 = vmatprep.subr.bf16.mxu0 0
          %1968 = vmatpush2.bf16.msra.mxu0 0
          %1969 = vmatprep.subr.bf16.mxu0 0
          %1970 = vmatpush2.bf16.msra.mxu0 0
          %1971 = vmatprep.subr.bf16.mxu0 0
          %1972 = vmatpush2.bf16.msra.mxu0 0
          %1973 = vmatprep.mubr.bf16.mxu0 0
          %1974 = vmatmul.mubr.bf16.gmra.mxu0 %v1936
          %v1975 = vpop.f32.mrf.mxu0
          %v1976 = vadd.f32 %v1927, %v1975
          %v1977 = vpop.f32.mrf.mxu0
          %v1978 = vpop.f32.mrf.mxu0
          %v1979 = vadd.f32 %v1927, %v1978
          %v1980 = vpop.f32.mrf.mxu0
          %1981 = vmatprep.mubr.bf16.mxu0 0
          %1982 = vmatmul.mubr.bf16.gmra.mxu0 %v1939
          %v1983 = vpop.f32.mrf.mxu0
          %v1984 = vadd.f32 %v1927, %v1983
          %v1985 = vpop.f32.mrf.mxu0
          %v1986 = vpop.f32.mrf.mxu0
          %v1987 = vadd.f32 %v1927, %v1986
          %v1988 = vpop.f32.mrf.mxu0
          %1989 = vdwg.mxu0
          %1990 = vst.msk [vmem:[%s836] sm:$0xff] %vm1260, %v1976
          %1991 = vst.msk [vmem:[%s836 + $0x8] sm:$0xff] %vm1260, %v1979
          %1992 = vst.msk [vmem:[%s836 + $0x10] sm:$0xff] %vm1260, %v1984
          %1993 = vst.msk [vmem:[%s836 + $0x18] sm:$0xff] %vm1260, %v1987
          %v1994 = vld [vmem:[%s856] sm:$0xff]
          %v1995 = vld [vmem:[%s856 + $0x8] sm:$0xff]
          %v1996 = vld [vmem:[%s856 + $0x10] sm:$0xff]
          %v1997 = vld [vmem:[%s856 + $0x18] sm:$0xff]
          %v1998 = vsub.f32 %v1976, %v1994
          %v1999 = vsub.f32 %v1979, %v1995
          %v2000 = vsub.f32 %v1984, %v1996
          %v2001 = vsub.f32 %v1987, %v1997
          %v2002 = vld [vmem:[%s859] sm:$0x1]
          %v2003 = vmul.f32 %v1998, %v1998
          %v2004 = vmul.f32 %v1999, %v1999
          %v2005 = vmul.f32 %v2000, %v2000
          %v2006 = vmul.f32 %v2001, %v2001
          %v2008 = vsel %vm1260, %v2002, 0
          %2010 = vmatprep.subr.mxu0 0.0
          %2011 = vmatpush1.msra.mxu0 0.0
          %2012 = vmatprep.subr.mxu0 0.0
          %2013 = vmatpush1.msra.mxu0 0.0
          %2014 = vmatprep.subr.mxu0 0.0
          %2015 = vmatpush1.msra.mxu0 0.0
          %2016 = vmatprep.subr.mxu0 0.0
          %2017 = vmatpush1.msra.mxu0 0.0
          %2018 = vmatprep.subr.mxu0 0.0
          %2019 = vmatpush1.msra.mxu0 0.0
          %2020 = vmatprep.subr.mxu0 0.0
          %2021 = vmatpush1.msra.mxu0 0.0
          %2022 = vmatprep.subr.mxu0 0.0
          %2023 = vmatpush1.msra.mxu0 0.0
          %2024 = vmatprep.subr.mxu0 0.0
          %2025 = vmatpush1.msra.mxu0 0.0
          %2026 = vmatprep.subr.mxu0 0.0
          %2027 = vmatpush1.msra.mxu0 0.0
          %2028 = vmatprep.subr.mxu0 0.0
          %2029 = vmatpush1.msra.mxu0 0.0
          %2030 = vmatprep.subr.mxu0 0.0
          %2031 = vmatpush1.msra.mxu0 0.0
          %2032 = vmatprep.subr.mxu0 0.0
          %2033 = vmatpush1.msra.mxu0 0.0
          %2034 = vmatprep.subr.mxu0 0.0
          %2035 = vmatpush1.msra.mxu0 %v2006
          %2036 = vmatprep.subr.mxu0 0.0
          %2037 = vmatpush1.msra.mxu0 %v2005
          %2038 = vmatprep.subr.mxu0 0.0
          %2039 = vmatpush1.msra.mxu0 %v2004
          %2040 = vmatprep.subr.mxu0 0.0
          %2041 = vmatpush1.msra.mxu0 %v2003
          %2042 = vmatprep.subr.mxu0 0.0
          %2043 = vmatpush2.msra.mxu0 0.0
          %2044 = vmatprep.subr.mxu0 0.0
          %2045 = vmatpush2.msra.mxu0 0.0
          %2046 = vmatprep.subr.mxu0 0.0
          %2047 = vmatpush2.msra.mxu0 0.0
          %2048 = vmatprep.subr.mxu0 0.0
          %2049 = vmatpush2.msra.mxu0 0.0
          %2050 = vmatprep.subr.mxu0 0.0
          %2051 = vmatpush2.msra.mxu0 0.0
          %2052 = vmatprep.subr.mxu0 0.0
          %2053 = vmatpush2.msra.mxu0 0.0
          %2054 = vmatprep.subr.mxu0 0.0
          %2055 = vmatpush2.msra.mxu0 0.0
          %2056 = vmatprep.subr.mxu0 0.0
          %2057 = vmatpush2.msra.mxu0 0.0
          %2058 = vmatprep.subr.mxu0 0.0
          %2059 = vmatpush2.msra.mxu0 0.0
          %2060 = vmatprep.subr.mxu0 0.0
          %2061 = vmatpush2.msra.mxu0 0.0
          %2062 = vmatprep.subr.mxu0 0.0
          %2063 = vmatpush2.msra.mxu0 0.0
          %2064 = vmatprep.subr.mxu0 0.0
          %2065 = vmatpush2.msra.mxu0 0.0
          %2066 = vmatprep.subr.mxu0 0.0
          %2067 = vmatpush2.msra.mxu0 0.0
          %2068 = vmatprep.subr.mxu0 0.0
          %2069 = vmatpush2.msra.mxu0 0.0
          %2070 = vmatprep.subr.mxu0 0.0
          %2071 = vmatpush2.msra.mxu0 0.0
          %2072 = vmatprep.subr.mxu0 0.0
          %2073 = vmatpush2.msra.mxu0 0.0
          %2074 = vmatprep.mubr.f32.mxu0 0.0
          %2075 = vmatmul.mubr.f32.gmra.mxu0 %v2008
          %v2076 = vpop.f32.mrf.mxu0
          %v2077 = vadd.f32 0.0, %v2076
          %v2078 = vpop.f32.mrf.mxu0
          %2079 = vdwg.mxu0
          %vm2080 = vcmask 253952
          %v2081 = vsel %vm2080, %v2077, 0.0
          %2082 = vadd.xlane.f32.xlu0 %v2081
          %v2083 = vpop.xlane.xlu0 %2082
          %v2084 = vrcp.pop 32.0
          %v2085 = vmul.f32 %v2083, %v2084
          %vm2086 = vcmask 0
          %2087 = vst.msk [vmem:[%s906] sm:$0x1] %vm2086, %v2085
          %v2088 = vsel %vm2080, %v2002, 0.0
          %2089 = vadd.xlane.f32.xlu0 %v2088
          %v2090 = vpop.xlane.xlu0 %2089
          %2091 = vst.msk [vmem:[%s909] sm:$0x1] %vm2086, %v2090
        $region104: #{forward.3} parent=95 // pred_fallthru
          _
        %s2092 = sand.u32 %s530, 1
        %s2093 = scalar_lea.sflag [#allocation4], %s2092
        %s2094 = sand.u32 %s530, 1
        %s2095 = smul.addr %s2094, 32
        %s2096 = scalar_lea.vmem [#allocation3], %s2095
        %p2097 = scmp.lt.s32.totalorder %s40, 1
        %s2098 = scalar_select %p2097, %s40, 1
        %s2099 = scalar_lea.vmem %s20, %s2098
        %p2100 = scmp.lt.s32.totalorder %s40, 1
        %s2101 = scalar_select %p2100, %s40, 1
        %s2102 = scalar_lea.vmem %s21, %s2101
        // Predicated region
        $region105: #{forward.3} parent=95 // pred_check
          %p2103 = pneg %p540
        $region106: #{forward.3} parent=95 // pred_check_branch
          %2105 = sbr.rel (%p2103) target = $region108
        $region107: #{forward.3} parent=95 // pred_region
          %s2107 = ssub.s32 512, 512
          %2108 = vsyncadd %s2093, %s2107
          %s2109 = smul.addr %s40, 4
          %s2110 = smul.addr %s2109, 128
          %s2111 = scalar_lea.hbm %s19, %s2110
          %s2112 = sshll.u32 %s2096, 4
          %s2113 = int_to_ptr.vmem [resolvable:$true] %s2112
          %2118 = dma.vmem_to_hbm [thread:$0]  %s2113, 512, %s2111, %s2093, 128, 128, 8
        $region108: #{forward.3} parent=95 // pred_fallthru
          _
        // Predicated region
        $region109: #{forward.3} parent=95 // pred_check
          %p2119 = pneg %p566
        $region110: #{forward.3} parent=95 // pred_check_branch
          %2121 = sbr.rel (%p2119) target = $region112
        $region111: #{forward.3} parent=95 // pred_region
          _
        $region112: #{forward.3} parent=95 // pred_fallthru
          _
        // Predicated region
        $region113: #{forward.3} parent=95 // pred_check
          %p2122 = pneg %p592
        $region114: #{forward.3} parent=95 // pred_check_branch
          %2124 = sbr.rel (%p2122) target = $region116
        $region115: #{forward.3} parent=95 // pred_region
          _
        $region116: #{forward.3} parent=95 // pred_fallthru
          _
      $region96: #{forward.3} parent=5 // pred_fallthru
        _
      %p2125 = scmp.le.s32.totalorder 2, %s31
      // Predicated region
      $region117: #{forward.3} parent=5 // pred_check
        %p2126 = pneg %p2125
      $region118: #{forward.3} parent=5 // pred_check_branch
        %2128 = sbr.rel (%p2126) target = $region120
      $region119: #{forward.3} parent=5 // pred_region
        %s2129 = ssub.s32 %s31, 2
        // Predicated region
        $region121: #{forward.3} parent=119 // pred_check
          %p2130 = pneg %p546
        $region122: #{forward.3} parent=119 // pred_check_branch
          %2132 = sbr.rel (%p2130) target = $region124
        $region123: #{forward.3} parent=119 // pred_region
          %s2133 = sand.u32 %s531, 1
          %s2134 = scalar_lea.sflag [#allocation4], %s2133
          %s2135 = sand.u32 %s531, 1
          %s2136 = smul.addr %s2135, 32
          %s2137 = scalar_lea.vmem [#allocation3], %s2136
          %2138 = dma.done %s2134, 512
        $region124: #{forward.3} parent=119 // pred_fallthru
          _
        // Predicated region
        $region125: #{forward.3} parent=119 // pred_check
          %p2139 = pneg %p572
        $region126: #{forward.3} parent=119 // pred_check_branch
          %2141 = sbr.rel (%p2139) target = $region128
        $region127: #{forward.3} parent=119 // pred_region
          %p2142 = scmp.lt.s32.totalorder %s42, 1
          %s2143 = scalar_select %p2142, %s42, 1
          %s2144 = scalar_lea.vmem %s20, %s2143
        $region128: #{forward.3} parent=119 // pred_fallthru
          _
        // Predicated region
        $region129: #{forward.3} parent=119 // pred_check
          %p2145 = pneg %p598
        $region130: #{forward.3} parent=119 // pred_check_branch
          %2147 = sbr.rel (%p2145) target = $region132
        $region131: #{forward.3} parent=119 // pred_region
          %p2148 = scmp.lt.s32.totalorder %s42, 1
          %s2149 = scalar_select %p2148, %s42, 1
          %s2150 = scalar_lea.vmem %s21, %s2149
        $region132: #{forward.3} parent=119 // pred_fallthru
          _
      $region120: #{forward.3} parent=5 // pred_fallthru
        _
    $region6: #{forward.3} parent=1 // loop_footer
      %s35 = sadd.s32 1, %s31
    $region7: #{forward.3} parent=1 // loop_footer_branch
      %30 = sbr.rel target = $region3
    $region8: #{forward.3} parent=1 // loop_exit
      _
    %2151 = vsyncpa [#allocation4], 1
    %s2152 = scalar_lea.sflag [#allocation4], 1
    %2153 = vsyncpa %s2152, 1

</llo_original>
